<compile_context>
chip_gen: v5e
topology: v5e:2x2
jax: 0.10.0
libtpu: 0.0.40
codegen_flags: <defaults>
</compile_context>

<pallas_src>
import functools

import jax
import jax.numpy as jnp
from jax.experimental import pallas as pl
from jax.experimental.pallas import tpu as pltpu


def _shuffle_gather_kernel(idx_ref, x_ref, o_ref, *, precision):
    """Batched one-hot gather for one block of Bb batch columns.

    idx_ref : VMEM (Bb, R)    int32  -- forward_indexes[:R] for these columns
    x_ref   : VMEM (Bb, T, C)        -- patches, batch-major
    o_ref   : VMEM (Bb, R, C)        -- kept (shuffled) patches
    """
    Bb, T, _C = x_ref.shape
    R = o_ref.shape[1]

    idx = idx_ref[...]                                            # (Bb, R), R on lanes
    # One-hot over the source-row axis, laid out (Bb, T, R): the lane-major idx
    # vector broadcasts along the sublane (T) axis for free (no XLU transpose).
    t_iota = jax.lax.broadcasted_iota(jnp.int32, (Bb, T, R), 1)
    onehot = (t_iota == idx[:, None, :]).astype(x_ref.dtype)      # (Bb, T, R)

    # out[b, r, c] = sum_t onehot[b, t, r] * x[b, t, c]  -- single batched MXU call.
    out = jax.lax.dot_general(
        onehot,
        x_ref[...],
        dimension_numbers=(((1,), (1,)), ((0,), (0,))),
        preferred_element_type=jnp.float32,
        precision=precision,
    )                                                             # (Bb, R, C)
    o_ref[...] = out.astype(o_ref.dtype)


def _ceil_to(x, m):
    return -(-x // m) * m


def _block_vmem_bytes(Bb, T, C, R, itemsize):
    """Approximate VMEM footprint of one grid step (incl. double buffering)."""
    cpad = _ceil_to(C, 128)
    tpad = _ceil_to(T, 8)
    rpad = _ceil_to(R, 8)
    rlane = _ceil_to(R, 128)
    x_blk = Bb * tpad * cpad * itemsize
    o_blk = Bb * rpad * cpad * itemsize
    idx_blk = _ceil_to(Bb, 8) * rlane * 4
    pipelined = 2 * (x_blk + o_blk + idx_blk)                       # double-buffered
    scratch = Bb * tpad * rlane * itemsize + Bb * rpad * cpad * 4   # onehot + f32 acc
    return pipelined + scratch


def _vmem_budget_bytes():
    cap = 64 * 1024 * 1024  # conservative default (v7x physical VMEM per core)
    try:
        info = pltpu.get_tpu_info()
        cap = int(getattr(info, "vmem_capacity_bytes", cap))
    except Exception:
        pass
    return (cap * 3) // 4   # headroom for compiler-internal scratch


def _pick_batch_block(B, T, C, R, itemsize, budget):
    # Multiples of 8 keep the (Bb, R) index block sublane-aligned; Bb == B is
    # always legal (block dims == full array dims).
    cands = [bb for bb in (64, 32, 16, 8) if B % bb == 0]
    if not cands:
        cands = [B]
        # TODO(synk): for large batches not divisible by 8, pad B and mask
        # instead of taking the whole batch in one grid step.
    fitting = [bb for bb in cands
               if _block_vmem_bytes(bb, T, C, R, itemsize) <= budget]
    if not fitting:
        fitting = [min(cands)]
    # Prefer a choice that gives >= 2 grid steps (pipelining + v7x megacore).
    multi = [bb for bb in fitting if B // bb >= 2]
    return max(multi) if multi else max(fitting)


def patch_shuffle_gather_bmajor(patches_btc, fwd_idx_br):
    """out[b, r, :] = patches_btc[b, fwd_idx_br[b, r], :].

    patches_btc : (B, T, C)  batch-major patches
    fwd_idx_br  : (B, R)     integer indices into the T axis (R = remain_T)
    """
    B, T, C = patches_btc.shape
    R = fwd_idx_br.shape[1]
    itemsize = patches_btc.dtype.itemsize

    budget = _vmem_budget_bytes()
    Bb = _pick_batch_block(B, T, C, R, itemsize, budget)
    grid = (B // Bb,)

    need = _block_vmem_bytes(Bb, T, C, R, itemsize)
    vmem_limit = int(min(max(need + (4 << 20), 32 << 20), budget))

    # One-hot (0/1) x bf16 is exact with a single native MXU pass; f32 needs
    # the 3-pass bf16x3 path (HIGHEST) to reproduce the gather exactly.
    precision = (jax.lax.Precision.HIGHEST
                 if patches_btc.dtype == jnp.float32
                 else jax.lax.Precision.DEFAULT)

    kernel = functools.partial(_shuffle_gather_kernel, precision=precision)
    return pl.pallas_call(
        kernel,
        out_shape=jax.ShapeDtypeStruct((B, R, C), patches_btc.dtype),
        grid=grid,
        in_specs=[
            pl.BlockSpec((Bb, R), lambda g: (g, 0)),
            pl.BlockSpec((Bb, T, C), lambda g: (g, 0, 0)),
        ],
        out_specs=pl.BlockSpec((Bb, R, C), lambda g: (g, 0, 0)),
        compiler_params=pltpu.CompilerParams(
            dimension_semantics=("parallel",),
            vmem_limit_bytes=vmem_limit,
        ),
    )(fwd_idx_br.astype(jnp.int32), patches_btc)


def patch_shuffle_forward(patches, ratio, key):
    """Full PatchShuffle.forward.  patches: (T, B, C)."""
    T, B, C = patches.shape
    remain_T = int(T * (1 - ratio))  # matches PyTorch's int() truncation

    # RNG + per-column argsort stay in XLA (no clean Pallas sort primitive).
    # TODO(synk): index generation (argsort of noise) is plain XLA.
    noise = jax.random.uniform(key, (T, B), dtype=jnp.float32)
    forward_indexes = jnp.argsort(noise, axis=0).astype(jnp.int32)       # (T, B)

    # backward_indexes = inverse permutation per column (scatter of iota).
    t_iota = jnp.broadcast_to(jnp.arange(T, dtype=jnp.int32)[:, None], (T, B))
    b_iota = jnp.broadcast_to(jnp.arange(B, dtype=jnp.int32)[None, :], (T, B))
    backward_indexes = (
        jnp.zeros((T, B), jnp.int32).at[forward_indexes, b_iota].set(t_iota)
    )

    # The kernel is batch-major; the (T,B,C)<->(B,T,C) transposes are thin XLA
    # layout plumbing outside the kernel (MAE_Encoder goes batch-major right
    # after the shuffle anyway, so in the full encoder they fuse away).
    x_btc = jnp.transpose(patches, (1, 0, 2))                            # (B, T, C)
    idx_br = jnp.transpose(forward_indexes[:remain_T], (1, 0))           # (B, R)
    out_brc = patch_shuffle_gather_bmajor(x_btc, idx_br)                 # (B, R, C)
    shuffled = jnp.transpose(out_brc, (1, 0, 2))                         # (R, B, C)
    return shuffled, forward_indexes, backward_indexes


def _reference_gather(patches, forward_indexes, remain_T):
    """Pure-JAX reference of take_indexes(...)[:remain_T]."""
    idx = forward_indexes[:, :, None].astype(jnp.int32)                  # (T, B, 1)
    return jnp.take_along_axis(patches, idx, axis=0)[:remain_T]


if __name__ == "__main__":
    key = jax.random.PRNGKey(0)
    k_data, k_noise, k_data2, k_noise2 = jax.random.split(key, 4)

    # --- MAE_Encoder defaults: image_size=32, patch_size=2, emb_dim=192 ---
    #     -> T = (32 // 2) ** 2 = 256 tokens, C = 192; small batch B = 2.
    T, B, C = 256, 2, 192
    ratio = 0.75
    remain_T = int(T * (1 - ratio))
    patches = jax.random.normal(k_data, (T, B, C), dtype=jnp.float32)

    shuffled, fwd_idx, bwd_idx = patch_shuffle_forward(patches, ratio, k_noise)
    shuffled = jax.block_until_ready(shuffled)
    fwd_idx = jax.block_until_ready(fwd_idx)
    bwd_idx = jax.block_until_ready(bwd_idx)

    ref = _reference_gather(patches, fwd_idx, remain_T)
    assert shuffled.shape == (remain_T, B, C)
    assert fwd_idx.shape == (T, B) and bwd_idx.shape == (T, B)
    assert jnp.allclose(shuffled, ref, rtol=1e-6, atol=1e-6), \
        "Pallas gather mismatch vs reference (f32)"

    restored = jnp.take_along_axis(fwd_idx, bwd_idx, axis=0)
    expect = jnp.broadcast_to(jnp.arange(T, dtype=jnp.int32)[:, None], (T, B))
    assert jnp.array_equal(restored, expect), \
        "backward_indexes is not the inverse permutation"

    # --- second config: exercises Bb=8, grid=(2,), bf16 / DEFAULT-precision path ---
    T2, B2, C2 = 64, 16, 128
    remain_T2 = int(T2 * (1 - ratio))
    patches2 = jax.random.normal(k_data2, (T2, B2, C2), dtype=jnp.bfloat16)
    shuffled2, fwd_idx2, _ = patch_shuffle_forward(patches2, ratio, k_noise2)
    shuffled2 = jax.block_until_ready(shuffled2)
    ref2 = _reference_gather(patches2, fwd_idx2, remain_T2)
    assert shuffled2.shape == (remain_T2, B2, C2)
    assert jnp.allclose(shuffled2.astype(jnp.float32), ref2.astype(jnp.float32),
                        rtol=1e-6, atol=1e-6), \
        "Pallas gather mismatch vs reference (bf16)"

    print("KERNEL_OK")
</pallas_src>

<mosaic_0001>
module attributes {stable_mosaic.version = 11 : i64} {
  func.func @_shuffle_gather_kernel(%arg0: i32, %arg1: memref<2x64xi32, #tpu.memory_space<vmem>>, %arg2: memref<2x256x192xf32, #tpu.memory_space<vmem>>, %arg3: memref<2x64x192xf32, #tpu.memory_space<vmem>>) attributes {dimension_semantics = [#tpu.dimension_semantics<parallel>], iteration_bounds = array<i64: 1>, scalar_prefetch = 0 : i64, scratch_operands = 0 : i64, tpu.core_type = #tpu.core_type<tc>, window_params = [{transform_indices = @transform_0, window_bounds = array<i64: 2, 64>}, {transform_indices = @transform_1, window_bounds = array<i64: 2, 256, 192>}, {transform_indices = @transform_2, window_bounds = array<i64: 2, 64, 192>}]} {
    %c0 = arith.constant 0 : index
    %c0_0 = arith.constant 0 : index
    %0 = vector.load %arg1[%c0, %c0_0] : memref<2x64xi32, #tpu.memory_space<vmem>>, vector<2x64xi32>
    %1 = tpu.iota {dimensions = array<i32: 1>} : vector<2x256x64xi32>
    %2 = vector.shape_cast %0 : vector<2x64xi32> to vector<2x1x64xi32>
    %3 = vector.broadcast %2 : vector<2x1x64xi32> to vector<2x256x64xi32>
    %4 = arith.cmpi eq, %1, %3 : vector<2x256x64xi32>
    %5 = arith.extui %4 : vector<2x256x64xi1> to vector<2x256x64xi32>
    %6 = arith.sitofp %5 : vector<2x256x64xi32> to vector<2x256x64xf32>
    %c0_1 = arith.constant 0 : index
    %c0_2 = arith.constant 0 : index
    %c0_3 = arith.constant 0 : index
    %7 = vector.load %arg2[%c0_1, %c0_2, %c0_3] : memref<2x256x192xf32, #tpu.memory_space<vmem>>, vector<2x256x192xf32>
    %cst = arith.constant dense<0.000000e+00> : vector<2x64x192xf32>
    %8 = tpu.matmul %6, %7, %cst {dimension_numbers = #tpu.dot_dimension_numbers<[1], [1], [2], [2], [0, 0, 0, 2, 1, 2], [0], [0]>, precision = #tpu.contract_precision<fp32>} : vector<2x256x64xf32>, vector<2x256x192xf32>, vector<2x64x192xf32> -> vector<2x64x192xf32>
    %c0_4 = arith.constant 0 : index
    %c0_5 = arith.constant 0 : index
    %c0_6 = arith.constant 0 : index
    %9 = vector.load %arg3[%c0_4, %c0_5, %c0_6] : memref<2x64x192xf32, #tpu.memory_space<vmem>>, vector<2x64x192xf32>
    tpu.vector_store %arg3[%c0_4, %c0_5, %c0_6], %8 {strides = array<i32>} : memref<2x64x192xf32, #tpu.memory_space<vmem>>, vector<2x64x192xf32>,
    return
  }
  func.func @transform_0(%arg0: i32) -> (i32, i32) {
    %c0_i32 = arith.constant 0 : i32
    %c0_i32_0 = arith.constant 0 : i32
    return %arg0, %c0_i32 : i32, i32
  }
  func.func @transform_1(%arg0: i32) -> (i32, i32, i32) {
    %c0_i32 = arith.constant 0 : i32
    %c0_i32_0 = arith.constant 0 : i32
    %c0_i32_1 = arith.constant 0 : i32
    return %arg0, %c0_i32, %c0_i32_0 : i32, i32, i32
  }
  func.func @transform_2(%arg0: i32) -> (i32, i32, i32) {
    %c0_i32 = arith.constant 0 : i32
    %c0_i32_0 = arith.constant 0 : i32
    %c0_i32_1 = arith.constant 0 : i32
    return %arg0, %c0_i32, %c0_i32_0 : i32, i32, i32
  }
}

</mosaic_0001>

<llo_original>
// kernel: tpu_custom_call.1
$region0: #{tpu_custom_call.1}
  #allocation0 [shape = 'u32[]', space=smem, size = 0x4, offset = 0x4, fixed_abs, tag = 'smem constant byte address 0x4 - core index']
  #allocation1 [shape = 'u32[72,128]{1,0:T(1,128)}', space=vmem, size = 0x9000, scoped, tag = 'internal scratch']
  %s0 = inlined_call_operand.vmem [shape: s32[2,64], index: 0, kind: input, shape index: {}]
  %s1 = inlined_call_operand.vmem [shape: f32[2,256,192], index: 1, kind: input, shape index: {}]
  %s2 = inlined_call_operand.hbm [shape: f32[2,64,192], index: 2, kind: output, shape index: {}]
  %s3 = sld [smem:[#allocation0]]
  $region18: #{tpu_custom_call.1} parent=0
    _
  %s5 = ssub.s32 1, %s3
  %s6 = scalar_select 0, %s5, %s3
  $region1: #{tpu_custom_call.1} parent=0
    #allocation2 [shape = 'u8[131072]{0}', space=vmem, size = 0x20000, scoped, tag = 'output window, operand 0, single buffered']
    #allocation3 [shape = 's32[1]{0}', space=sflag, size = 0x4, scoped, tag = 'scoped memory for tpu_custom_call.1']
    %7 = vsyncpa [#allocation3], 0
    // Predicated region
    $region2: #{tpu_custom_call.1} parent=1 // pred_check
      _
    $region3: #{tpu_custom_call.1} parent=1 // pred_check_branch
      %9 = sbr.rel (0) target = $region5
    $region4: #{tpu_custom_call.1} parent=1 // pred_region
      _
    $region5: #{tpu_custom_call.1} parent=1 // pred_fallthru
      _
    // Predicated region
    $region6: #{tpu_custom_call.1} parent=1 // pred_check
      _
    $region7: #{tpu_custom_call.1} parent=1 // pred_check_branch
      %11 = sbr.rel (0) target = $region9
    $region8: #{tpu_custom_call.1} parent=1 // pred_region
      _
    $region9: #{tpu_custom_call.1} parent=1 // pred_fallthru
      _
    %v12 = vld [vmem:[%s0] sm:$0x3]
    %v13 = vlaneseq
    %v14 = vshrl.u32 %v13, 7
    %v15 = vadd.s32 %v14, 8
    %v16 = vadd.s32 %v14, 16
    %v17 = vadd.s32 %v14, 24
    %v18 = vadd.s32 %v14, 32
    %v19 = vadd.s32 %v14, 40
    %v20 = vadd.s32 %v14, 48
    %v21 = vadd.s32 %v14, 56
    %v22 = vadd.s32 %v14, 64
    %v23 = vadd.s32 %v14, 72
    %v24 = vadd.s32 %v14, 80
    %v25 = vadd.s32 %v14, 88
    %v26 = vadd.s32 %v14, 96
    %v27 = vadd.s32 %v14, 104
    %v28 = vadd.s32 %v14, 112
    %v29 = vadd.s32 %v14, 120
    %v30 = vadd.s32 %v14, 128
    %v31 = vadd.s32 %v14, 136
    %v32 = vadd.s32 %v14, 144
    %v33 = vadd.s32 %v14, 152
    %v34 = vadd.s32 %v14, 160
    %v35 = vadd.s32 %v14, 168
    %v36 = vadd.s32 %v14, 176
    %v37 = vadd.s32 %v14, 184
    %v38 = vadd.s32 %v14, 192
    %v39 = vadd.s32 %v14, 200
    %v40 = vadd.s32 %v14, 208
    %v41 = vadd.s32 %v14, 216
    %v42 = vadd.s32 %v14, 224
    %v43 = vadd.s32 %v14, 232
    %v44 = vadd.s32 %v14, 240
    %v45 = vadd.s32 %v14, 248
    %v46 = vrot.slane %v12, 1
    %v47 = vperm.slane %v12, 0
    %v48 = vperm.slane %v46, 0
    %vm49 = vcmp.eq.s32.totalorder %v14, %v47
    %vm50 = vcmp.eq.s32.totalorder %v15, %v47
    %vm51 = vcmp.eq.s32.totalorder %v16, %v47
    %vm52 = vcmp.eq.s32.totalorder %v17, %v47
    %vm53 = vcmp.eq.s32.totalorder %v18, %v47
    %vm54 = vcmp.eq.s32.totalorder %v19, %v47
    %vm55 = vcmp.eq.s32.totalorder %v20, %v47
    %vm56 = vcmp.eq.s32.totalorder %v21, %v47
    %vm57 = vcmp.eq.s32.totalorder %v22, %v47
    %vm58 = vcmp.eq.s32.totalorder %v23, %v47
    %vm59 = vcmp.eq.s32.totalorder %v24, %v47
    %vm60 = vcmp.eq.s32.totalorder %v25, %v47
    %vm61 = vcmp.eq.s32.totalorder %v26, %v47
    %vm62 = vcmp.eq.s32.totalorder %v27, %v47
    %vm63 = vcmp.eq.s32.totalorder %v28, %v47
    %vm64 = vcmp.eq.s32.totalorder %v29, %v47
    %vm65 = vcmp.eq.s32.totalorder %v30, %v47
    %vm66 = vcmp.eq.s32.totalorder %v31, %v47
    %vm67 = vcmp.eq.s32.totalorder %v32, %v47
    %vm68 = vcmp.eq.s32.totalorder %v33, %v47
    %vm69 = vcmp.eq.s32.totalorder %v34, %v47
    %vm70 = vcmp.eq.s32.totalorder %v35, %v47
    %vm71 = vcmp.eq.s32.totalorder %v36, %v47
    %vm72 = vcmp.eq.s32.totalorder %v37, %v47
    %vm73 = vcmp.eq.s32.totalorder %v38, %v47
    %vm74 = vcmp.eq.s32.totalorder %v39, %v47
    %vm75 = vcmp.eq.s32.totalorder %v40, %v47
    %vm76 = vcmp.eq.s32.totalorder %v41, %v47
    %vm77 = vcmp.eq.s32.totalorder %v42, %v47
    %vm78 = vcmp.eq.s32.totalorder %v43, %v47
    %vm79 = vcmp.eq.s32.totalorder %v44, %v47
    %vm80 = vcmp.eq.s32.totalorder %v45, %v47
    %vm81 = vcmp.eq.s32.totalorder %v14, %v48
    %vm82 = vcmp.eq.s32.totalorder %v15, %v48
    %vm83 = vcmp.eq.s32.totalorder %v16, %v48
    %vm84 = vcmp.eq.s32.totalorder %v17, %v48
    %vm85 = vcmp.eq.s32.totalorder %v18, %v48
    %vm86 = vcmp.eq.s32.totalorder %v19, %v48
    %vm87 = vcmp.eq.s32.totalorder %v20, %v48
    %vm88 = vcmp.eq.s32.totalorder %v21, %v48
    %vm89 = vcmp.eq.s32.totalorder %v22, %v48
    %vm90 = vcmp.eq.s32.totalorder %v23, %v48
    %vm91 = vcmp.eq.s32.totalorder %v24, %v48
    %vm92 = vcmp.eq.s32.totalorder %v25, %v48
    %vm93 = vcmp.eq.s32.totalorder %v26, %v48
    %vm94 = vcmp.eq.s32.totalorder %v27, %v48
    %vm95 = vcmp.eq.s32.totalorder %v28, %v48
    %vm96 = vcmp.eq.s32.totalorder %v29, %v48
    %vm97 = vcmp.eq.s32.totalorder %v30, %v48
    %vm98 = vcmp.eq.s32.totalorder %v31, %v48
    %vm99 = vcmp.eq.s32.totalorder %v32, %v48
    %vm100 = vcmp.eq.s32.totalorder %v33, %v48
    %vm101 = vcmp.eq.s32.totalorder %v34, %v48
    %vm102 = vcmp.eq.s32.totalorder %v35, %v48
    %vm103 = vcmp.eq.s32.totalorder %v36, %v48
    %vm104 = vcmp.eq.s32.totalorder %v37, %v48
    %vm105 = vcmp.eq.s32.totalorder %v38, %v48
    %vm106 = vcmp.eq.s32.totalorder %v39, %v48
    %vm107 = vcmp.eq.s32.totalorder %v40, %v48
    %vm108 = vcmp.eq.s32.totalorder %v41, %v48
    %vm109 = vcmp.eq.s32.totalorder %v42, %v48
    %vm110 = vcmp.eq.s32.totalorder %v43, %v48
    %vm111 = vcmp.eq.s32.totalorder %v44, %v48
    %vm112 = vcmp.eq.s32.totalorder %v45, %v48
    %v113 = vsel %vm49, 1, 0
    %v114 = vsel %vm50, 1, 0
    %v115 = vsel %vm51, 1, 0
    %v116 = vsel %vm52, 1, 0
    %v117 = vsel %vm53, 1, 0
    %v118 = vsel %vm54, 1, 0
    %v119 = vsel %vm55, 1, 0
    %v120 = vsel %vm56, 1, 0
    %v121 = vsel %vm57, 1, 0
    %v122 = vsel %vm58, 1, 0
    %v123 = vsel %vm59, 1, 0
    %v124 = vsel %vm60, 1, 0
    %v125 = vsel %vm61, 1, 0
    %v126 = vsel %vm62, 1, 0
    %v127 = vsel %vm63, 1, 0
    %v128 = vsel %vm64, 1, 0
    %v129 = vsel %vm65, 1, 0
    %v130 = vsel %vm66, 1, 0
    %v131 = vsel %vm67, 1, 0
    %v132 = vsel %vm68, 1, 0
    %v133 = vsel %vm69, 1, 0
    %v134 = vsel %vm70, 1, 0
    %v135 = vsel %vm71, 1, 0
    %v136 = vsel %vm72, 1, 0
    %v137 = vsel %vm73, 1, 0
    %v138 = vsel %vm74, 1, 0
    %v139 = vsel %vm75, 1, 0
    %v140 = vsel %vm76, 1, 0
    %v141 = vsel %vm77, 1, 0
    %v142 = vsel %vm78, 1, 0
    %v143 = vsel %vm79, 1, 0
    %v144 = vsel %vm80, 1, 0
    %v145 = vsel %vm81, 1, 0
    %v146 = vsel %vm82, 1, 0
    %v147 = vsel %vm83, 1, 0
    %v148 = vsel %vm84, 1, 0
    %v149 = vsel %vm85, 1, 0
    %v150 = vsel %vm86, 1, 0
    %v151 = vsel %vm87, 1, 0
    %v152 = vsel %vm88, 1, 0
    %v153 = vsel %vm89, 1, 0
    %v154 = vsel %vm90, 1, 0
    %v155 = vsel %vm91, 1, 0
    %v156 = vsel %vm92, 1, 0
    %v157 = vsel %vm93, 1, 0
    %v158 = vsel %vm94, 1, 0
    %v159 = vsel %vm95, 1, 0
    %v160 = vsel %vm96, 1, 0
    %v161 = vsel %vm97, 1, 0
    %v162 = vsel %vm98, 1, 0
    %v163 = vsel %vm99, 1, 0
    %v164 = vsel %vm100, 1, 0
    %v165 = vsel %vm101, 1, 0
    %v166 = vsel %vm102, 1, 0
    %v167 = vsel %vm103, 1, 0
    %v168 = vsel %vm104, 1, 0
    %v169 = vsel %vm105, 1, 0
    %v170 = vsel %vm106, 1, 0
    %v171 = vsel %vm107, 1, 0
    %v172 = vsel %vm108, 1, 0
    %v173 = vsel %vm109, 1, 0
    %v174 = vsel %vm110, 1, 0
    %v175 = vsel %vm111, 1, 0
    %v176 = vsel %vm112, 1, 0
    %v177 = vcvt.s32.f32 %v113
    %v178 = vcvt.s32.f32 %v114
    %v179 = vcvt.s32.f32 %v115
    %v180 = vcvt.s32.f32 %v116
    %v181 = vcvt.s32.f32 %v117
    %v182 = vcvt.s32.f32 %v118
    %v183 = vcvt.s32.f32 %v119
    %v184 = vcvt.s32.f32 %v120
    %v185 = vcvt.s32.f32 %v121
    %v186 = vcvt.s32.f32 %v122
    %v187 = vcvt.s32.f32 %v123
    %v188 = vcvt.s32.f32 %v124
    %v189 = vcvt.s32.f32 %v125
    %v190 = vcvt.s32.f32 %v126
    %v191 = vcvt.s32.f32 %v127
    %v192 = vcvt.s32.f32 %v128
    %v193 = vcvt.s32.f32 %v129
    %v194 = vcvt.s32.f32 %v130
    %v195 = vcvt.s32.f32 %v131
    %v196 = vcvt.s32.f32 %v132
    %v197 = vcvt.s32.f32 %v133
    %v198 = vcvt.s32.f32 %v134
    %v199 = vcvt.s32.f32 %v135
    %v200 = vcvt.s32.f32 %v136
    %v201 = vcvt.s32.f32 %v137
    %v202 = vcvt.s32.f32 %v138
    %v203 = vcvt.s32.f32 %v139
    %v204 = vcvt.s32.f32 %v140
    %v205 = vcvt.s32.f32 %v141
    %v206 = vcvt.s32.f32 %v142
    %v207 = vcvt.s32.f32 %v143
    %v208 = vcvt.s32.f32 %v144
    %v209 = vcvt.s32.f32 %v145
    %v210 = vcvt.s32.f32 %v146
    %v211 = vcvt.s32.f32 %v147
    %v212 = vcvt.s32.f32 %v148
    %v213 = vcvt.s32.f32 %v149
    %v214 = vcvt.s32.f32 %v150
    %v215 = vcvt.s32.f32 %v151
    %v216 = vcvt.s32.f32 %v152
    %v217 = vcvt.s32.f32 %v153
    %v218 = vcvt.s32.f32 %v154
    %v219 = vcvt.s32.f32 %v155
    %v220 = vcvt.s32.f32 %v156
    %v221 = vcvt.s32.f32 %v157
    %v222 = vcvt.s32.f32 %v158
    %v223 = vcvt.s32.f32 %v159
    %v224 = vcvt.s32.f32 %v160
    %v225 = vcvt.s32.f32 %v161
    %v226 = vcvt.s32.f32 %v162
    %v227 = vcvt.s32.f32 %v163
    %v228 = vcvt.s32.f32 %v164
    %v229 = vcvt.s32.f32 %v165
    %v230 = vcvt.s32.f32 %v166
    %v231 = vcvt.s32.f32 %v167
    %v232 = vcvt.s32.f32 %v168
    %v233 = vcvt.s32.f32 %v169
    %v234 = vcvt.s32.f32 %v170
    %v235 = vcvt.s32.f32 %v171
    %v236 = vcvt.s32.f32 %v172
    %v237 = vcvt.s32.f32 %v173
    %v238 = vcvt.s32.f32 %v174
    %v239 = vcvt.s32.f32 %v175
    %v240 = vcvt.s32.f32 %v176
    %v241 = vld [vmem:[%s1] sm:$0xff]
    %v242 = vld [vmem:[%s1 + $0x8] sm:$0xff]
    %v243 = vld [vmem:[%s1 + $0x10] sm:$0xff]
    %v244 = vld [vmem:[%s1 + $0x18] sm:$0xff]
    %v245 = vld [vmem:[%s1 + $0x20] sm:$0xff]
    %v246 = vld [vmem:[%s1 + $0x28] sm:$0xff]
    %v247 = vld [vmem:[%s1 + $0x30] sm:$0xff]
    %v248 = vld [vmem:[%s1 + $0x38] sm:$0xff]
    %v249 = vld [vmem:[%s1 + $0x40] sm:$0xff]
    %v250 = vld [vmem:[%s1 + $0x48] sm:$0xff]
    %v251 = vld [vmem:[%s1 + $0x50] sm:$0xff]
    %v252 = vld [vmem:[%s1 + $0x58] sm:$0xff]
    %v253 = vld [vmem:[%s1 + $0x60] sm:$0xff]
    %v254 = vld [vmem:[%s1 + $0x68] sm:$0xff]
    %v255 = vld [vmem:[%s1 + $0x70] sm:$0xff]
    %v256 = vld [vmem:[%s1 + $0x78] sm:$0xff]
    %v257 = vld [vmem:[%s1 + $0x80] sm:$0xff]
    %v258 = vld [vmem:[%s1 + $0x88] sm:$0xff]
    %v259 = vld [vmem:[%s1 + $0x90] sm:$0xff]
    %v260 = vld [vmem:[%s1 + $0x98] sm:$0xff]
    %v261 = vld [vmem:[%s1 + $0xa0] sm:$0xff]
    %v262 = vld [vmem:[%s1 + $0xa8] sm:$0xff]
    %v263 = vld [vmem:[%s1 + $0xb0] sm:$0xff]
    %v264 = vld [vmem:[%s1 + $0xb8] sm:$0xff]
    %v265 = vld [vmem:[%s1 + $0xc0] sm:$0xff]
    %v266 = vld [vmem:[%s1 + $0xc8] sm:$0xff]
    %v267 = vld [vmem:[%s1 + $0xd0] sm:$0xff]
    %v268 = vld [vmem:[%s1 + $0xd8] sm:$0xff]
    %v269 = vld [vmem:[%s1 + $0xe0] sm:$0xff]
    %v270 = vld [vmem:[%s1 + $0xe8] sm:$0xff]
    %v271 = vld [vmem:[%s1 + $0xf0] sm:$0xff]
    %v272 = vld [vmem:[%s1 + $0xf8] sm:$0xff]
    %v273 = vld [vmem:[%s1 + $0x100] sm:$0xff]
    %v274 = vld [vmem:[%s1 + $0x108] sm:$0xff]
    %v275 = vld [vmem:[%s1 + $0x110] sm:$0xff]
    %v276 = vld [vmem:[%s1 + $0x118] sm:$0xff]
    %v277 = vld [vmem:[%s1 + $0x120] sm:$0xff]
    %v278 = vld [vmem:[%s1 + $0x128] sm:$0xff]
    %v279 = vld [vmem:[%s1 + $0x130] sm:$0xff]
    %v280 = vld [vmem:[%s1 + $0x138] sm:$0xff]
    %v281 = vld [vmem:[%s1 + $0x140] sm:$0xff]
    %v282 = vld [vmem:[%s1 + $0x148] sm:$0xff]
    %v283 = vld [vmem:[%s1 + $0x150] sm:$0xff]
    %v284 = vld [vmem:[%s1 + $0x158] sm:$0xff]
    %v285 = vld [vmem:[%s1 + $0x160] sm:$0xff]
    %v286 = vld [vmem:[%s1 + $0x168] sm:$0xff]
    %v287 = vld [vmem:[%s1 + $0x170] sm:$0xff]
    %v288 = vld [vmem:[%s1 + $0x178] sm:$0xff]
    %v289 = vld [vmem:[%s1 + $0x180] sm:$0xff]
    %v290 = vld [vmem:[%s1 + $0x188] sm:$0xff]
    %v291 = vld [vmem:[%s1 + $0x190] sm:$0xff]
    %v292 = vld [vmem:[%s1 + $0x198] sm:$0xff]
    %v293 = vld [vmem:[%s1 + $0x1a0] sm:$0xff]
    %v294 = vld [vmem:[%s1 + $0x1a8] sm:$0xff]
    %v295 = vld [vmem:[%s1 + $0x1b0] sm:$0xff]
    %v296 = vld [vmem:[%s1 + $0x1b8] sm:$0xff]
    %v297 = vld [vmem:[%s1 + $0x1c0] sm:$0xff]
    %v298 = vld [vmem:[%s1 + $0x1c8] sm:$0xff]
    %v299 = vld [vmem:[%s1 + $0x1d0] sm:$0xff]
    %v300 = vld [vmem:[%s1 + $0x1d8] sm:$0xff]
    %v301 = vld [vmem:[%s1 + $0x1e0] sm:$0xff]
    %v302 = vld [vmem:[%s1 + $0x1e8] sm:$0xff]
    %v303 = vld [vmem:[%s1 + $0x1f0] sm:$0xff]
    %v304 = vld [vmem:[%s1 + $0x1f8] sm:$0xff]
    %v305 = vld [vmem:[%s1 + $0x200] sm:$0xff]
    %v306 = vld [vmem:[%s1 + $0x208] sm:$0xff]
    %v307 = vld [vmem:[%s1 + $0x210] sm:$0xff]
    %v308 = vld [vmem:[%s1 + $0x218] sm:$0xff]
    %v309 = vld [vmem:[%s1 + $0x220] sm:$0xff]
    %v310 = vld [vmem:[%s1 + $0x228] sm:$0xff]
    %v311 = vld [vmem:[%s1 + $0x230] sm:$0xff]
    %v312 = vld [vmem:[%s1 + $0x238] sm:$0xff]
    %v313 = vld [vmem:[%s1 + $0x240] sm:$0xff]
    %v314 = vld [vmem:[%s1 + $0x248] sm:$0xff]
    %v315 = vld [vmem:[%s1 + $0x250] sm:$0xff]
    %v316 = vld [vmem:[%s1 + $0x258] sm:$0xff]
    %v317 = vld [vmem:[%s1 + $0x260] sm:$0xff]
    %v318 = vld [vmem:[%s1 + $0x268] sm:$0xff]
    %v319 = vld [vmem:[%s1 + $0x270] sm:$0xff]
    %v320 = vld [vmem:[%s1 + $0x278] sm:$0xff]
    %v321 = vld [vmem:[%s1 + $0x280] sm:$0xff]
    %v322 = vld [vmem:[%s1 + $0x288] sm:$0xff]
    %v323 = vld [vmem:[%s1 + $0x290] sm:$0xff]
    %v324 = vld [vmem:[%s1 + $0x298] sm:$0xff]
    %v325 = vld [vmem:[%s1 + $0x2a0] sm:$0xff]
    %v326 = vld [vmem:[%s1 + $0x2a8] sm:$0xff]
    %v327 = vld [vmem:[%s1 + $0x2b0] sm:$0xff]
    %v328 = vld [vmem:[%s1 + $0x2b8] sm:$0xff]
    %v329 = vld [vmem:[%s1 + $0x2c0] sm:$0xff]
    %v330 = vld [vmem:[%s1 + $0x2c8] sm:$0xff]
    %v331 = vld [vmem:[%s1 + $0x2d0] sm:$0xff]
    %v332 = vld [vmem:[%s1 + $0x2d8] sm:$0xff]
    %v333 = vld [vmem:[%s1 + $0x2e0] sm:$0xff]
    %v334 = vld [vmem:[%s1 + $0x2e8] sm:$0xff]
    %v335 = vld [vmem:[%s1 + $0x2f0] sm:$0xff]
    %v336 = vld [vmem:[%s1 + $0x2f8] sm:$0xff]
    %v337 = vld [vmem:[%s1 + $0x300] sm:$0xff]
    %v338 = vld [vmem:[%s1 + $0x308] sm:$0xff]
    %v339 = vld [vmem:[%s1 + $0x310] sm:$0xff]
    %v340 = vld [vmem:[%s1 + $0x318] sm:$0xff]
    %v341 = vld [vmem:[%s1 + $0x320] sm:$0xff]
    %v342 = vld [vmem:[%s1 + $0x328] sm:$0xff]
    %v343 = vld [vmem:[%s1 + $0x330] sm:$0xff]
    %v344 = vld [vmem:[%s1 + $0x338] sm:$0xff]
    %v345 = vld [vmem:[%s1 + $0x340] sm:$0xff]
    %v346 = vld [vmem:[%s1 + $0x348] sm:$0xff]
    %v347 = vld [vmem:[%s1 + $0x350] sm:$0xff]
    %v348 = vld [vmem:[%s1 + $0x358] sm:$0xff]
    %v349 = vld [vmem:[%s1 + $0x360] sm:$0xff]
    %v350 = vld [vmem:[%s1 + $0x368] sm:$0xff]
    %v351 = vld [vmem:[%s1 + $0x370] sm:$0xff]
    %v352 = vld [vmem:[%s1 + $0x378] sm:$0xff]
    %v353 = vld [vmem:[%s1 + $0x380] sm:$0xff]
    %v354 = vld [vmem:[%s1 + $0x388] sm:$0xff]
    %v355 = vld [vmem:[%s1 + $0x390] sm:$0xff]
    %v356 = vld [vmem:[%s1 + $0x398] sm:$0xff]
    %v357 = vld [vmem:[%s1 + $0x3a0] sm:$0xff]
    %v358 = vld [vmem:[%s1 + $0x3a8] sm:$0xff]
    %v359 = vld [vmem:[%s1 + $0x3b0] sm:$0xff]
    %v360 = vld [vmem:[%s1 + $0x3b8] sm:$0xff]
    %v361 = vld [vmem:[%s1 + $0x3c0] sm:$0xff]
    %v362 = vld [vmem:[%s1 + $0x3c8] sm:$0xff]
    %v363 = vld [vmem:[%s1 + $0x3d0] sm:$0xff]
    %v364 = vld [vmem:[%s1 + $0x3d8] sm:$0xff]
    %v365 = vld [vmem:[%s1 + $0x3e0] sm:$0xff]
    %v366 = vld [vmem:[%s1 + $0x3e8] sm:$0xff]
    %v367 = vld [vmem:[%s1 + $0x3f0] sm:$0xff]
    %v368 = vld [vmem:[%s1 + $0x3f8] sm:$0xff]
    %369 = vxpose.xlu0.b32.start [1/16] %v177, 128
    %370 = vxpose.xlu0.b32.cont [2/16] %v178, 128
    %371 = vxpose.xlu0.b32.cont [3/16] %v179, 128
    %372 = vxpose.xlu0.b32.cont [4/16] %v180, 128
    %373 = vxpose.xlu0.b32.cont [5/16] %v181, 128
    %374 = vxpose.xlu0.b32.cont [6/16] %v182, 128
    %375 = vxpose.xlu0.b32.cont [7/16] %v183, 128
    %376 = vxpose.xlu0.b32.cont [8/16] %v184, 128
    %377 = vxpose.xlu0.b32.cont [9/16] %v185, 128
    %378 = vxpose.xlu0.b32.cont [10/16] %v186, 128
    %379 = vxpose.xlu0.b32.cont [11/16] %v187, 128
    %380 = vxpose.xlu0.b32.cont [12/16] %v188, 128
    %381 = vxpose.xlu0.b32.cont [13/16] %v189, 128
    %382 = vxpose.xlu0.b32.cont [14/16] %v190, 128
    %383 = vxpose.xlu0.b32.cont [15/16] %v191, 128
    %384 = vxpose.xlu0.b32.end [16/16] %v192, 128
    %v385 = vpop.trf.xlu0
    %v386 = vpop.trf.xlu0
    %v387 = vpop.trf.xlu0
    %v388 = vpop.trf.xlu0
    %v389 = vpop.trf.xlu0
    %v390 = vpop.trf.xlu0
    %v391 = vpop.trf.xlu0
    %v392 = vpop.trf.xlu0
    %v393 = vpop.trf.xlu0
    %v394 = vpop.trf.xlu0
    %v395 = vpop.trf.xlu0
    %v396 = vpop.trf.xlu0
    %v397 = vpop.trf.xlu0
    %v398 = vpop.trf.xlu0
    %v399 = vpop.trf.xlu0
    %v400 = vpop.trf.xlu0
    %401 = vxpose.xlu0.b32.start [1/16] %v193, 128
    %402 = vxpose.xlu0.b32.cont [2/16] %v194, 128
    %403 = vxpose.xlu0.b32.cont [3/16] %v195, 128
    %404 = vxpose.xlu0.b32.cont [4/16] %v196, 128
    %405 = vxpose.xlu0.b32.cont [5/16] %v197, 128
    %406 = vxpose.xlu0.b32.cont [6/16] %v198, 128
    %407 = vxpose.xlu0.b32.cont [7/16] %v199, 128
    %408 = vxpose.xlu0.b32.cont [8/16] %v200, 128
    %409 = vxpose.xlu0.b32.cont [9/16] %v201, 128
    %410 = vxpose.xlu0.b32.cont [10/16] %v202, 128
    %411 = vxpose.xlu0.b32.cont [11/16] %v203, 128
    %412 = vxpose.xlu0.b32.cont [12/16] %v204, 128
    %413 = vxpose.xlu0.b32.cont [13/16] %v205, 128
    %414 = vxpose.xlu0.b32.cont [14/16] %v206, 128
    %415 = vxpose.xlu0.b32.cont [15/16] %v207, 128
    %416 = vxpose.xlu0.b32.end [16/16] %v208, 128
    %v417 = vpop.trf.xlu0
    %v418 = vpop.trf.xlu0
    %v419 = vpop.trf.xlu0
    %v420 = vpop.trf.xlu0
    %v421 = vpop.trf.xlu0
    %v422 = vpop.trf.xlu0
    %v423 = vpop.trf.xlu0
    %v424 = vpop.trf.xlu0
    %v425 = vpop.trf.xlu0
    %v426 = vpop.trf.xlu0
    %v427 = vpop.trf.xlu0
    %v428 = vpop.trf.xlu0
    %v429 = vpop.trf.xlu0
    %v430 = vpop.trf.xlu0
    %v431 = vpop.trf.xlu0
    %v432 = vpop.trf.xlu0
    %v433 = vand.u32 %v271, 4294901760
    %434 = vmatpush.msra.mxu0 %v433
    %v435 = vand.u32 %v269, 4294901760
    %436 = vmatpush.msra.mxu0 %v435
    %v437 = vand.u32 %v267, 4294901760
    %438 = vmatpush.msra.mxu0 %v437
    %v439 = vand.u32 %v265, 4294901760
    %440 = vmatpush.msra.mxu0 %v439
    %v441 = vand.u32 %v263, 4294901760
    %442 = vmatpush.msra.mxu0 %v441
    %v443 = vand.u32 %v261, 4294901760
    %444 = vmatpush.msra.mxu0 %v443
    %v445 = vand.u32 %v259, 4294901760
    %446 = vmatpush.msra.mxu0 %v445
    %v447 = vand.u32 %v257, 4294901760
    %448 = vmatpush.msra.mxu0 %v447
    %v449 = vand.u32 %v255, 4294901760
    %450 = vmatpush.msra.mxu0 %v449
    %v451 = vand.u32 %v253, 4294901760
    %452 = vmatpush.msra.mxu0 %v451
    %v453 = vand.u32 %v251, 4294901760
    %454 = vmatpush.msra.mxu0 %v453
    %v455 = vand.u32 %v249, 4294901760
    %456 = vmatpush.msra.mxu0 %v455
    %v457 = vand.u32 %v247, 4294901760
    %458 = vmatpush.msra.mxu0 %v457
    %v459 = vand.u32 %v245, 4294901760
    %460 = vmatpush.msra.mxu0 %v459
    %v461 = vand.u32 %v243, 4294901760
    %462 = vmatpush.msra.mxu0 %v461
    %v463 = vand.u32 %v241, 4294901760
    %464 = vmatpush.msra.mxu0 %v463
    %v465 = vand.u32 %v385, 4294901760
    %v466 = vsub.f32 %v385, %v465
    %v467 = vand.u32 %v466, 4294901760
    %v468 = vsub.f32 %v466, %v467
    %v469 = vand.u32 %v468, 4294901760
    %470 = vmatmul.f32.gmra.mxu0 %v469
    %v471 = vpop.f32.mrf.mxu0
    %v472 = vadd.f32 0.0, %v471
    %v473 = vand.u32 %v386, 4294901760
    %v474 = vsub.f32 %v386, %v473
    %v475 = vand.u32 %v474, 4294901760
    %v476 = vsub.f32 %v474, %v475
    %v477 = vand.u32 %v476, 4294901760
    %478 = vmatmul.f32.gmra.mxu0 %v477
    %v479 = vpop.f32.mrf.mxu0
    %v480 = vadd.f32 0.0, %v479
    %v481 = vand.u32 %v387, 4294901760
    %v482 = vsub.f32 %v387, %v481
    %v483 = vand.u32 %v482, 4294901760
    %v484 = vsub.f32 %v482, %v483
    %v485 = vand.u32 %v484, 4294901760
    %486 = vmatmul.f32.gmra.mxu0 %v485
    %v487 = vpop.f32.mrf.mxu0
    %v488 = vadd.f32 0.0, %v487
    %v489 = vand.u32 %v388, 4294901760
    %v490 = vsub.f32 %v388, %v489
    %v491 = vand.u32 %v490, 4294901760
    %v492 = vsub.f32 %v490, %v491
    %v493 = vand.u32 %v492, 4294901760
    %494 = vmatmul.f32.gmra.mxu0 %v493
    %v495 = vpop.f32.mrf.mxu0
    %v496 = vadd.f32 0.0, %v495
    %v497 = vand.u32 %v389, 4294901760
    %v498 = vsub.f32 %v389, %v497
    %v499 = vand.u32 %v498, 4294901760
    %v500 = vsub.f32 %v498, %v499
    %v501 = vand.u32 %v500, 4294901760
    %502 = vmatmul.f32.gmra.mxu0 %v501
    %v503 = vpop.f32.mrf.mxu0
    %v504 = vadd.f32 0.0, %v503
    %v505 = vand.u32 %v390, 4294901760
    %v506 = vsub.f32 %v390, %v505
    %v507 = vand.u32 %v506, 4294901760
    %v508 = vsub.f32 %v506, %v507
    %v509 = vand.u32 %v508, 4294901760
    %510 = vmatmul.f32.gmra.mxu0 %v509
    %v511 = vpop.f32.mrf.mxu0
    %v512 = vadd.f32 0.0, %v511
    %v513 = vand.u32 %v391, 4294901760
    %v514 = vsub.f32 %v391, %v513
    %v515 = vand.u32 %v514, 4294901760
    %v516 = vsub.f32 %v514, %v515
    %v517 = vand.u32 %v516, 4294901760
    %518 = vmatmul.f32.gmra.mxu0 %v517
    %v519 = vpop.f32.mrf.mxu0
    %v520 = vadd.f32 0.0, %v519
    %v521 = vand.u32 %v392, 4294901760
    %v522 = vsub.f32 %v392, %v521
    %v523 = vand.u32 %v522, 4294901760
    %v524 = vsub.f32 %v522, %v523
    %v525 = vand.u32 %v524, 4294901760
    %526 = vmatmul.f32.gmra.mxu0 %v525
    %v527 = vpop.f32.mrf.mxu0
    %v528 = vadd.f32 0.0, %v527
    %529 = vdwg.mxu0
    %v530 = vand.u32 %v271, 4294901760
    %v531 = vsub.f32 %v271, %v530
    %v532 = vand.u32 %v531, 4294901760
    %v533 = vsub.f32 %v531, %v532
    %v534 = vand.u32 %v533, 4294901760
    %535 = vmatpush.msra.mxu0 %v534
    %v536 = vand.u32 %v269, 4294901760
    %v537 = vsub.f32 %v269, %v536
    %v538 = vand.u32 %v537, 4294901760
    %v539 = vsub.f32 %v537, %v538
    %v540 = vand.u32 %v539, 4294901760
    %541 = vmatpush.msra.mxu0 %v540
    %v542 = vand.u32 %v267, 4294901760
    %v543 = vsub.f32 %v267, %v542
    %v544 = vand.u32 %v543, 4294901760
    %v545 = vsub.f32 %v543, %v544
    %v546 = vand.u32 %v545, 4294901760
    %547 = vmatpush.msra.mxu0 %v546
    %v548 = vand.u32 %v265, 4294901760
    %v549 = vsub.f32 %v265, %v548
    %v550 = vand.u32 %v549, 4294901760
    %v551 = vsub.f32 %v549, %v550
    %v552 = vand.u32 %v551, 4294901760
    %553 = vmatpush.msra.mxu0 %v552
    %v554 = vand.u32 %v263, 4294901760
    %v555 = vsub.f32 %v263, %v554
    %v556 = vand.u32 %v555, 4294901760
    %v557 = vsub.f32 %v555, %v556
    %v558 = vand.u32 %v557, 4294901760
    %559 = vmatpush.msra.mxu0 %v558
    %v560 = vand.u32 %v261, 4294901760
    %v561 = vsub.f32 %v261, %v560
    %v562 = vand.u32 %v561, 4294901760
    %v563 = vsub.f32 %v561, %v562
    %v564 = vand.u32 %v563, 4294901760
    %565 = vmatpush.msra.mxu0 %v564
    %v566 = vand.u32 %v259, 4294901760
    %v567 = vsub.f32 %v259, %v566
    %v568 = vand.u32 %v567, 4294901760
    %v569 = vsub.f32 %v567, %v568
    %v570 = vand.u32 %v569, 4294901760
    %571 = vmatpush.msra.mxu0 %v570
    %v572 = vand.u32 %v257, 4294901760
    %v573 = vsub.f32 %v257, %v572
    %v574 = vand.u32 %v573, 4294901760
    %v575 = vsub.f32 %v573, %v574
    %v576 = vand.u32 %v575, 4294901760
    %577 = vmatpush.msra.mxu0 %v576
    %v578 = vand.u32 %v255, 4294901760
    %v579 = vsub.f32 %v255, %v578
    %v580 = vand.u32 %v579, 4294901760
    %v581 = vsub.f32 %v579, %v580
    %v582 = vand.u32 %v581, 4294901760
    %583 = vmatpush.msra.mxu0 %v582
    %v584 = vand.u32 %v253, 4294901760
    %v585 = vsub.f32 %v253, %v584
    %v586 = vand.u32 %v585, 4294901760
    %v587 = vsub.f32 %v585, %v586
    %v588 = vand.u32 %v587, 4294901760
    %589 = vmatpush.msra.mxu0 %v588
    %v590 = vand.u32 %v251, 4294901760
    %v591 = vsub.f32 %v251, %v590
    %v592 = vand.u32 %v591, 4294901760
    %v593 = vsub.f32 %v591, %v592
    %v594 = vand.u32 %v593, 4294901760
    %595 = vmatpush.msra.mxu0 %v594
    %v596 = vand.u32 %v249, 4294901760
    %v597 = vsub.f32 %v249, %v596
    %v598 = vand.u32 %v597, 4294901760
    %v599 = vsub.f32 %v597, %v598
    %v600 = vand.u32 %v599, 4294901760
    %601 = vmatpush.msra.mxu0 %v600
    %v602 = vand.u32 %v247, 4294901760
    %v603 = vsub.f32 %v247, %v602
    %v604 = vand.u32 %v603, 4294901760
    %v605 = vsub.f32 %v603, %v604
    %v606 = vand.u32 %v605, 4294901760
    %607 = vmatpush.msra.mxu0 %v606
    %v608 = vand.u32 %v245, 4294901760
    %v609 = vsub.f32 %v245, %v608
    %v610 = vand.u32 %v609, 4294901760
    %v611 = vsub.f32 %v609, %v610
    %v612 = vand.u32 %v611, 4294901760
    %613 = vmatpush.msra.mxu0 %v612
    %v614 = vand.u32 %v243, 4294901760
    %v615 = vsub.f32 %v243, %v614
    %v616 = vand.u32 %v615, 4294901760
    %v617 = vsub.f32 %v615, %v616
    %v618 = vand.u32 %v617, 4294901760
    %619 = vmatpush.msra.mxu0 %v618
    %v620 = vand.u32 %v241, 4294901760
    %v621 = vsub.f32 %v241, %v620
    %v622 = vand.u32 %v621, 4294901760
    %v623 = vsub.f32 %v621, %v622
    %v624 = vand.u32 %v623, 4294901760
    %625 = vmatpush.msra.mxu0 %v624
    %v626 = vand.u32 %v385, 4294901760
    %627 = vmatmul.f32.gmra.mxu0 %v626
    %v628 = vpop.f32.mrf.mxu0
    %v629 = vadd.f32 %v472, %v628
    %v630 = vand.u32 %v386, 4294901760
    %631 = vmatmul.f32.gmra.mxu0 %v630
    %v632 = vpop.f32.mrf.mxu0
    %v633 = vadd.f32 %v480, %v632
    %v634 = vand.u32 %v387, 4294901760
    %635 = vmatmul.f32.gmra.mxu0 %v634
    %v636 = vpop.f32.mrf.mxu0
    %v637 = vadd.f32 %v488, %v636
    %v638 = vand.u32 %v388, 4294901760
    %639 = vmatmul.f32.gmra.mxu0 %v638
    %v640 = vpop.f32.mrf.mxu0
    %v641 = vadd.f32 %v496, %v640
    %v642 = vand.u32 %v389, 4294901760
    %643 = vmatmul.f32.gmra.mxu0 %v642
    %v644 = vpop.f32.mrf.mxu0
    %v645 = vadd.f32 %v504, %v644
    %v646 = vand.u32 %v390, 4294901760
    %647 = vmatmul.f32.gmra.mxu0 %v646
    %v648 = vpop.f32.mrf.mxu0
    %v649 = vadd.f32 %v512, %v648
    %v650 = vand.u32 %v391, 4294901760
    %651 = vmatmul.f32.gmra.mxu0 %v650
    %v652 = vpop.f32.mrf.mxu0
    %v653 = vadd.f32 %v520, %v652
    %v654 = vand.u32 %v392, 4294901760
    %655 = vmatmul.f32.gmra.mxu0 %v654
    %v656 = vpop.f32.mrf.mxu0
    %v657 = vadd.f32 %v528, %v656
    %658 = vdwg.mxu0
    %v659 = vand.u32 %v271, 4294901760
    %v660 = vsub.f32 %v271, %v659
    %661 = vmatpush.msra.mxu0 %v660
    %v662 = vand.u32 %v269, 4294901760
    %v663 = vsub.f32 %v269, %v662
    %664 = vmatpush.msra.mxu0 %v663
    %v665 = vand.u32 %v267, 4294901760
    %v666 = vsub.f32 %v267, %v665
    %667 = vmatpush.msra.mxu0 %v666
    %v668 = vand.u32 %v265, 4294901760
    %v669 = vsub.f32 %v265, %v668
    %670 = vmatpush.msra.mxu0 %v669
    %v671 = vand.u32 %v263, 4294901760
    %v672 = vsub.f32 %v263, %v671
    %673 = vmatpush.msra.mxu0 %v672
    %v674 = vand.u32 %v261, 4294901760
    %v675 = vsub.f32 %v261, %v674
    %676 = vmatpush.msra.mxu0 %v675
    %v677 = vand.u32 %v259, 4294901760
    %v678 = vsub.f32 %v259, %v677
    %679 = vmatpush.msra.mxu0 %v678
    %v680 = vand.u32 %v257, 4294901760
    %v681 = vsub.f32 %v257, %v680
    %682 = vmatpush.msra.mxu0 %v681
    %v683 = vand.u32 %v255, 4294901760
    %v684 = vsub.f32 %v255, %v683
    %685 = vmatpush.msra.mxu0 %v684
    %v686 = vand.u32 %v253, 4294901760
    %v687 = vsub.f32 %v253, %v686
    %688 = vmatpush.msra.mxu0 %v687
    %v689 = vand.u32 %v251, 4294901760
    %v690 = vsub.f32 %v251, %v689
    %691 = vmatpush.msra.mxu0 %v690
    %v692 = vand.u32 %v249, 4294901760
    %v693 = vsub.f32 %v249, %v692
    %694 = vmatpush.msra.mxu0 %v693
    %v695 = vand.u32 %v247, 4294901760
    %v696 = vsub.f32 %v247, %v695
    %697 = vmatpush.msra.mxu0 %v696
    %v698 = vand.u32 %v245, 4294901760
    %v699 = vsub.f32 %v245, %v698
    %700 = vmatpush.msra.mxu0 %v699
    %v701 = vand.u32 %v243, 4294901760
    %v702 = vsub.f32 %v243, %v701
    %703 = vmatpush.msra.mxu0 %v702
    %v704 = vand.u32 %v241, 4294901760
    %v705 = vsub.f32 %v241, %v704
    %706 = vmatpush.msra.mxu0 %v705
    %v707 = vand.u32 %v385, 4294901760
    %v708 = vsub.f32 %v385, %v707
    %709 = vmatmul.f32.gmra.mxu0 %v708
    %v710 = vpop.f32.mrf.mxu0
    %v711 = vadd.f32 %v629, %v710
    %v712 = vand.u32 %v386, 4294901760
    %v713 = vsub.f32 %v386, %v712
    %714 = vmatmul.f32.gmra.mxu0 %v713
    %v715 = vpop.f32.mrf.mxu0
    %v716 = vadd.f32 %v633, %v715
    %v717 = vand.u32 %v387, 4294901760
    %v718 = vsub.f32 %v387, %v717
    %719 = vmatmul.f32.gmra.mxu0 %v718
    %v720 = vpop.f32.mrf.mxu0
    %v721 = vadd.f32 %v637, %v720
    %v722 = vand.u32 %v388, 4294901760
    %v723 = vsub.f32 %v388, %v722
    %724 = vmatmul.f32.gmra.mxu0 %v723
    %v725 = vpop.f32.mrf.mxu0
    %v726 = vadd.f32 %v641, %v725
    %v727 = vand.u32 %v389, 4294901760
    %v728 = vsub.f32 %v389, %v727
    %729 = vmatmul.f32.gmra.mxu0 %v728
    %v730 = vpop.f32.mrf.mxu0
    %v731 = vadd.f32 %v645, %v730
    %v732 = vand.u32 %v390, 4294901760
    %v733 = vsub.f32 %v390, %v732
    %734 = vmatmul.f32.gmra.mxu0 %v733
    %v735 = vpop.f32.mrf.mxu0
    %v736 = vadd.f32 %v649, %v735
    %v737 = vand.u32 %v391, 4294901760
    %v738 = vsub.f32 %v391, %v737
    %739 = vmatmul.f32.gmra.mxu0 %v738
    %v740 = vpop.f32.mrf.mxu0
    %v741 = vadd.f32 %v653, %v740
    %v742 = vand.u32 %v392, 4294901760
    %v743 = vsub.f32 %v392, %v742
    %744 = vmatmul.f32.gmra.mxu0 %v743
    %v745 = vpop.f32.mrf.mxu0
    %v746 = vadd.f32 %v657, %v745
    %747 = vdwg.mxu0
    %v748 = vand.u32 %v271, 4294901760
    %749 = vmatpush.msra.mxu0 %v748
    %v750 = vand.u32 %v269, 4294901760
    %751 = vmatpush.msra.mxu0 %v750
    %v752 = vand.u32 %v267, 4294901760
    %753 = vmatpush.msra.mxu0 %v752
    %v754 = vand.u32 %v265, 4294901760
    %755 = vmatpush.msra.mxu0 %v754
    %v756 = vand.u32 %v263, 4294901760
    %757 = vmatpush.msra.mxu0 %v756
    %v758 = vand.u32 %v261, 4294901760
    %759 = vmatpush.msra.mxu0 %v758
    %v760 = vand.u32 %v259, 4294901760
    %761 = vmatpush.msra.mxu0 %v760
    %v762 = vand.u32 %v257, 4294901760
    %763 = vmatpush.msra.mxu0 %v762
    %v764 = vand.u32 %v255, 4294901760
    %765 = vmatpush.msra.mxu0 %v764
    %v766 = vand.u32 %v253, 4294901760
    %767 = vmatpush.msra.mxu0 %v766
    %v768 = vand.u32 %v251, 4294901760
    %769 = vmatpush.msra.mxu0 %v768
    %v770 = vand.u32 %v249, 4294901760
    %771 = vmatpush.msra.mxu0 %v770
    %v772 = vand.u32 %v247, 4294901760
    %773 = vmatpush.msra.mxu0 %v772
    %v774 = vand.u32 %v245, 4294901760
    %775 = vmatpush.msra.mxu0 %v774
    %v776 = vand.u32 %v243, 4294901760
    %777 = vmatpush.msra.mxu0 %v776
    %v778 = vand.u32 %v241, 4294901760
    %779 = vmatpush.msra.mxu0 %v778
    %v780 = vand.u32 %v385, 4294901760
    %v781 = vsub.f32 %v385, %v780
    %v782 = vand.u32 %v781, 4294901760
    %783 = vmatmul.f32.gmra.mxu0 %v782
    %v784 = vpop.f32.mrf.mxu0
    %v785 = vadd.f32 %v711, %v784
    %v786 = vand.u32 %v386, 4294901760
    %v787 = vsub.f32 %v386, %v786
    %v788 = vand.u32 %v787, 4294901760
    %789 = vmatmul.f32.gmra.mxu0 %v788
    %v790 = vpop.f32.mrf.mxu0
    %v791 = vadd.f32 %v716, %v790
    %v792 = vand.u32 %v387, 4294901760
    %v793 = vsub.f32 %v387, %v792
    %v794 = vand.u32 %v793, 4294901760
    %795 = vmatmul.f32.gmra.mxu0 %v794
    %v796 = vpop.f32.mrf.mxu0
    %v797 = vadd.f32 %v721, %v796
    %v798 = vand.u32 %v388, 4294901760
    %v799 = vsub.f32 %v388, %v798
    %v800 = vand.u32 %v799, 4294901760
    %801 = vmatmul.f32.gmra.mxu0 %v800
    %v802 = vpop.f32.mrf.mxu0
    %v803 = vadd.f32 %v726, %v802
    %v804 = vand.u32 %v389, 4294901760
    %v805 = vsub.f32 %v389, %v804
    %v806 = vand.u32 %v805, 4294901760
    %807 = vmatmul.f32.gmra.mxu0 %v806
    %v808 = vpop.f32.mrf.mxu0
    %v809 = vadd.f32 %v731, %v808
    %v810 = vand.u32 %v390, 4294901760
    %v811 = vsub.f32 %v390, %v810
    %v812 = vand.u32 %v811, 4294901760
    %813 = vmatmul.f32.gmra.mxu0 %v812
    %v814 = vpop.f32.mrf.mxu0
    %v815 = vadd.f32 %v736, %v814
    %v816 = vand.u32 %v391, 4294901760
    %v817 = vsub.f32 %v391, %v816
    %v818 = vand.u32 %v817, 4294901760
    %819 = vmatmul.f32.gmra.mxu0 %v818
    %v820 = vpop.f32.mrf.mxu0
    %v821 = vadd.f32 %v741, %v820
    %v822 = vand.u32 %v392, 4294901760
    %v823 = vsub.f32 %v392, %v822
    %v824 = vand.u32 %v823, 4294901760
    %825 = vmatmul.f32.gmra.mxu0 %v824
    %v826 = vpop.f32.mrf.mxu0
    %v827 = vadd.f32 %v746, %v826
    %828 = vdwg.mxu0
    %v829 = vand.u32 %v271, 4294901760
    %v830 = vsub.f32 %v271, %v829
    %v831 = vand.u32 %v830, 4294901760
    %832 = vmatpush.msra.mxu0 %v831
    %v833 = vand.u32 %v269, 4294901760
    %v834 = vsub.f32 %v269, %v833
    %v835 = vand.u32 %v834, 4294901760
    %836 = vmatpush.msra.mxu0 %v835
    %v837 = vand.u32 %v267, 4294901760
    %v838 = vsub.f32 %v267, %v837
    %v839 = vand.u32 %v838, 4294901760
    %840 = vmatpush.msra.mxu0 %v839
    %v841 = vand.u32 %v265, 4294901760
    %v842 = vsub.f32 %v265, %v841
    %v843 = vand.u32 %v842, 4294901760
    %844 = vmatpush.msra.mxu0 %v843
    %v845 = vand.u32 %v263, 4294901760
    %v846 = vsub.f32 %v263, %v845
    %v847 = vand.u32 %v846, 4294901760
    %848 = vmatpush.msra.mxu0 %v847
    %v849 = vand.u32 %v261, 4294901760
    %v850 = vsub.f32 %v261, %v849
    %v851 = vand.u32 %v850, 4294901760
    %852 = vmatpush.msra.mxu0 %v851
    %v853 = vand.u32 %v259, 4294901760
    %v854 = vsub.f32 %v259, %v853
    %v855 = vand.u32 %v854, 4294901760
    %856 = vmatpush.msra.mxu0 %v855
    %v857 = vand.u32 %v257, 4294901760
    %v858 = vsub.f32 %v257, %v857
    %v859 = vand.u32 %v858, 4294901760
    %860 = vmatpush.msra.mxu0 %v859
    %v861 = vand.u32 %v255, 4294901760
    %v862 = vsub.f32 %v255, %v861
    %v863 = vand.u32 %v862, 4294901760
    %864 = vmatpush.msra.mxu0 %v863
    %v865 = vand.u32 %v253, 4294901760
    %v866 = vsub.f32 %v253, %v865
    %v867 = vand.u32 %v866, 4294901760
    %868 = vmatpush.msra.mxu0 %v867
    %v869 = vand.u32 %v251, 4294901760
    %v870 = vsub.f32 %v251, %v869
    %v871 = vand.u32 %v870, 4294901760
    %872 = vmatpush.msra.mxu0 %v871
    %v873 = vand.u32 %v249, 4294901760
    %v874 = vsub.f32 %v249, %v873
    %v875 = vand.u32 %v874, 4294901760
    %876 = vmatpush.msra.mxu0 %v875
    %v877 = vand.u32 %v247, 4294901760
    %v878 = vsub.f32 %v247, %v877
    %v879 = vand.u32 %v878, 4294901760
    %880 = vmatpush.msra.mxu0 %v879
    %v881 = vand.u32 %v245, 4294901760
    %v882 = vsub.f32 %v245, %v881
    %v883 = vand.u32 %v882, 4294901760
    %884 = vmatpush.msra.mxu0 %v883
    %v885 = vand.u32 %v243, 4294901760
    %v886 = vsub.f32 %v243, %v885
    %v887 = vand.u32 %v886, 4294901760
    %888 = vmatpush.msra.mxu0 %v887
    %v889 = vand.u32 %v241, 4294901760
    %v890 = vsub.f32 %v241, %v889
    %v891 = vand.u32 %v890, 4294901760
    %892 = vmatpush.msra.mxu0 %v891
    %v893 = vand.u32 %v385, 4294901760
    %894 = vmatmul.f32.gmra.mxu0 %v893
    %v895 = vpop.f32.mrf.mxu0
    %v896 = vadd.f32 %v785, %v895
    %v897 = vand.u32 %v386, 4294901760
    %898 = vmatmul.f32.gmra.mxu0 %v897
    %v899 = vpop.f32.mrf.mxu0
    %v900 = vadd.f32 %v791, %v899
    %v901 = vand.u32 %v387, 4294901760
    %902 = vmatmul.f32.gmra.mxu0 %v901
    %v903 = vpop.f32.mrf.mxu0
    %v904 = vadd.f32 %v797, %v903
    %v905 = vand.u32 %v388, 4294901760
    %906 = vmatmul.f32.gmra.mxu0 %v905
    %v907 = vpop.f32.mrf.mxu0
    %v908 = vadd.f32 %v803, %v907
    %v909 = vand.u32 %v389, 4294901760
    %910 = vmatmul.f32.gmra.mxu0 %v909
    %v911 = vpop.f32.mrf.mxu0
    %v912 = vadd.f32 %v809, %v911
    %v913 = vand.u32 %v390, 4294901760
    %914 = vmatmul.f32.gmra.mxu0 %v913
    %v915 = vpop.f32.mrf.mxu0
    %v916 = vadd.f32 %v815, %v915
    %v917 = vand.u32 %v391, 4294901760
    %918 = vmatmul.f32.gmra.mxu0 %v917
    %v919 = vpop.f32.mrf.mxu0
    %v920 = vadd.f32 %v821, %v919
    %v921 = vand.u32 %v392, 4294901760
    %922 = vmatmul.f32.gmra.mxu0 %v921
    %v923 = vpop.f32.mrf.mxu0
    %v924 = vadd.f32 %v827, %v923
    %925 = vdwg.mxu0
    %v926 = vand.u32 %v271, 4294901760
    %927 = vmatpush.msra.mxu0 %v926
    %v928 = vand.u32 %v269, 4294901760
    %929 = vmatpush.msra.mxu0 %v928
    %v930 = vand.u32 %v267, 4294901760
    %931 = vmatpush.msra.mxu0 %v930
    %v932 = vand.u32 %v265, 4294901760
    %933 = vmatpush.msra.mxu0 %v932
    %v934 = vand.u32 %v263, 4294901760
    %935 = vmatpush.msra.mxu0 %v934
    %v936 = vand.u32 %v261, 4294901760
    %937 = vmatpush.msra.mxu0 %v936
    %v938 = vand.u32 %v259, 4294901760
    %939 = vmatpush.msra.mxu0 %v938
    %v940 = vand.u32 %v257, 4294901760
    %941 = vmatpush.msra.mxu0 %v940
    %v942 = vand.u32 %v255, 4294901760
    %943 = vmatpush.msra.mxu0 %v942
    %v944 = vand.u32 %v253, 4294901760
    %945 = vmatpush.msra.mxu0 %v944
    %v946 = vand.u32 %v251, 4294901760
    %947 = vmatpush.msra.mxu0 %v946
    %v948 = vand.u32 %v249, 4294901760
    %949 = vmatpush.msra.mxu0 %v948
    %v950 = vand.u32 %v247, 4294901760
    %951 = vmatpush.msra.mxu0 %v950
    %v952 = vand.u32 %v245, 4294901760
    %953 = vmatpush.msra.mxu0 %v952
    %v954 = vand.u32 %v243, 4294901760
    %955 = vmatpush.msra.mxu0 %v954
    %v956 = vand.u32 %v241, 4294901760
    %957 = vmatpush.msra.mxu0 %v956
    %v958 = vand.u32 %v385, 4294901760
    %959 = vmatmul.f32.gmra.mxu0 %v958
    %v960 = vpop.f32.mrf.mxu0
    %v961 = vadd.f32 %v896, %v960
    %v962 = vand.u32 %v386, 4294901760
    %963 = vmatmul.f32.gmra.mxu0 %v962
    %v964 = vpop.f32.mrf.mxu0
    %v965 = vadd.f32 %v900, %v964
    %v966 = vand.u32 %v387, 4294901760
    %967 = vmatmul.f32.gmra.mxu0 %v966
    %v968 = vpop.f32.mrf.mxu0
    %v969 = vadd.f32 %v904, %v968
    %v970 = vand.u32 %v388, 4294901760
    %971 = vmatmul.f32.gmra.mxu0 %v970
    %v972 = vpop.f32.mrf.mxu0
    %v973 = vadd.f32 %v908, %v972
    %v974 = vand.u32 %v389, 4294901760
    %975 = vmatmul.f32.gmra.mxu0 %v974
    %v976 = vpop.f32.mrf.mxu0
    %v977 = vadd.f32 %v912, %v976
    %v978 = vand.u32 %v390, 4294901760
    %979 = vmatmul.f32.gmra.mxu0 %v978
    %v980 = vpop.f32.mrf.mxu0
    %v981 = vadd.f32 %v916, %v980
    %v982 = vand.u32 %v391, 4294901760
    %983 = vmatmul.f32.gmra.mxu0 %v982
    %v984 = vpop.f32.mrf.mxu0
    %v985 = vadd.f32 %v920, %v984
    %v986 = vand.u32 %v392, 4294901760
    %987 = vmatmul.f32.gmra.mxu0 %v986
    %v988 = vpop.f32.mrf.mxu0
    %v989 = vadd.f32 %v924, %v988
    %990 = vdwg.mxu0
    %v991 = vand.u32 %v303, 4294901760
    %992 = vmatpush.msra.mxu0 %v991
    %v993 = vand.u32 %v301, 4294901760
    %994 = vmatpush.msra.mxu0 %v993
    %v995 = vand.u32 %v299, 4294901760
    %996 = vmatpush.msra.mxu0 %v995
    %v997 = vand.u32 %v297, 4294901760
    %998 = vmatpush.msra.mxu0 %v997
    %v999 = vand.u32 %v295, 4294901760
    %1000 = vmatpush.msra.mxu0 %v999
    %v1001 = vand.u32 %v293, 4294901760
    %1002 = vmatpush.msra.mxu0 %v1001
    %v1003 = vand.u32 %v291, 4294901760
    %1004 = vmatpush.msra.mxu0 %v1003
    %v1005 = vand.u32 %v289, 4294901760
    %1006 = vmatpush.msra.mxu0 %v1005
    %v1007 = vand.u32 %v287, 4294901760
    %1008 = vmatpush.msra.mxu0 %v1007
    %v1009 = vand.u32 %v285, 4294901760
    %1010 = vmatpush.msra.mxu0 %v1009
    %v1011 = vand.u32 %v283, 4294901760
    %1012 = vmatpush.msra.mxu0 %v1011
    %v1013 = vand.u32 %v281, 4294901760
    %1014 = vmatpush.msra.mxu0 %v1013
    %v1015 = vand.u32 %v279, 4294901760
    %1016 = vmatpush.msra.mxu0 %v1015
    %v1017 = vand.u32 %v277, 4294901760
    %1018 = vmatpush.msra.mxu0 %v1017
    %v1019 = vand.u32 %v275, 4294901760
    %1020 = vmatpush.msra.mxu0 %v1019
    %v1021 = vand.u32 %v273, 4294901760
    %1022 = vmatpush.msra.mxu0 %v1021
    %v1023 = vand.u32 %v417, 4294901760
    %v1024 = vsub.f32 %v417, %v1023
    %v1025 = vand.u32 %v1024, 4294901760
    %v1026 = vsub.f32 %v1024, %v1025
    %v1027 = vand.u32 %v1026, 4294901760
    %1028 = vmatmul.f32.gmra.mxu0 %v1027
    %v1029 = vpop.f32.mrf.mxu0
    %v1030 = vadd.f32 %v961, %v1029
    %v1031 = vand.u32 %v418, 4294901760
    %v1032 = vsub.f32 %v418, %v1031
    %v1033 = vand.u32 %v1032, 4294901760
    %v1034 = vsub.f32 %v1032, %v1033
    %v1035 = vand.u32 %v1034, 4294901760
    %1036 = vmatmul.f32.gmra.mxu0 %v1035
    %v1037 = vpop.f32.mrf.mxu0
    %v1038 = vadd.f32 %v965, %v1037
    %v1039 = vand.u32 %v419, 4294901760
    %v1040 = vsub.f32 %v419, %v1039
    %v1041 = vand.u32 %v1040, 4294901760
    %v1042 = vsub.f32 %v1040, %v1041
    %v1043 = vand.u32 %v1042, 4294901760
    %1044 = vmatmul.f32.gmra.mxu0 %v1043
    %v1045 = vpop.f32.mrf.mxu0
    %v1046 = vadd.f32 %v969, %v1045
    %v1047 = vand.u32 %v420, 4294901760
    %v1048 = vsub.f32 %v420, %v1047
    %v1049 = vand.u32 %v1048, 4294901760
    %v1050 = vsub.f32 %v1048, %v1049
    %v1051 = vand.u32 %v1050, 4294901760
    %1052 = vmatmul.f32.gmra.mxu0 %v1051
    %v1053 = vpop.f32.mrf.mxu0
    %v1054 = vadd.f32 %v973, %v1053
    %v1055 = vand.u32 %v421, 4294901760
    %v1056 = vsub.f32 %v421, %v1055
    %v1057 = vand.u32 %v1056, 4294901760
    %v1058 = vsub.f32 %v1056, %v1057
    %v1059 = vand.u32 %v1058, 4294901760
    %1060 = vmatmul.f32.gmra.mxu0 %v1059
    %v1061 = vpop.f32.mrf.mxu0
    %v1062 = vadd.f32 %v977, %v1061
    %v1063 = vand.u32 %v422, 4294901760
    %v1064 = vsub.f32 %v422, %v1063
    %v1065 = vand.u32 %v1064, 4294901760
    %v1066 = vsub.f32 %v1064, %v1065
    %v1067 = vand.u32 %v1066, 4294901760
    %1068 = vmatmul.f32.gmra.mxu0 %v1067
    %v1069 = vpop.f32.mrf.mxu0
    %v1070 = vadd.f32 %v981, %v1069
    %v1071 = vand.u32 %v423, 4294901760
    %v1072 = vsub.f32 %v423, %v1071
    %v1073 = vand.u32 %v1072, 4294901760
    %v1074 = vsub.f32 %v1072, %v1073
    %v1075 = vand.u32 %v1074, 4294901760
    %1076 = vmatmul.f32.gmra.mxu0 %v1075
    %v1077 = vpop.f32.mrf.mxu0
    %v1078 = vadd.f32 %v985, %v1077
    %v1079 = vand.u32 %v424, 4294901760
    %v1080 = vsub.f32 %v424, %v1079
    %v1081 = vand.u32 %v1080, 4294901760
    %v1082 = vsub.f32 %v1080, %v1081
    %v1083 = vand.u32 %v1082, 4294901760
    %1084 = vmatmul.f32.gmra.mxu0 %v1083
    %v1085 = vpop.f32.mrf.mxu0
    %v1086 = vadd.f32 %v989, %v1085
    %1087 = vdwg.mxu0
    %v1088 = vand.u32 %v303, 4294901760
    %v1089 = vsub.f32 %v303, %v1088
    %v1090 = vand.u32 %v1089, 4294901760
    %v1091 = vsub.f32 %v1089, %v1090
    %v1092 = vand.u32 %v1091, 4294901760
    %1093 = vmatpush.msra.mxu0 %v1092
    %v1094 = vand.u32 %v301, 4294901760
    %v1095 = vsub.f32 %v301, %v1094
    %v1096 = vand.u32 %v1095, 4294901760
    %v1097 = vsub.f32 %v1095, %v1096
    %v1098 = vand.u32 %v1097, 4294901760
    %1099 = vmatpush.msra.mxu0 %v1098
    %v1100 = vand.u32 %v299, 4294901760
    %v1101 = vsub.f32 %v299, %v1100
    %v1102 = vand.u32 %v1101, 4294901760
    %v1103 = vsub.f32 %v1101, %v1102
    %v1104 = vand.u32 %v1103, 4294901760
    %1105 = vmatpush.msra.mxu0 %v1104
    %v1106 = vand.u32 %v297, 4294901760
    %v1107 = vsub.f32 %v297, %v1106
    %v1108 = vand.u32 %v1107, 4294901760
    %v1109 = vsub.f32 %v1107, %v1108
    %v1110 = vand.u32 %v1109, 4294901760
    %1111 = vmatpush.msra.mxu0 %v1110
    %v1112 = vand.u32 %v295, 4294901760
    %v1113 = vsub.f32 %v295, %v1112
    %v1114 = vand.u32 %v1113, 4294901760
    %v1115 = vsub.f32 %v1113, %v1114
    %v1116 = vand.u32 %v1115, 4294901760
    %1117 = vmatpush.msra.mxu0 %v1116
    %v1118 = vand.u32 %v293, 4294901760
    %v1119 = vsub.f32 %v293, %v1118
    %v1120 = vand.u32 %v1119, 4294901760
    %v1121 = vsub.f32 %v1119, %v1120
    %v1122 = vand.u32 %v1121, 4294901760
    %1123 = vmatpush.msra.mxu0 %v1122
    %v1124 = vand.u32 %v291, 4294901760
    %v1125 = vsub.f32 %v291, %v1124
    %v1126 = vand.u32 %v1125, 4294901760
    %v1127 = vsub.f32 %v1125, %v1126
    %v1128 = vand.u32 %v1127, 4294901760
    %1129 = vmatpush.msra.mxu0 %v1128
    %v1130 = vand.u32 %v289, 4294901760
    %v1131 = vsub.f32 %v289, %v1130
    %v1132 = vand.u32 %v1131, 4294901760
    %v1133 = vsub.f32 %v1131, %v1132
    %v1134 = vand.u32 %v1133, 4294901760
    %1135 = vmatpush.msra.mxu0 %v1134
    %v1136 = vand.u32 %v287, 4294901760
    %v1137 = vsub.f32 %v287, %v1136
    %v1138 = vand.u32 %v1137, 4294901760
    %v1139 = vsub.f32 %v1137, %v1138
    %v1140 = vand.u32 %v1139, 4294901760
    %1141 = vmatpush.msra.mxu0 %v1140
    %v1142 = vand.u32 %v285, 4294901760
    %v1143 = vsub.f32 %v285, %v1142
    %v1144 = vand.u32 %v1143, 4294901760
    %v1145 = vsub.f32 %v1143, %v1144
    %v1146 = vand.u32 %v1145, 4294901760
    %1147 = vmatpush.msra.mxu0 %v1146
    %v1148 = vand.u32 %v283, 4294901760
    %v1149 = vsub.f32 %v283, %v1148
    %v1150 = vand.u32 %v1149, 4294901760
    %v1151 = vsub.f32 %v1149, %v1150
    %v1152 = vand.u32 %v1151, 4294901760
    %1153 = vmatpush.msra.mxu0 %v1152
    %v1154 = vand.u32 %v281, 4294901760
    %v1155 = vsub.f32 %v281, %v1154
    %v1156 = vand.u32 %v1155, 4294901760
    %v1157 = vsub.f32 %v1155, %v1156
    %v1158 = vand.u32 %v1157, 4294901760
    %1159 = vmatpush.msra.mxu0 %v1158
    %v1160 = vand.u32 %v279, 4294901760
    %v1161 = vsub.f32 %v279, %v1160
    %v1162 = vand.u32 %v1161, 4294901760
    %v1163 = vsub.f32 %v1161, %v1162
    %v1164 = vand.u32 %v1163, 4294901760
    %1165 = vmatpush.msra.mxu0 %v1164
    %v1166 = vand.u32 %v277, 4294901760
    %v1167 = vsub.f32 %v277, %v1166
    %v1168 = vand.u32 %v1167, 4294901760
    %v1169 = vsub.f32 %v1167, %v1168
    %v1170 = vand.u32 %v1169, 4294901760
    %1171 = vmatpush.msra.mxu0 %v1170
    %v1172 = vand.u32 %v275, 4294901760
    %v1173 = vsub.f32 %v275, %v1172
    %v1174 = vand.u32 %v1173, 4294901760
    %v1175 = vsub.f32 %v1173, %v1174
    %v1176 = vand.u32 %v1175, 4294901760
    %1177 = vmatpush.msra.mxu0 %v1176
    %v1178 = vand.u32 %v273, 4294901760
    %v1179 = vsub.f32 %v273, %v1178
    %v1180 = vand.u32 %v1179, 4294901760
    %v1181 = vsub.f32 %v1179, %v1180
    %v1182 = vand.u32 %v1181, 4294901760
    %1183 = vmatpush.msra.mxu0 %v1182
    %v1184 = vand.u32 %v417, 4294901760
    %1185 = vmatmul.f32.gmra.mxu0 %v1184
    %v1186 = vpop.f32.mrf.mxu0
    %v1187 = vadd.f32 %v1030, %v1186
    %v1188 = vand.u32 %v418, 4294901760
    %1189 = vmatmul.f32.gmra.mxu0 %v1188
    %v1190 = vpop.f32.mrf.mxu0
    %v1191 = vadd.f32 %v1038, %v1190
    %v1192 = vand.u32 %v419, 4294901760
    %1193 = vmatmul.f32.gmra.mxu0 %v1192
    %v1194 = vpop.f32.mrf.mxu0
    %v1195 = vadd.f32 %v1046, %v1194
    %v1196 = vand.u32 %v420, 4294901760
    %1197 = vmatmul.f32.gmra.mxu0 %v1196
    %v1198 = vpop.f32.mrf.mxu0
    %v1199 = vadd.f32 %v1054, %v1198
    %v1200 = vand.u32 %v421, 4294901760
    %1201 = vmatmul.f32.gmra.mxu0 %v1200
    %v1202 = vpop.f32.mrf.mxu0
    %v1203 = vadd.f32 %v1062, %v1202
    %v1204 = vand.u32 %v422, 4294901760
    %1205 = vmatmul.f32.gmra.mxu0 %v1204
    %v1206 = vpop.f32.mrf.mxu0
    %v1207 = vadd.f32 %v1070, %v1206
    %v1208 = vand.u32 %v423, 4294901760
    %1209 = vmatmul.f32.gmra.mxu0 %v1208
    %v1210 = vpop.f32.mrf.mxu0
    %v1211 = vadd.f32 %v1078, %v1210
    %v1212 = vand.u32 %v424, 4294901760
    %1213 = vmatmul.f32.gmra.mxu0 %v1212
    %v1214 = vpop.f32.mrf.mxu0
    %v1215 = vadd.f32 %v1086, %v1214
    %1216 = vdwg.mxu0
    %v1217 = vand.u32 %v303, 4294901760
    %v1218 = vsub.f32 %v303, %v1217
    %1219 = vmatpush.msra.mxu0 %v1218
    %v1220 = vand.u32 %v301, 4294901760
    %v1221 = vsub.f32 %v301, %v1220
    %1222 = vmatpush.msra.mxu0 %v1221
    %v1223 = vand.u32 %v299, 4294901760
    %v1224 = vsub.f32 %v299, %v1223
    %1225 = vmatpush.msra.mxu0 %v1224
    %v1226 = vand.u32 %v297, 4294901760
    %v1227 = vsub.f32 %v297, %v1226
    %1228 = vmatpush.msra.mxu0 %v1227
    %v1229 = vand.u32 %v295, 4294901760
    %v1230 = vsub.f32 %v295, %v1229
    %1231 = vmatpush.msra.mxu0 %v1230
    %v1232 = vand.u32 %v293, 4294901760
    %v1233 = vsub.f32 %v293, %v1232
    %1234 = vmatpush.msra.mxu0 %v1233
    %v1235 = vand.u32 %v291, 4294901760
    %v1236 = vsub.f32 %v291, %v1235
    %1237 = vmatpush.msra.mxu0 %v1236
    %v1238 = vand.u32 %v289, 4294901760
    %v1239 = vsub.f32 %v289, %v1238
    %1240 = vmatpush.msra.mxu0 %v1239
    %v1241 = vand.u32 %v287, 4294901760
    %v1242 = vsub.f32 %v287, %v1241
    %1243 = vmatpush.msra.mxu0 %v1242
    %v1244 = vand.u32 %v285, 4294901760
    %v1245 = vsub.f32 %v285, %v1244
    %1246 = vmatpush.msra.mxu0 %v1245
    %v1247 = vand.u32 %v283, 4294901760
    %v1248 = vsub.f32 %v283, %v1247
    %1249 = vmatpush.msra.mxu0 %v1248
    %v1250 = vand.u32 %v281, 4294901760
    %v1251 = vsub.f32 %v281, %v1250
    %1252 = vmatpush.msra.mxu0 %v1251
    %v1253 = vand.u32 %v279, 4294901760
    %v1254 = vsub.f32 %v279, %v1253
    %1255 = vmatpush.msra.mxu0 %v1254
    %v1256 = vand.u32 %v277, 4294901760
    %v1257 = vsub.f32 %v277, %v1256
    %1258 = vmatpush.msra.mxu0 %v1257
    %v1259 = vand.u32 %v275, 4294901760
    %v1260 = vsub.f32 %v275, %v1259
    %1261 = vmatpush.msra.mxu0 %v1260
    %v1262 = vand.u32 %v273, 4294901760
    %v1263 = vsub.f32 %v273, %v1262
    %1264 = vmatpush.msra.mxu0 %v1263
    %v1265 = vand.u32 %v417, 4294901760
    %v1266 = vsub.f32 %v417, %v1265
    %1267 = vmatmul.f32.gmra.mxu0 %v1266
    %v1268 = vpop.f32.mrf.mxu0
    %v1269 = vadd.f32 %v1187, %v1268
    %v1270 = vand.u32 %v418, 4294901760
    %v1271 = vsub.f32 %v418, %v1270
    %1272 = vmatmul.f32.gmra.mxu0 %v1271
    %v1273 = vpop.f32.mrf.mxu0
    %v1274 = vadd.f32 %v1191, %v1273
    %v1275 = vand.u32 %v419, 4294901760
    %v1276 = vsub.f32 %v419, %v1275
    %1277 = vmatmul.f32.gmra.mxu0 %v1276
    %v1278 = vpop.f32.mrf.mxu0
    %v1279 = vadd.f32 %v1195, %v1278
    %v1280 = vand.u32 %v420, 4294901760
    %v1281 = vsub.f32 %v420, %v1280
    %1282 = vmatmul.f32.gmra.mxu0 %v1281
    %v1283 = vpop.f32.mrf.mxu0
    %v1284 = vadd.f32 %v1199, %v1283
    %v1285 = vand.u32 %v421, 4294901760
    %v1286 = vsub.f32 %v421, %v1285
    %1287 = vmatmul.f32.gmra.mxu0 %v1286
    %v1288 = vpop.f32.mrf.mxu0
    %v1289 = vadd.f32 %v1203, %v1288
    %v1290 = vand.u32 %v422, 4294901760
    %v1291 = vsub.f32 %v422, %v1290
    %1292 = vmatmul.f32.gmra.mxu0 %v1291
    %v1293 = vpop.f32.mrf.mxu0
    %v1294 = vadd.f32 %v1207, %v1293
    %v1295 = vand.u32 %v423, 4294901760
    %v1296 = vsub.f32 %v423, %v1295
    %1297 = vmatmul.f32.gmra.mxu0 %v1296
    %v1298 = vpop.f32.mrf.mxu0
    %v1299 = vadd.f32 %v1211, %v1298
    %v1300 = vand.u32 %v424, 4294901760
    %v1301 = vsub.f32 %v424, %v1300
    %1302 = vmatmul.f32.gmra.mxu0 %v1301
    %v1303 = vpop.f32.mrf.mxu0
    %v1304 = vadd.f32 %v1215, %v1303
    %1305 = vdwg.mxu0
    %v1306 = vand.u32 %v303, 4294901760
    %1307 = vmatpush.msra.mxu0 %v1306
    %v1308 = vand.u32 %v301, 4294901760
    %1309 = vmatpush.msra.mxu0 %v1308
    %v1310 = vand.u32 %v299, 4294901760
    %1311 = vmatpush.msra.mxu0 %v1310
    %v1312 = vand.u32 %v297, 4294901760
    %1313 = vmatpush.msra.mxu0 %v1312
    %v1314 = vand.u32 %v295, 4294901760
    %1315 = vmatpush.msra.mxu0 %v1314
    %v1316 = vand.u32 %v293, 4294901760
    %1317 = vmatpush.msra.mxu0 %v1316
    %v1318 = vand.u32 %v291, 4294901760
    %1319 = vmatpush.msra.mxu0 %v1318
    %v1320 = vand.u32 %v289, 4294901760
    %1321 = vmatpush.msra.mxu0 %v1320
    %v1322 = vand.u32 %v287, 4294901760
    %1323 = vmatpush.msra.mxu0 %v1322
    %v1324 = vand.u32 %v285, 4294901760
    %1325 = vmatpush.msra.mxu0 %v1324
    %v1326 = vand.u32 %v283, 4294901760
    %1327 = vmatpush.msra.mxu0 %v1326
    %v1328 = vand.u32 %v281, 4294901760
    %1329 = vmatpush.msra.mxu0 %v1328
    %v1330 = vand.u32 %v279, 4294901760
    %1331 = vmatpush.msra.mxu0 %v1330
    %v1332 = vand.u32 %v277, 4294901760
    %1333 = vmatpush.msra.mxu0 %v1332
    %v1334 = vand.u32 %v275, 4294901760
    %1335 = vmatpush.msra.mxu0 %v1334
    %v1336 = vand.u32 %v273, 4294901760
    %1337 = vmatpush.msra.mxu0 %v1336
    %v1338 = vand.u32 %v417, 4294901760
    %v1339 = vsub.f32 %v417, %v1338
    %v1340 = vand.u32 %v1339, 4294901760
    %1341 = vmatmul.f32.gmra.mxu0 %v1340
    %v1342 = vpop.f32.mrf.mxu0
    %v1343 = vadd.f32 %v1269, %v1342
    %v1344 = vand.u32 %v418, 4294901760
    %v1345 = vsub.f32 %v418, %v1344
    %v1346 = vand.u32 %v1345, 4294901760
    %1347 = vmatmul.f32.gmra.mxu0 %v1346
    %v1348 = vpop.f32.mrf.mxu0
    %v1349 = vadd.f32 %v1274, %v1348
    %v1350 = vand.u32 %v419, 4294901760
    %v1351 = vsub.f32 %v419, %v1350
    %v1352 = vand.u32 %v1351, 4294901760
    %1353 = vmatmul.f32.gmra.mxu0 %v1352
    %v1354 = vpop.f32.mrf.mxu0
    %v1355 = vadd.f32 %v1279, %v1354
    %v1356 = vand.u32 %v420, 4294901760
    %v1357 = vsub.f32 %v420, %v1356
    %v1358 = vand.u32 %v1357, 4294901760
    %1359 = vmatmul.f32.gmra.mxu0 %v1358
    %v1360 = vpop.f32.mrf.mxu0
    %v1361 = vadd.f32 %v1284, %v1360
    %v1362 = vand.u32 %v421, 4294901760
    %v1363 = vsub.f32 %v421, %v1362
    %v1364 = vand.u32 %v1363, 4294901760
    %1365 = vmatmul.f32.gmra.mxu0 %v1364
    %v1366 = vpop.f32.mrf.mxu0
    %v1367 = vadd.f32 %v1289, %v1366
    %v1368 = vand.u32 %v422, 4294901760
    %v1369 = vsub.f32 %v422, %v1368
    %v1370 = vand.u32 %v1369, 4294901760
    %1371 = vmatmul.f32.gmra.mxu0 %v1370
    %v1372 = vpop.f32.mrf.mxu0
    %v1373 = vadd.f32 %v1294, %v1372
    %v1374 = vand.u32 %v423, 4294901760
    %v1375 = vsub.f32 %v423, %v1374
    %v1376 = vand.u32 %v1375, 4294901760
    %1377 = vmatmul.f32.gmra.mxu0 %v1376
    %v1378 = vpop.f32.mrf.mxu0
    %v1379 = vadd.f32 %v1299, %v1378
    %v1380 = vand.u32 %v424, 4294901760
    %v1381 = vsub.f32 %v424, %v1380
    %v1382 = vand.u32 %v1381, 4294901760
    %1383 = vmatmul.f32.gmra.mxu0 %v1382
    %v1384 = vpop.f32.mrf.mxu0
    %v1385 = vadd.f32 %v1304, %v1384
    %1386 = vdwg.mxu0
    %v1387 = vand.u32 %v303, 4294901760
    %v1388 = vsub.f32 %v303, %v1387
    %v1389 = vand.u32 %v1388, 4294901760
    %1390 = vmatpush.msra.mxu0 %v1389
    %v1391 = vand.u32 %v301, 4294901760
    %v1392 = vsub.f32 %v301, %v1391
    %v1393 = vand.u32 %v1392, 4294901760
    %1394 = vmatpush.msra.mxu0 %v1393
    %v1395 = vand.u32 %v299, 4294901760
    %v1396 = vsub.f32 %v299, %v1395
    %v1397 = vand.u32 %v1396, 4294901760
    %1398 = vmatpush.msra.mxu0 %v1397
    %v1399 = vand.u32 %v297, 4294901760
    %v1400 = vsub.f32 %v297, %v1399
    %v1401 = vand.u32 %v1400, 4294901760
    %1402 = vmatpush.msra.mxu0 %v1401
    %v1403 = vand.u32 %v295, 4294901760
    %v1404 = vsub.f32 %v295, %v1403
    %v1405 = vand.u32 %v1404, 4294901760
    %1406 = vmatpush.msra.mxu0 %v1405
    %v1407 = vand.u32 %v293, 4294901760
    %v1408 = vsub.f32 %v293, %v1407
    %v1409 = vand.u32 %v1408, 4294901760
    %1410 = vmatpush.msra.mxu0 %v1409
    %v1411 = vand.u32 %v291, 4294901760
    %v1412 = vsub.f32 %v291, %v1411
    %v1413 = vand.u32 %v1412, 4294901760
    %1414 = vmatpush.msra.mxu0 %v1413
    %v1415 = vand.u32 %v289, 4294901760
    %v1416 = vsub.f32 %v289, %v1415
    %v1417 = vand.u32 %v1416, 4294901760
    %1418 = vmatpush.msra.mxu0 %v1417
    %v1419 = vand.u32 %v287, 4294901760
    %v1420 = vsub.f32 %v287, %v1419
    %v1421 = vand.u32 %v1420, 4294901760
    %1422 = vmatpush.msra.mxu0 %v1421
    %v1423 = vand.u32 %v285, 4294901760
    %v1424 = vsub.f32 %v285, %v1423
    %v1425 = vand.u32 %v1424, 4294901760
    %1426 = vmatpush.msra.mxu0 %v1425
    %v1427 = vand.u32 %v283, 4294901760
    %v1428 = vsub.f32 %v283, %v1427
    %v1429 = vand.u32 %v1428, 4294901760
    %1430 = vmatpush.msra.mxu0 %v1429
    %v1431 = vand.u32 %v281, 4294901760
    %v1432 = vsub.f32 %v281, %v1431
    %v1433 = vand.u32 %v1432, 4294901760
    %1434 = vmatpush.msra.mxu0 %v1433
    %v1435 = vand.u32 %v279, 4294901760
    %v1436 = vsub.f32 %v279, %v1435
    %v1437 = vand.u32 %v1436, 4294901760
    %1438 = vmatpush.msra.mxu0 %v1437
    %v1439 = vand.u32 %v277, 4294901760
    %v1440 = vsub.f32 %v277, %v1439
    %v1441 = vand.u32 %v1440, 4294901760
    %1442 = vmatpush.msra.mxu0 %v1441
    %v1443 = vand.u32 %v275, 4294901760
    %v1444 = vsub.f32 %v275, %v1443
    %v1445 = vand.u32 %v1444, 4294901760
    %1446 = vmatpush.msra.mxu0 %v1445
    %v1447 = vand.u32 %v273, 4294901760
    %v1448 = vsub.f32 %v273, %v1447
    %v1449 = vand.u32 %v1448, 4294901760
    %1450 = vmatpush.msra.mxu0 %v1449
    %v1451 = vand.u32 %v417, 4294901760
    %1452 = vmatmul.f32.gmra.mxu0 %v1451
    %v1453 = vpop.f32.mrf.mxu0
    %v1454 = vadd.f32 %v1343, %v1453
    %v1455 = vand.u32 %v418, 4294901760
    %1456 = vmatmul.f32.gmra.mxu0 %v1455
    %v1457 = vpop.f32.mrf.mxu0
    %v1458 = vadd.f32 %v1349, %v1457
    %v1459 = vand.u32 %v419, 4294901760
    %1460 = vmatmul.f32.gmra.mxu0 %v1459
    %v1461 = vpop.f32.mrf.mxu0
    %v1462 = vadd.f32 %v1355, %v1461
    %v1463 = vand.u32 %v420, 4294901760
    %1464 = vmatmul.f32.gmra.mxu0 %v1463
    %v1465 = vpop.f32.mrf.mxu0
    %v1466 = vadd.f32 %v1361, %v1465
    %v1467 = vand.u32 %v421, 4294901760
    %1468 = vmatmul.f32.gmra.mxu0 %v1467
    %v1469 = vpop.f32.mrf.mxu0
    %v1470 = vadd.f32 %v1367, %v1469
    %v1471 = vand.u32 %v422, 4294901760
    %1472 = vmatmul.f32.gmra.mxu0 %v1471
    %v1473 = vpop.f32.mrf.mxu0
    %v1474 = vadd.f32 %v1373, %v1473
    %v1475 = vand.u32 %v423, 4294901760
    %1476 = vmatmul.f32.gmra.mxu0 %v1475
    %v1477 = vpop.f32.mrf.mxu0
    %v1478 = vadd.f32 %v1379, %v1477
    %v1479 = vand.u32 %v424, 4294901760
    %1480 = vmatmul.f32.gmra.mxu0 %v1479
    %v1481 = vpop.f32.mrf.mxu0
    %v1482 = vadd.f32 %v1385, %v1481
    %1483 = vdwg.mxu0
    %v1484 = vand.u32 %v303, 4294901760
    %1485 = vmatpush.msra.mxu0 %v1484
    %v1486 = vand.u32 %v301, 4294901760
    %1487 = vmatpush.msra.mxu0 %v1486
    %v1488 = vand.u32 %v299, 4294901760
    %1489 = vmatpush.msra.mxu0 %v1488
    %v1490 = vand.u32 %v297, 4294901760
    %1491 = vmatpush.msra.mxu0 %v1490
    %v1492 = vand.u32 %v295, 4294901760
    %1493 = vmatpush.msra.mxu0 %v1492
    %v1494 = vand.u32 %v293, 4294901760
    %1495 = vmatpush.msra.mxu0 %v1494
    %v1496 = vand.u32 %v291, 4294901760
    %1497 = vmatpush.msra.mxu0 %v1496
    %v1498 = vand.u32 %v289, 4294901760
    %1499 = vmatpush.msra.mxu0 %v1498
    %v1500 = vand.u32 %v287, 4294901760
    %1501 = vmatpush.msra.mxu0 %v1500
    %v1502 = vand.u32 %v285, 4294901760
    %1503 = vmatpush.msra.mxu0 %v1502
    %v1504 = vand.u32 %v283, 4294901760
    %1505 = vmatpush.msra.mxu0 %v1504
    %v1506 = vand.u32 %v281, 4294901760
    %1507 = vmatpush.msra.mxu0 %v1506
    %v1508 = vand.u32 %v279, 4294901760
    %1509 = vmatpush.msra.mxu0 %v1508
    %v1510 = vand.u32 %v277, 4294901760
    %1511 = vmatpush.msra.mxu0 %v1510
    %v1512 = vand.u32 %v275, 4294901760
    %1513 = vmatpush.msra.mxu0 %v1512
    %v1514 = vand.u32 %v273, 4294901760
    %1515 = vmatpush.msra.mxu0 %v1514
    %v1516 = vand.u32 %v417, 4294901760
    %1517 = vmatmul.f32.gmra.mxu0 %v1516
    %v1518 = vpop.f32.mrf.mxu0
    %v1519 = vadd.f32 %v1454, %v1518
    %v1520 = vand.u32 %v418, 4294901760
    %1521 = vmatmul.f32.gmra.mxu0 %v1520
    %v1522 = vpop.f32.mrf.mxu0
    %v1523 = vadd.f32 %v1458, %v1522
    %v1524 = vand.u32 %v419, 4294901760
    %1525 = vmatmul.f32.gmra.mxu0 %v1524
    %v1526 = vpop.f32.mrf.mxu0
    %v1527 = vadd.f32 %v1462, %v1526
    %v1528 = vand.u32 %v420, 4294901760
    %1529 = vmatmul.f32.gmra.mxu0 %v1528
    %v1530 = vpop.f32.mrf.mxu0
    %v1531 = vadd.f32 %v1466, %v1530
    %v1532 = vand.u32 %v421, 4294901760
    %1533 = vmatmul.f32.gmra.mxu0 %v1532
    %v1534 = vpop.f32.mrf.mxu0
    %v1535 = vadd.f32 %v1470, %v1534
    %v1536 = vand.u32 %v422, 4294901760
    %1537 = vmatmul.f32.gmra.mxu0 %v1536
    %v1538 = vpop.f32.mrf.mxu0
    %v1539 = vadd.f32 %v1474, %v1538
    %v1540 = vand.u32 %v423, 4294901760
    %1541 = vmatmul.f32.gmra.mxu0 %v1540
    %v1542 = vpop.f32.mrf.mxu0
    %v1543 = vadd.f32 %v1478, %v1542
    %v1544 = vand.u32 %v424, 4294901760
    %1545 = vmatmul.f32.gmra.mxu0 %v1544
    %v1546 = vpop.f32.mrf.mxu0
    %v1547 = vadd.f32 %v1482, %v1546
    %1548 = vdwg.mxu0
    %v1549 = vand.u32 %v272, 4294901760
    %1550 = vmatpush.msra.mxu0 %v1549
    %v1551 = vand.u32 %v270, 4294901760
    %1552 = vmatpush.msra.mxu0 %v1551
    %v1553 = vand.u32 %v268, 4294901760
    %1554 = vmatpush.msra.mxu0 %v1553
    %v1555 = vand.u32 %v266, 4294901760
    %1556 = vmatpush.msra.mxu0 %v1555
    %v1557 = vand.u32 %v264, 4294901760
    %1558 = vmatpush.msra.mxu0 %v1557
    %v1559 = vand.u32 %v262, 4294901760
    %1560 = vmatpush.msra.mxu0 %v1559
    %v1561 = vand.u32 %v260, 4294901760
    %1562 = vmatpush.msra.mxu0 %v1561
    %v1563 = vand.u32 %v258, 4294901760
    %1564 = vmatpush.msra.mxu0 %v1563
    %v1565 = vand.u32 %v256, 4294901760
    %1566 = vmatpush.msra.mxu0 %v1565
    %v1567 = vand.u32 %v254, 4294901760
    %1568 = vmatpush.msra.mxu0 %v1567
    %v1569 = vand.u32 %v252, 4294901760
    %1570 = vmatpush.msra.mxu0 %v1569
    %v1571 = vand.u32 %v250, 4294901760
    %1572 = vmatpush.msra.mxu0 %v1571
    %v1573 = vand.u32 %v248, 4294901760
    %1574 = vmatpush.msra.mxu0 %v1573
    %v1575 = vand.u32 %v246, 4294901760
    %1576 = vmatpush.msra.mxu0 %v1575
    %v1577 = vand.u32 %v244, 4294901760
    %1578 = vmatpush.msra.mxu0 %v1577
    %v1579 = vand.u32 %v242, 4294901760
    %1580 = vmatpush.msra.mxu0 %v1579
    %v1581 = vand.u32 %v385, 4294901760
    %v1582 = vsub.f32 %v385, %v1581
    %v1583 = vand.u32 %v1582, 4294901760
    %v1584 = vsub.f32 %v1582, %v1583
    %v1585 = vand.u32 %v1584, 4294901760
    %1586 = vmatmul.f32.gmra.mxu0 %v1585
    %v1587 = vpop.f32.mrf.mxu0
    %v1588 = vadd.f32 0.0, %v1587
    %v1589 = vand.u32 %v386, 4294901760
    %v1590 = vsub.f32 %v386, %v1589
    %v1591 = vand.u32 %v1590, 4294901760
    %v1592 = vsub.f32 %v1590, %v1591
    %v1593 = vand.u32 %v1592, 4294901760
    %1594 = vmatmul.f32.gmra.mxu0 %v1593
    %v1595 = vpop.f32.mrf.mxu0
    %v1596 = vadd.f32 0.0, %v1595
    %v1597 = vand.u32 %v387, 4294901760
    %v1598 = vsub.f32 %v387, %v1597
    %v1599 = vand.u32 %v1598, 4294901760
    %v1600 = vsub.f32 %v1598, %v1599
    %v1601 = vand.u32 %v1600, 4294901760
    %1602 = vmatmul.f32.gmra.mxu0 %v1601
    %v1603 = vpop.f32.mrf.mxu0
    %v1604 = vadd.f32 0.0, %v1603
    %v1605 = vand.u32 %v388, 4294901760
    %v1606 = vsub.f32 %v388, %v1605
    %v1607 = vand.u32 %v1606, 4294901760
    %v1608 = vsub.f32 %v1606, %v1607
    %v1609 = vand.u32 %v1608, 4294901760
    %1610 = vmatmul.f32.gmra.mxu0 %v1609
    %v1611 = vpop.f32.mrf.mxu0
    %v1612 = vadd.f32 0.0, %v1611
    %v1613 = vand.u32 %v389, 4294901760
    %v1614 = vsub.f32 %v389, %v1613
    %v1615 = vand.u32 %v1614, 4294901760
    %v1616 = vsub.f32 %v1614, %v1615
    %v1617 = vand.u32 %v1616, 4294901760
    %1618 = vmatmul.f32.gmra.mxu0 %v1617
    %v1619 = vpop.f32.mrf.mxu0
    %v1620 = vadd.f32 0.0, %v1619
    %v1621 = vand.u32 %v390, 4294901760
    %v1622 = vsub.f32 %v390, %v1621
    %v1623 = vand.u32 %v1622, 4294901760
    %v1624 = vsub.f32 %v1622, %v1623
    %v1625 = vand.u32 %v1624, 4294901760
    %1626 = vmatmul.f32.gmra.mxu0 %v1625
    %v1627 = vpop.f32.mrf.mxu0
    %v1628 = vadd.f32 0.0, %v1627
    %v1629 = vand.u32 %v391, 4294901760
    %v1630 = vsub.f32 %v391, %v1629
    %v1631 = vand.u32 %v1630, 4294901760
    %v1632 = vsub.f32 %v1630, %v1631
    %v1633 = vand.u32 %v1632, 4294901760
    %1634 = vmatmul.f32.gmra.mxu0 %v1633
    %v1635 = vpop.f32.mrf.mxu0
    %v1636 = vadd.f32 0.0, %v1635
    %v1637 = vand.u32 %v392, 4294901760
    %v1638 = vsub.f32 %v392, %v1637
    %v1639 = vand.u32 %v1638, 4294901760
    %v1640 = vsub.f32 %v1638, %v1639
    %v1641 = vand.u32 %v1640, 4294901760
    %1642 = vmatmul.f32.gmra.mxu0 %v1641
    %v1643 = vpop.f32.mrf.mxu0
    %v1644 = vadd.f32 0.0, %v1643
    %1645 = vdwg.mxu0
    %v1646 = vand.u32 %v272, 4294901760
    %v1647 = vsub.f32 %v272, %v1646
    %v1648 = vand.u32 %v1647, 4294901760
    %v1649 = vsub.f32 %v1647, %v1648
    %v1650 = vand.u32 %v1649, 4294901760
    %1651 = vmatpush.msra.mxu0 %v1650
    %v1652 = vand.u32 %v270, 4294901760
    %v1653 = vsub.f32 %v270, %v1652
    %v1654 = vand.u32 %v1653, 4294901760
    %v1655 = vsub.f32 %v1653, %v1654
    %v1656 = vand.u32 %v1655, 4294901760
    %1657 = vmatpush.msra.mxu0 %v1656
    %v1658 = vand.u32 %v268, 4294901760
    %v1659 = vsub.f32 %v268, %v1658
    %v1660 = vand.u32 %v1659, 4294901760
    %v1661 = vsub.f32 %v1659, %v1660
    %v1662 = vand.u32 %v1661, 4294901760
    %1663 = vmatpush.msra.mxu0 %v1662
    %v1664 = vand.u32 %v266, 4294901760
    %v1665 = vsub.f32 %v266, %v1664
    %v1666 = vand.u32 %v1665, 4294901760
    %v1667 = vsub.f32 %v1665, %v1666
    %v1668 = vand.u32 %v1667, 4294901760
    %1669 = vmatpush.msra.mxu0 %v1668
    %v1670 = vand.u32 %v264, 4294901760
    %v1671 = vsub.f32 %v264, %v1670
    %v1672 = vand.u32 %v1671, 4294901760
    %v1673 = vsub.f32 %v1671, %v1672
    %v1674 = vand.u32 %v1673, 4294901760
    %1675 = vmatpush.msra.mxu0 %v1674
    %v1676 = vand.u32 %v262, 4294901760
    %v1677 = vsub.f32 %v262, %v1676
    %v1678 = vand.u32 %v1677, 4294901760
    %v1679 = vsub.f32 %v1677, %v1678
    %v1680 = vand.u32 %v1679, 4294901760
    %1681 = vmatpush.msra.mxu0 %v1680
    %v1682 = vand.u32 %v260, 4294901760
    %v1683 = vsub.f32 %v260, %v1682
    %v1684 = vand.u32 %v1683, 4294901760
    %v1685 = vsub.f32 %v1683, %v1684
    %v1686 = vand.u32 %v1685, 4294901760
    %1687 = vmatpush.msra.mxu0 %v1686
    %v1688 = vand.u32 %v258, 4294901760
    %v1689 = vsub.f32 %v258, %v1688
    %v1690 = vand.u32 %v1689, 4294901760
    %v1691 = vsub.f32 %v1689, %v1690
    %v1692 = vand.u32 %v1691, 4294901760
    %1693 = vmatpush.msra.mxu0 %v1692
    %v1694 = vand.u32 %v256, 4294901760
    %v1695 = vsub.f32 %v256, %v1694
    %v1696 = vand.u32 %v1695, 4294901760
    %v1697 = vsub.f32 %v1695, %v1696
    %v1698 = vand.u32 %v1697, 4294901760
    %1699 = vmatpush.msra.mxu0 %v1698
    %v1700 = vand.u32 %v254, 4294901760
    %v1701 = vsub.f32 %v254, %v1700
    %v1702 = vand.u32 %v1701, 4294901760
    %v1703 = vsub.f32 %v1701, %v1702
    %v1704 = vand.u32 %v1703, 4294901760
    %1705 = vmatpush.msra.mxu0 %v1704
    %v1706 = vand.u32 %v252, 4294901760
    %v1707 = vsub.f32 %v252, %v1706
    %v1708 = vand.u32 %v1707, 4294901760
    %v1709 = vsub.f32 %v1707, %v1708
    %v1710 = vand.u32 %v1709, 4294901760
    %1711 = vmatpush.msra.mxu0 %v1710
    %v1712 = vand.u32 %v250, 4294901760
    %v1713 = vsub.f32 %v250, %v1712
    %v1714 = vand.u32 %v1713, 4294901760
    %v1715 = vsub.f32 %v1713, %v1714
    %v1716 = vand.u32 %v1715, 4294901760
    %1717 = vmatpush.msra.mxu0 %v1716
    %v1718 = vand.u32 %v248, 4294901760
    %v1719 = vsub.f32 %v248, %v1718
    %v1720 = vand.u32 %v1719, 4294901760
    %v1721 = vsub.f32 %v1719, %v1720
    %v1722 = vand.u32 %v1721, 4294901760
    %1723 = vmatpush.msra.mxu0 %v1722
    %v1724 = vand.u32 %v246, 4294901760
    %v1725 = vsub.f32 %v246, %v1724
    %v1726 = vand.u32 %v1725, 4294901760
    %v1727 = vsub.f32 %v1725, %v1726
    %v1728 = vand.u32 %v1727, 4294901760
    %1729 = vmatpush.msra.mxu0 %v1728
    %v1730 = vand.u32 %v244, 4294901760
    %v1731 = vsub.f32 %v244, %v1730
    %v1732 = vand.u32 %v1731, 4294901760
    %v1733 = vsub.f32 %v1731, %v1732
    %v1734 = vand.u32 %v1733, 4294901760
    %1735 = vmatpush.msra.mxu0 %v1734
    %v1736 = vand.u32 %v242, 4294901760
    %v1737 = vsub.f32 %v242, %v1736
    %v1738 = vand.u32 %v1737, 4294901760
    %v1739 = vsub.f32 %v1737, %v1738
    %v1740 = vand.u32 %v1739, 4294901760
    %1741 = vmatpush.msra.mxu0 %v1740
    %v1742 = vand.u32 %v385, 4294901760
    %1743 = vmatmul.f32.gmra.mxu0 %v1742
    %v1744 = vpop.f32.mrf.mxu0
    %v1745 = vadd.f32 %v1588, %v1744
    %v1746 = vand.u32 %v386, 4294901760
    %1747 = vmatmul.f32.gmra.mxu0 %v1746
    %v1748 = vpop.f32.mrf.mxu0
    %v1749 = vadd.f32 %v1596, %v1748
    %v1750 = vand.u32 %v387, 4294901760
    %1751 = vmatmul.f32.gmra.mxu0 %v1750
    %v1752 = vpop.f32.mrf.mxu0
    %v1753 = vadd.f32 %v1604, %v1752
    %v1754 = vand.u32 %v388, 4294901760
    %1755 = vmatmul.f32.gmra.mxu0 %v1754
    %v1756 = vpop.f32.mrf.mxu0
    %v1757 = vadd.f32 %v1612, %v1756
    %v1758 = vand.u32 %v389, 4294901760
    %1759 = vmatmul.f32.gmra.mxu0 %v1758
    %v1760 = vpop.f32.mrf.mxu0
    %v1761 = vadd.f32 %v1620, %v1760
    %v1762 = vand.u32 %v390, 4294901760
    %1763 = vmatmul.f32.gmra.mxu0 %v1762
    %v1764 = vpop.f32.mrf.mxu0
    %v1765 = vadd.f32 %v1628, %v1764
    %v1766 = vand.u32 %v391, 4294901760
    %1767 = vmatmul.f32.gmra.mxu0 %v1766
    %v1768 = vpop.f32.mrf.mxu0
    %v1769 = vadd.f32 %v1636, %v1768
    %v1770 = vand.u32 %v392, 4294901760
    %1771 = vmatmul.f32.gmra.mxu0 %v1770
    %v1772 = vpop.f32.mrf.mxu0
    %v1773 = vadd.f32 %v1644, %v1772
    %1774 = vdwg.mxu0
    %v1775 = vand.u32 %v272, 4294901760
    %v1776 = vsub.f32 %v272, %v1775
    %1777 = vmatpush.msra.mxu0 %v1776
    %v1778 = vand.u32 %v270, 4294901760
    %v1779 = vsub.f32 %v270, %v1778
    %1780 = vmatpush.msra.mxu0 %v1779
    %v1781 = vand.u32 %v268, 4294901760
    %v1782 = vsub.f32 %v268, %v1781
    %1783 = vmatpush.msra.mxu0 %v1782
    %v1784 = vand.u32 %v266, 4294901760
    %v1785 = vsub.f32 %v266, %v1784
    %1786 = vmatpush.msra.mxu0 %v1785
    %v1787 = vand.u32 %v264, 4294901760
    %v1788 = vsub.f32 %v264, %v1787
    %1789 = vmatpush.msra.mxu0 %v1788
    %v1790 = vand.u32 %v262, 4294901760
    %v1791 = vsub.f32 %v262, %v1790
    %1792 = vmatpush.msra.mxu0 %v1791
    %v1793 = vand.u32 %v260, 4294901760
    %v1794 = vsub.f32 %v260, %v1793
    %1795 = vmatpush.msra.mxu0 %v1794
    %v1796 = vand.u32 %v258, 4294901760
    %v1797 = vsub.f32 %v258, %v1796
    %1798 = vmatpush.msra.mxu0 %v1797
    %v1799 = vand.u32 %v256, 4294901760
    %v1800 = vsub.f32 %v256, %v1799
    %1801 = vmatpush.msra.mxu0 %v1800
    %v1802 = vand.u32 %v254, 4294901760
    %v1803 = vsub.f32 %v254, %v1802
    %1804 = vmatpush.msra.mxu0 %v1803
    %v1805 = vand.u32 %v252, 4294901760
    %v1806 = vsub.f32 %v252, %v1805
    %1807 = vmatpush.msra.mxu0 %v1806
    %v1808 = vand.u32 %v250, 4294901760
    %v1809 = vsub.f32 %v250, %v1808
    %1810 = vmatpush.msra.mxu0 %v1809
    %v1811 = vand.u32 %v248, 4294901760
    %v1812 = vsub.f32 %v248, %v1811
    %1813 = vmatpush.msra.mxu0 %v1812
    %v1814 = vand.u32 %v246, 4294901760
    %v1815 = vsub.f32 %v246, %v1814
    %1816 = vmatpush.msra.mxu0 %v1815
    %v1817 = vand.u32 %v244, 4294901760
    %v1818 = vsub.f32 %v244, %v1817
    %1819 = vmatpush.msra.mxu0 %v1818
    %v1820 = vand.u32 %v242, 4294901760
    %v1821 = vsub.f32 %v242, %v1820
    %1822 = vmatpush.msra.mxu0 %v1821
    %v1823 = vand.u32 %v385, 4294901760
    %v1824 = vsub.f32 %v385, %v1823
    %1825 = vmatmul.f32.gmra.mxu0 %v1824
    %v1826 = vpop.f32.mrf.mxu0
    %v1827 = vadd.f32 %v1745, %v1826
    %v1828 = vand.u32 %v386, 4294901760
    %v1829 = vsub.f32 %v386, %v1828
    %1830 = vmatmul.f32.gmra.mxu0 %v1829
    %v1831 = vpop.f32.mrf.mxu0
    %v1832 = vadd.f32 %v1749, %v1831
    %v1833 = vand.u32 %v387, 4294901760
    %v1834 = vsub.f32 %v387, %v1833
    %1835 = vmatmul.f32.gmra.mxu0 %v1834
    %v1836 = vpop.f32.mrf.mxu0
    %v1837 = vadd.f32 %v1753, %v1836
    %v1838 = vand.u32 %v388, 4294901760
    %v1839 = vsub.f32 %v388, %v1838
    %1840 = vmatmul.f32.gmra.mxu0 %v1839
    %v1841 = vpop.f32.mrf.mxu0
    %v1842 = vadd.f32 %v1757, %v1841
    %v1843 = vand.u32 %v389, 4294901760
    %v1844 = vsub.f32 %v389, %v1843
    %1845 = vmatmul.f32.gmra.mxu0 %v1844
    %v1846 = vpop.f32.mrf.mxu0
    %v1847 = vadd.f32 %v1761, %v1846
    %v1848 = vand.u32 %v390, 4294901760
    %v1849 = vsub.f32 %v390, %v1848
    %1850 = vmatmul.f32.gmra.mxu0 %v1849
    %v1851 = vpop.f32.mrf.mxu0
    %v1852 = vadd.f32 %v1765, %v1851
    %v1853 = vand.u32 %v391, 4294901760
    %v1854 = vsub.f32 %v391, %v1853
    %1855 = vmatmul.f32.gmra.mxu0 %v1854
    %v1856 = vpop.f32.mrf.mxu0
    %v1857 = vadd.f32 %v1769, %v1856
    %v1858 = vand.u32 %v392, 4294901760
    %v1859 = vsub.f32 %v392, %v1858
    %1860 = vmatmul.f32.gmra.mxu0 %v1859
    %v1861 = vpop.f32.mrf.mxu0
    %v1862 = vadd.f32 %v1773, %v1861
    %1863 = vdwg.mxu0
    %v1864 = vand.u32 %v272, 4294901760
    %1865 = vmatpush.msra.mxu0 %v1864
    %v1866 = vand.u32 %v270, 4294901760
    %1867 = vmatpush.msra.mxu0 %v1866
    %v1868 = vand.u32 %v268, 4294901760
    %1869 = vmatpush.msra.mxu0 %v1868
    %v1870 = vand.u32 %v266, 4294901760
    %1871 = vmatpush.msra.mxu0 %v1870
    %v1872 = vand.u32 %v264, 4294901760
    %1873 = vmatpush.msra.mxu0 %v1872
    %v1874 = vand.u32 %v262, 4294901760
    %1875 = vmatpush.msra.mxu0 %v1874
    %v1876 = vand.u32 %v260, 4294901760
    %1877 = vmatpush.msra.mxu0 %v1876
    %v1878 = vand.u32 %v258, 4294901760
    %1879 = vmatpush.msra.mxu0 %v1878
    %v1880 = vand.u32 %v256, 4294901760
    %1881 = vmatpush.msra.mxu0 %v1880
    %v1882 = vand.u32 %v254, 4294901760
    %1883 = vmatpush.msra.mxu0 %v1882
    %v1884 = vand.u32 %v252, 4294901760
    %1885 = vmatpush.msra.mxu0 %v1884
    %v1886 = vand.u32 %v250, 4294901760
    %1887 = vmatpush.msra.mxu0 %v1886
    %v1888 = vand.u32 %v248, 4294901760
    %1889 = vmatpush.msra.mxu0 %v1888
    %v1890 = vand.u32 %v246, 4294901760
    %1891 = vmatpush.msra.mxu0 %v1890
    %v1892 = vand.u32 %v244, 4294901760
    %1893 = vmatpush.msra.mxu0 %v1892
    %v1894 = vand.u32 %v242, 4294901760
    %1895 = vmatpush.msra.mxu0 %v1894
    %v1896 = vand.u32 %v385, 4294901760
    %v1897 = vsub.f32 %v385, %v1896
    %v1898 = vand.u32 %v1897, 4294901760
    %1899 = vmatmul.f32.gmra.mxu0 %v1898
    %v1900 = vpop.f32.mrf.mxu0
    %v1901 = vadd.f32 %v1827, %v1900
    %v1902 = vand.u32 %v386, 4294901760
    %v1903 = vsub.f32 %v386, %v1902
    %v1904 = vand.u32 %v1903, 4294901760
    %1905 = vmatmul.f32.gmra.mxu0 %v1904
    %v1906 = vpop.f32.mrf.mxu0
    %v1907 = vadd.f32 %v1832, %v1906
    %v1908 = vand.u32 %v387, 4294901760
    %v1909 = vsub.f32 %v387, %v1908
    %v1910 = vand.u32 %v1909, 4294901760
    %1911 = vmatmul.f32.gmra.mxu0 %v1910
    %v1912 = vpop.f32.mrf.mxu0
    %v1913 = vadd.f32 %v1837, %v1912
    %v1914 = vand.u32 %v388, 4294901760
    %v1915 = vsub.f32 %v388, %v1914
    %v1916 = vand.u32 %v1915, 4294901760
    %1917 = vmatmul.f32.gmra.mxu0 %v1916
    %v1918 = vpop.f32.mrf.mxu0
    %v1919 = vadd.f32 %v1842, %v1918
    %v1920 = vand.u32 %v389, 4294901760
    %v1921 = vsub.f32 %v389, %v1920
    %v1922 = vand.u32 %v1921, 4294901760
    %1923 = vmatmul.f32.gmra.mxu0 %v1922
    %v1924 = vpop.f32.mrf.mxu0
    %v1925 = vadd.f32 %v1847, %v1924
    %v1926 = vand.u32 %v390, 4294901760
    %v1927 = vsub.f32 %v390, %v1926
    %v1928 = vand.u32 %v1927, 4294901760
    %1929 = vmatmul.f32.gmra.mxu0 %v1928
    %v1930 = vpop.f32.mrf.mxu0
    %v1931 = vadd.f32 %v1852, %v1930
    %v1932 = vand.u32 %v391, 4294901760
    %v1933 = vsub.f32 %v391, %v1932
    %v1934 = vand.u32 %v1933, 4294901760
    %1935 = vmatmul.f32.gmra.mxu0 %v1934
    %v1936 = vpop.f32.mrf.mxu0
    %v1937 = vadd.f32 %v1857, %v1936
    %v1938 = vand.u32 %v392, 4294901760
    %v1939 = vsub.f32 %v392, %v1938
    %v1940 = vand.u32 %v1939, 4294901760
    %1941 = vmatmul.f32.gmra.mxu0 %v1940
    %v1942 = vpop.f32.mrf.mxu0
    %v1943 = vadd.f32 %v1862, %v1942
    %1944 = vdwg.mxu0
    %v1945 = vand.u32 %v272, 4294901760
    %v1946 = vsub.f32 %v272, %v1945
    %v1947 = vand.u32 %v1946, 4294901760
    %1948 = vmatpush.msra.mxu0 %v1947
    %v1949 = vand.u32 %v270, 4294901760
    %v1950 = vsub.f32 %v270, %v1949
    %v1951 = vand.u32 %v1950, 4294901760
    %1952 = vmatpush.msra.mxu0 %v1951
    %v1953 = vand.u32 %v268, 4294901760
    %v1954 = vsub.f32 %v268, %v1953
    %v1955 = vand.u32 %v1954, 4294901760
    %1956 = vmatpush.msra.mxu0 %v1955
    %v1957 = vand.u32 %v266, 4294901760
    %v1958 = vsub.f32 %v266, %v1957
    %v1959 = vand.u32 %v1958, 4294901760
    %1960 = vmatpush.msra.mxu0 %v1959
    %v1961 = vand.u32 %v264, 4294901760
    %v1962 = vsub.f32 %v264, %v1961
    %v1963 = vand.u32 %v1962, 4294901760
    %1964 = vmatpush.msra.mxu0 %v1963
    %v1965 = vand.u32 %v262, 4294901760
    %v1966 = vsub.f32 %v262, %v1965
    %v1967 = vand.u32 %v1966, 4294901760
    %1968 = vmatpush.msra.mxu0 %v1967
    %v1969 = vand.u32 %v260, 4294901760
    %v1970 = vsub.f32 %v260, %v1969
    %v1971 = vand.u32 %v1970, 4294901760
    %1972 = vmatpush.msra.mxu0 %v1971
    %v1973 = vand.u32 %v258, 4294901760
    %v1974 = vsub.f32 %v258, %v1973
    %v1975 = vand.u32 %v1974, 4294901760
    %1976 = vmatpush.msra.mxu0 %v1975
    %v1977 = vand.u32 %v256, 4294901760
    %v1978 = vsub.f32 %v256, %v1977
    %v1979 = vand.u32 %v1978, 4294901760
    %1980 = vmatpush.msra.mxu0 %v1979
    %v1981 = vand.u32 %v254, 4294901760
    %v1982 = vsub.f32 %v254, %v1981
    %v1983 = vand.u32 %v1982, 4294901760
    %1984 = vmatpush.msra.mxu0 %v1983
    %v1985 = vand.u32 %v252, 4294901760
    %v1986 = vsub.f32 %v252, %v1985
    %v1987 = vand.u32 %v1986, 4294901760
    %1988 = vmatpush.msra.mxu0 %v1987
    %v1989 = vand.u32 %v250, 4294901760
    %v1990 = vsub.f32 %v250, %v1989
    %v1991 = vand.u32 %v1990, 4294901760
    %1992 = vmatpush.msra.mxu0 %v1991
    %v1993 = vand.u32 %v248, 4294901760
    %v1994 = vsub.f32 %v248, %v1993
    %v1995 = vand.u32 %v1994, 4294901760
    %1996 = vmatpush.msra.mxu0 %v1995
    %v1997 = vand.u32 %v246, 4294901760
    %v1998 = vsub.f32 %v246, %v1997
    %v1999 = vand.u32 %v1998, 4294901760
    %2000 = vmatpush.msra.mxu0 %v1999
    %v2001 = vand.u32 %v244, 4294901760
    %v2002 = vsub.f32 %v244, %v2001
    %v2003 = vand.u32 %v2002, 4294901760
    %2004 = vmatpush.msra.mxu0 %v2003
    %v2005 = vand.u32 %v242, 4294901760
    %v2006 = vsub.f32 %v242, %v2005
    %v2007 = vand.u32 %v2006, 4294901760
    %2008 = vmatpush.msra.mxu0 %v2007
    %v2009 = vand.u32 %v385, 4294901760
    %2010 = vmatmul.f32.gmra.mxu0 %v2009
    %v2011 = vpop.f32.mrf.mxu0
    %v2012 = vadd.f32 %v1901, %v2011
    %v2013 = vand.u32 %v386, 4294901760
    %2014 = vmatmul.f32.gmra.mxu0 %v2013
    %v2015 = vpop.f32.mrf.mxu0
    %v2016 = vadd.f32 %v1907, %v2015
    %v2017 = vand.u32 %v387, 4294901760
    %2018 = vmatmul.f32.gmra.mxu0 %v2017
    %v2019 = vpop.f32.mrf.mxu0
    %v2020 = vadd.f32 %v1913, %v2019
    %v2021 = vand.u32 %v388, 4294901760
    %2022 = vmatmul.f32.gmra.mxu0 %v2021
    %v2023 = vpop.f32.mrf.mxu0
    %v2024 = vadd.f32 %v1919, %v2023
    %v2025 = vand.u32 %v389, 4294901760
    %2026 = vmatmul.f32.gmra.mxu0 %v2025
    %v2027 = vpop.f32.mrf.mxu0
    %v2028 = vadd.f32 %v1925, %v2027
    %v2029 = vand.u32 %v390, 4294901760
    %2030 = vmatmul.f32.gmra.mxu0 %v2029
    %v2031 = vpop.f32.mrf.mxu0
    %v2032 = vadd.f32 %v1931, %v2031
    %v2033 = vand.u32 %v391, 4294901760
    %2034 = vmatmul.f32.gmra.mxu0 %v2033
    %v2035 = vpop.f32.mrf.mxu0
    %v2036 = vadd.f32 %v1937, %v2035
    %v2037 = vand.u32 %v392, 4294901760
    %2038 = vmatmul.f32.gmra.mxu0 %v2037
    %v2039 = vpop.f32.mrf.mxu0
    %v2040 = vadd.f32 %v1943, %v2039
    %2041 = vdwg.mxu0
    %v2042 = vand.u32 %v272, 4294901760
    %2043 = vmatpush.msra.mxu0 %v2042
    %v2044 = vand.u32 %v270, 4294901760
    %2045 = vmatpush.msra.mxu0 %v2044
    %v2046 = vand.u32 %v268, 4294901760
    %2047 = vmatpush.msra.mxu0 %v2046
    %v2048 = vand.u32 %v266, 4294901760
    %2049 = vmatpush.msra.mxu0 %v2048
    %v2050 = vand.u32 %v264, 4294901760
    %2051 = vmatpush.msra.mxu0 %v2050
    %v2052 = vand.u32 %v262, 4294901760
    %2053 = vmatpush.msra.mxu0 %v2052
    %v2054 = vand.u32 %v260, 4294901760
    %2055 = vmatpush.msra.mxu0 %v2054
    %v2056 = vand.u32 %v258, 4294901760
    %2057 = vmatpush.msra.mxu0 %v2056
    %v2058 = vand.u32 %v256, 4294901760
    %2059 = vmatpush.msra.mxu0 %v2058
    %v2060 = vand.u32 %v254, 4294901760
    %2061 = vmatpush.msra.mxu0 %v2060
    %v2062 = vand.u32 %v252, 4294901760
    %2063 = vmatpush.msra.mxu0 %v2062
    %v2064 = vand.u32 %v250, 4294901760
    %2065 = vmatpush.msra.mxu0 %v2064
    %v2066 = vand.u32 %v248, 4294901760
    %2067 = vmatpush.msra.mxu0 %v2066
    %v2068 = vand.u32 %v246, 4294901760
    %2069 = vmatpush.msra.mxu0 %v2068
    %v2070 = vand.u32 %v244, 4294901760
    %2071 = vmatpush.msra.mxu0 %v2070
    %v2072 = vand.u32 %v242, 4294901760
    %2073 = vmatpush.msra.mxu0 %v2072
    %v2074 = vand.u32 %v385, 4294901760
    %2075 = vmatmul.f32.gmra.mxu0 %v2074
    %v2076 = vpop.f32.mrf.mxu0
    %v2077 = vadd.f32 %v2012, %v2076
    %v2078 = vand.u32 %v386, 4294901760
    %2079 = vmatmul.f32.gmra.mxu0 %v2078
    %v2080 = vpop.f32.mrf.mxu0
    %v2081 = vadd.f32 %v2016, %v2080
    %v2082 = vand.u32 %v387, 4294901760
    %2083 = vmatmul.f32.gmra.mxu0 %v2082
    %v2084 = vpop.f32.mrf.mxu0
    %v2085 = vadd.f32 %v2020, %v2084
    %v2086 = vand.u32 %v388, 4294901760
    %2087 = vmatmul.f32.gmra.mxu0 %v2086
    %v2088 = vpop.f32.mrf.mxu0
    %v2089 = vadd.f32 %v2024, %v2088
    %v2090 = vand.u32 %v389, 4294901760
    %2091 = vmatmul.f32.gmra.mxu0 %v2090
    %v2092 = vpop.f32.mrf.mxu0
    %v2093 = vadd.f32 %v2028, %v2092
    %v2094 = vand.u32 %v390, 4294901760
    %2095 = vmatmul.f32.gmra.mxu0 %v2094
    %v2096 = vpop.f32.mrf.mxu0
    %v2097 = vadd.f32 %v2032, %v2096
    %v2098 = vand.u32 %v391, 4294901760
    %2099 = vmatmul.f32.gmra.mxu0 %v2098
    %v2100 = vpop.f32.mrf.mxu0
    %v2101 = vadd.f32 %v2036, %v2100
    %v2102 = vand.u32 %v392, 4294901760
    %2103 = vmatmul.f32.gmra.mxu0 %v2102
    %v2104 = vpop.f32.mrf.mxu0
    %v2105 = vadd.f32 %v2040, %v2104
    %2106 = vdwg.mxu0
    %v2107 = vand.u32 %v304, 4294901760
    %2108 = vmatpush.msra.mxu0 %v2107
    %v2109 = vand.u32 %v302, 4294901760
    %2110 = vmatpush.msra.mxu0 %v2109
    %v2111 = vand.u32 %v300, 4294901760
    %2112 = vmatpush.msra.mxu0 %v2111
    %v2113 = vand.u32 %v298, 4294901760
    %2114 = vmatpush.msra.mxu0 %v2113
    %v2115 = vand.u32 %v296, 4294901760
    %2116 = vmatpush.msra.mxu0 %v2115
    %v2117 = vand.u32 %v294, 4294901760
    %2118 = vmatpush.msra.mxu0 %v2117
    %v2119 = vand.u32 %v292, 4294901760
    %2120 = vmatpush.msra.mxu0 %v2119
    %v2121 = vand.u32 %v290, 4294901760
    %2122 = vmatpush.msra.mxu0 %v2121
    %v2123 = vand.u32 %v288, 4294901760
    %2124 = vmatpush.msra.mxu0 %v2123
    %v2125 = vand.u32 %v286, 4294901760
    %2126 = vmatpush.msra.mxu0 %v2125
    %v2127 = vand.u32 %v284, 4294901760
    %2128 = vmatpush.msra.mxu0 %v2127
    %v2129 = vand.u32 %v282, 4294901760
    %2130 = vmatpush.msra.mxu0 %v2129
    %v2131 = vand.u32 %v280, 4294901760
    %2132 = vmatpush.msra.mxu0 %v2131
    %v2133 = vand.u32 %v278, 4294901760
    %2134 = vmatpush.msra.mxu0 %v2133
    %v2135 = vand.u32 %v276, 4294901760
    %2136 = vmatpush.msra.mxu0 %v2135
    %v2137 = vand.u32 %v274, 4294901760
    %2138 = vmatpush.msra.mxu0 %v2137
    %v2139 = vand.u32 %v417, 4294901760
    %v2140 = vsub.f32 %v417, %v2139
    %v2141 = vand.u32 %v2140, 4294901760
    %v2142 = vsub.f32 %v2140, %v2141
    %v2143 = vand.u32 %v2142, 4294901760
    %2144 = vmatmul.f32.gmra.mxu0 %v2143
    %v2145 = vpop.f32.mrf.mxu0
    %v2146 = vadd.f32 %v2077, %v2145
    %v2147 = vand.u32 %v418, 4294901760
    %v2148 = vsub.f32 %v418, %v2147
    %v2149 = vand.u32 %v2148, 4294901760
    %v2150 = vsub.f32 %v2148, %v2149
    %v2151 = vand.u32 %v2150, 4294901760
    %2152 = vmatmul.f32.gmra.mxu0 %v2151
    %v2153 = vpop.f32.mrf.mxu0
    %v2154 = vadd.f32 %v2081, %v2153
    %v2155 = vand.u32 %v419, 4294901760
    %v2156 = vsub.f32 %v419, %v2155
    %v2157 = vand.u32 %v2156, 4294901760
    %v2158 = vsub.f32 %v2156, %v2157
    %v2159 = vand.u32 %v2158, 4294901760
    %2160 = vmatmul.f32.gmra.mxu0 %v2159
    %v2161 = vpop.f32.mrf.mxu0
    %v2162 = vadd.f32 %v2085, %v2161
    %v2163 = vand.u32 %v420, 4294901760
    %v2164 = vsub.f32 %v420, %v2163
    %v2165 = vand.u32 %v2164, 4294901760
    %v2166 = vsub.f32 %v2164, %v2165
    %v2167 = vand.u32 %v2166, 4294901760
    %2168 = vmatmul.f32.gmra.mxu0 %v2167
    %v2169 = vpop.f32.mrf.mxu0
    %v2170 = vadd.f32 %v2089, %v2169
    %v2171 = vand.u32 %v421, 4294901760
    %v2172 = vsub.f32 %v421, %v2171
    %v2173 = vand.u32 %v2172, 4294901760
    %v2174 = vsub.f32 %v2172, %v2173
    %v2175 = vand.u32 %v2174, 4294901760
    %2176 = vmatmul.f32.gmra.mxu0 %v2175
    %v2177 = vpop.f32.mrf.mxu0
    %v2178 = vadd.f32 %v2093, %v2177
    %v2179 = vand.u32 %v422, 4294901760
    %v2180 = vsub.f32 %v422, %v2179
    %v2181 = vand.u32 %v2180, 4294901760
    %v2182 = vsub.f32 %v2180, %v2181
    %v2183 = vand.u32 %v2182, 4294901760
    %2184 = vmatmul.f32.gmra.mxu0 %v2183
    %v2185 = vpop.f32.mrf.mxu0
    %v2186 = vadd.f32 %v2097, %v2185
    %v2187 = vand.u32 %v423, 4294901760
    %v2188 = vsub.f32 %v423, %v2187
    %v2189 = vand.u32 %v2188, 4294901760
    %v2190 = vsub.f32 %v2188, %v2189
    %v2191 = vand.u32 %v2190, 4294901760
    %2192 = vmatmul.f32.gmra.mxu0 %v2191
    %v2193 = vpop.f32.mrf.mxu0
    %v2194 = vadd.f32 %v2101, %v2193
    %v2195 = vand.u32 %v424, 4294901760
    %v2196 = vsub.f32 %v424, %v2195
    %v2197 = vand.u32 %v2196, 4294901760
    %v2198 = vsub.f32 %v2196, %v2197
    %v2199 = vand.u32 %v2198, 4294901760
    %2200 = vmatmul.f32.gmra.mxu0 %v2199
    %v2201 = vpop.f32.mrf.mxu0
    %v2202 = vadd.f32 %v2105, %v2201
    %2203 = vdwg.mxu0
    %v2204 = vand.u32 %v304, 4294901760
    %v2205 = vsub.f32 %v304, %v2204
    %v2206 = vand.u32 %v2205, 4294901760
    %v2207 = vsub.f32 %v2205, %v2206
    %v2208 = vand.u32 %v2207, 4294901760
    %2209 = vmatpush.msra.mxu0 %v2208
    %v2210 = vand.u32 %v302, 4294901760
    %v2211 = vsub.f32 %v302, %v2210
    %v2212 = vand.u32 %v2211, 4294901760
    %v2213 = vsub.f32 %v2211, %v2212
    %v2214 = vand.u32 %v2213, 4294901760
    %2215 = vmatpush.msra.mxu0 %v2214
    %v2216 = vand.u32 %v300, 4294901760
    %v2217 = vsub.f32 %v300, %v2216
    %v2218 = vand.u32 %v2217, 4294901760
    %v2219 = vsub.f32 %v2217, %v2218
    %v2220 = vand.u32 %v2219, 4294901760
    %2221 = vmatpush.msra.mxu0 %v2220
    %v2222 = vand.u32 %v298, 4294901760
    %v2223 = vsub.f32 %v298, %v2222
    %v2224 = vand.u32 %v2223, 4294901760
    %v2225 = vsub.f32 %v2223, %v2224
    %v2226 = vand.u32 %v2225, 4294901760
    %2227 = vmatpush.msra.mxu0 %v2226
    %v2228 = vand.u32 %v296, 4294901760
    %v2229 = vsub.f32 %v296, %v2228
    %v2230 = vand.u32 %v2229, 4294901760
    %v2231 = vsub.f32 %v2229, %v2230
    %v2232 = vand.u32 %v2231, 4294901760
    %2233 = vmatpush.msra.mxu0 %v2232
    %v2234 = vand.u32 %v294, 4294901760
    %v2235 = vsub.f32 %v294, %v2234
    %v2236 = vand.u32 %v2235, 4294901760
    %v2237 = vsub.f32 %v2235, %v2236
    %v2238 = vand.u32 %v2237, 4294901760
    %2239 = vmatpush.msra.mxu0 %v2238
    %v2240 = vand.u32 %v292, 4294901760
    %v2241 = vsub.f32 %v292, %v2240
    %v2242 = vand.u32 %v2241, 4294901760
    %v2243 = vsub.f32 %v2241, %v2242
    %v2244 = vand.u32 %v2243, 4294901760
    %2245 = vmatpush.msra.mxu0 %v2244
    %v2246 = vand.u32 %v290, 4294901760
    %v2247 = vsub.f32 %v290, %v2246
    %v2248 = vand.u32 %v2247, 4294901760
    %v2249 = vsub.f32 %v2247, %v2248
    %v2250 = vand.u32 %v2249, 4294901760
    %2251 = vmatpush.msra.mxu0 %v2250
    %v2252 = vand.u32 %v288, 4294901760
    %v2253 = vsub.f32 %v288, %v2252
    %v2254 = vand.u32 %v2253, 4294901760
    %v2255 = vsub.f32 %v2253, %v2254
    %v2256 = vand.u32 %v2255, 4294901760
    %2257 = vmatpush.msra.mxu0 %v2256
    %v2258 = vand.u32 %v286, 4294901760
    %v2259 = vsub.f32 %v286, %v2258
    %v2260 = vand.u32 %v2259, 4294901760
    %v2261 = vsub.f32 %v2259, %v2260
    %v2262 = vand.u32 %v2261, 4294901760
    %2263 = vmatpush.msra.mxu0 %v2262
    %v2264 = vand.u32 %v284, 4294901760
    %v2265 = vsub.f32 %v284, %v2264
    %v2266 = vand.u32 %v2265, 4294901760
    %v2267 = vsub.f32 %v2265, %v2266
    %v2268 = vand.u32 %v2267, 4294901760
    %2269 = vmatpush.msra.mxu0 %v2268
    %v2270 = vand.u32 %v282, 4294901760
    %v2271 = vsub.f32 %v282, %v2270
    %v2272 = vand.u32 %v2271, 4294901760
    %v2273 = vsub.f32 %v2271, %v2272
    %v2274 = vand.u32 %v2273, 4294901760
    %2275 = vmatpush.msra.mxu0 %v2274
    %v2276 = vand.u32 %v280, 4294901760
    %v2277 = vsub.f32 %v280, %v2276
    %v2278 = vand.u32 %v2277, 4294901760
    %v2279 = vsub.f32 %v2277, %v2278
    %v2280 = vand.u32 %v2279, 4294901760
    %2281 = vmatpush.msra.mxu0 %v2280
    %v2282 = vand.u32 %v278, 4294901760
    %v2283 = vsub.f32 %v278, %v2282
    %v2284 = vand.u32 %v2283, 4294901760
    %v2285 = vsub.f32 %v2283, %v2284
    %v2286 = vand.u32 %v2285, 4294901760
    %2287 = vmatpush.msra.mxu0 %v2286
    %v2288 = vand.u32 %v276, 4294901760
    %v2289 = vsub.f32 %v276, %v2288
    %v2290 = vand.u32 %v2289, 4294901760
    %v2291 = vsub.f32 %v2289, %v2290
    %v2292 = vand.u32 %v2291, 4294901760
    %2293 = vmatpush.msra.mxu0 %v2292
    %v2294 = vand.u32 %v274, 4294901760
    %v2295 = vsub.f32 %v274, %v2294
    %v2296 = vand.u32 %v2295, 4294901760
    %v2297 = vsub.f32 %v2295, %v2296
    %v2298 = vand.u32 %v2297, 4294901760
    %2299 = vmatpush.msra.mxu0 %v2298
    %v2300 = vand.u32 %v417, 4294901760
    %2301 = vmatmul.f32.gmra.mxu0 %v2300
    %v2302 = vpop.f32.mrf.mxu0
    %v2303 = vadd.f32 %v2146, %v2302
    %v2304 = vand.u32 %v418, 4294901760
    %2305 = vmatmul.f32.gmra.mxu0 %v2304
    %v2306 = vpop.f32.mrf.mxu0
    %v2307 = vadd.f32 %v2154, %v2306
    %v2308 = vand.u32 %v419, 4294901760
    %2309 = vmatmul.f32.gmra.mxu0 %v2308
    %v2310 = vpop.f32.mrf.mxu0
    %v2311 = vadd.f32 %v2162, %v2310
    %v2312 = vand.u32 %v420, 4294901760
    %2313 = vmatmul.f32.gmra.mxu0 %v2312
    %v2314 = vpop.f32.mrf.mxu0
    %v2315 = vadd.f32 %v2170, %v2314
    %v2316 = vand.u32 %v421, 4294901760
    %2317 = vmatmul.f32.gmra.mxu0 %v2316
    %v2318 = vpop.f32.mrf.mxu0
    %v2319 = vadd.f32 %v2178, %v2318
    %v2320 = vand.u32 %v422, 4294901760
    %2321 = vmatmul.f32.gmra.mxu0 %v2320
    %v2322 = vpop.f32.mrf.mxu0
    %v2323 = vadd.f32 %v2186, %v2322
    %v2324 = vand.u32 %v423, 4294901760
    %2325 = vmatmul.f32.gmra.mxu0 %v2324
    %v2326 = vpop.f32.mrf.mxu0
    %v2327 = vadd.f32 %v2194, %v2326
    %v2328 = vand.u32 %v424, 4294901760
    %2329 = vmatmul.f32.gmra.mxu0 %v2328
    %v2330 = vpop.f32.mrf.mxu0
    %v2331 = vadd.f32 %v2202, %v2330
    %2332 = vdwg.mxu0
    %v2333 = vand.u32 %v304, 4294901760
    %v2334 = vsub.f32 %v304, %v2333
    %2335 = vmatpush.msra.mxu0 %v2334
    %v2336 = vand.u32 %v302, 4294901760
    %v2337 = vsub.f32 %v302, %v2336
    %2338 = vmatpush.msra.mxu0 %v2337
    %v2339 = vand.u32 %v300, 4294901760
    %v2340 = vsub.f32 %v300, %v2339
    %2341 = vmatpush.msra.mxu0 %v2340
    %v2342 = vand.u32 %v298, 4294901760
    %v2343 = vsub.f32 %v298, %v2342
    %2344 = vmatpush.msra.mxu0 %v2343
    %v2345 = vand.u32 %v296, 4294901760
    %v2346 = vsub.f32 %v296, %v2345
    %2347 = vmatpush.msra.mxu0 %v2346
    %v2348 = vand.u32 %v294, 4294901760
    %v2349 = vsub.f32 %v294, %v2348
    %2350 = vmatpush.msra.mxu0 %v2349
    %v2351 = vand.u32 %v292, 4294901760
    %v2352 = vsub.f32 %v292, %v2351
    %2353 = vmatpush.msra.mxu0 %v2352
    %v2354 = vand.u32 %v290, 4294901760
    %v2355 = vsub.f32 %v290, %v2354
    %2356 = vmatpush.msra.mxu0 %v2355
    %v2357 = vand.u32 %v288, 4294901760
    %v2358 = vsub.f32 %v288, %v2357
    %2359 = vmatpush.msra.mxu0 %v2358
    %v2360 = vand.u32 %v286, 4294901760
    %v2361 = vsub.f32 %v286, %v2360
    %2362 = vmatpush.msra.mxu0 %v2361
    %v2363 = vand.u32 %v284, 4294901760
    %v2364 = vsub.f32 %v284, %v2363
    %2365 = vmatpush.msra.mxu0 %v2364
    %v2366 = vand.u32 %v282, 4294901760
    %v2367 = vsub.f32 %v282, %v2366
    %2368 = vmatpush.msra.mxu0 %v2367
    %v2369 = vand.u32 %v280, 4294901760
    %v2370 = vsub.f32 %v280, %v2369
    %2371 = vmatpush.msra.mxu0 %v2370
    %v2372 = vand.u32 %v278, 4294901760
    %v2373 = vsub.f32 %v278, %v2372
    %2374 = vmatpush.msra.mxu0 %v2373
    %v2375 = vand.u32 %v276, 4294901760
    %v2376 = vsub.f32 %v276, %v2375
    %2377 = vmatpush.msra.mxu0 %v2376
    %v2378 = vand.u32 %v274, 4294901760
    %v2379 = vsub.f32 %v274, %v2378
    %2380 = vmatpush.msra.mxu0 %v2379
    %v2381 = vand.u32 %v417, 4294901760
    %v2382 = vsub.f32 %v417, %v2381
    %2383 = vmatmul.f32.gmra.mxu0 %v2382
    %v2384 = vpop.f32.mrf.mxu0
    %v2385 = vadd.f32 %v2303, %v2384
    %v2386 = vand.u32 %v418, 4294901760
    %v2387 = vsub.f32 %v418, %v2386
    %2388 = vmatmul.f32.gmra.mxu0 %v2387
    %v2389 = vpop.f32.mrf.mxu0
    %v2390 = vadd.f32 %v2307, %v2389
    %v2391 = vand.u32 %v419, 4294901760
    %v2392 = vsub.f32 %v419, %v2391
    %2393 = vmatmul.f32.gmra.mxu0 %v2392
    %v2394 = vpop.f32.mrf.mxu0
    %v2395 = vadd.f32 %v2311, %v2394
    %v2396 = vand.u32 %v420, 4294901760
    %v2397 = vsub.f32 %v420, %v2396
    %2398 = vmatmul.f32.gmra.mxu0 %v2397
    %v2399 = vpop.f32.mrf.mxu0
    %v2400 = vadd.f32 %v2315, %v2399
    %v2401 = vand.u32 %v421, 4294901760
    %v2402 = vsub.f32 %v421, %v2401
    %2403 = vmatmul.f32.gmra.mxu0 %v2402
    %v2404 = vpop.f32.mrf.mxu0
    %v2405 = vadd.f32 %v2319, %v2404
    %v2406 = vand.u32 %v422, 4294901760
    %v2407 = vsub.f32 %v422, %v2406
    %2408 = vmatmul.f32.gmra.mxu0 %v2407
    %v2409 = vpop.f32.mrf.mxu0
    %v2410 = vadd.f32 %v2323, %v2409
    %v2411 = vand.u32 %v423, 4294901760
    %v2412 = vsub.f32 %v423, %v2411
    %2413 = vmatmul.f32.gmra.mxu0 %v2412
    %v2414 = vpop.f32.mrf.mxu0
    %v2415 = vadd.f32 %v2327, %v2414
    %v2416 = vand.u32 %v424, 4294901760
    %v2417 = vsub.f32 %v424, %v2416
    %2418 = vmatmul.f32.gmra.mxu0 %v2417
    %v2419 = vpop.f32.mrf.mxu0
    %v2420 = vadd.f32 %v2331, %v2419
    %2421 = vdwg.mxu0
    %v2422 = vand.u32 %v304, 4294901760
    %2423 = vmatpush.msra.mxu0 %v2422
    %v2424 = vand.u32 %v302, 4294901760
    %2425 = vmatpush.msra.mxu0 %v2424
    %v2426 = vand.u32 %v300, 4294901760
    %2427 = vmatpush.msra.mxu0 %v2426
    %v2428 = vand.u32 %v298, 4294901760
    %2429 = vmatpush.msra.mxu0 %v2428
    %v2430 = vand.u32 %v296, 4294901760
    %2431 = vmatpush.msra.mxu0 %v2430
    %v2432 = vand.u32 %v294, 4294901760
    %2433 = vmatpush.msra.mxu0 %v2432
    %v2434 = vand.u32 %v292, 4294901760
    %2435 = vmatpush.msra.mxu0 %v2434
    %v2436 = vand.u32 %v290, 4294901760
    %2437 = vmatpush.msra.mxu0 %v2436
    %v2438 = vand.u32 %v288, 4294901760
    %2439 = vmatpush.msra.mxu0 %v2438
    %v2440 = vand.u32 %v286, 4294901760
    %2441 = vmatpush.msra.mxu0 %v2440
    %v2442 = vand.u32 %v284, 4294901760
    %2443 = vmatpush.msra.mxu0 %v2442
    %v2444 = vand.u32 %v282, 4294901760
    %2445 = vmatpush.msra.mxu0 %v2444
    %v2446 = vand.u32 %v280, 4294901760
    %2447 = vmatpush.msra.mxu0 %v2446
    %v2448 = vand.u32 %v278, 4294901760
    %2449 = vmatpush.msra.mxu0 %v2448
    %v2450 = vand.u32 %v276, 4294901760
    %2451 = vmatpush.msra.mxu0 %v2450
    %v2452 = vand.u32 %v274, 4294901760
    %2453 = vmatpush.msra.mxu0 %v2452
    %v2454 = vand.u32 %v417, 4294901760
    %v2455 = vsub.f32 %v417, %v2454
    %v2456 = vand.u32 %v2455, 4294901760
    %2457 = vmatmul.f32.gmra.mxu0 %v2456
    %v2458 = vpop.f32.mrf.mxu0
    %v2459 = vadd.f32 %v2385, %v2458
    %v2460 = vand.u32 %v418, 4294901760
    %v2461 = vsub.f32 %v418, %v2460
    %v2462 = vand.u32 %v2461, 4294901760
    %2463 = vmatmul.f32.gmra.mxu0 %v2462
    %v2464 = vpop.f32.mrf.mxu0
    %v2465 = vadd.f32 %v2390, %v2464
    %v2466 = vand.u32 %v419, 4294901760
    %v2467 = vsub.f32 %v419, %v2466
    %v2468 = vand.u32 %v2467, 4294901760
    %2469 = vmatmul.f32.gmra.mxu0 %v2468
    %v2470 = vpop.f32.mrf.mxu0
    %v2471 = vadd.f32 %v2395, %v2470
    %v2472 = vand.u32 %v420, 4294901760
    %v2473 = vsub.f32 %v420, %v2472
    %v2474 = vand.u32 %v2473, 4294901760
    %2475 = vmatmul.f32.gmra.mxu0 %v2474
    %v2476 = vpop.f32.mrf.mxu0
    %v2477 = vadd.f32 %v2400, %v2476
    %v2478 = vand.u32 %v421, 4294901760
    %v2479 = vsub.f32 %v421, %v2478
    %v2480 = vand.u32 %v2479, 4294901760
    %2481 = vmatmul.f32.gmra.mxu0 %v2480
    %v2482 = vpop.f32.mrf.mxu0
    %v2483 = vadd.f32 %v2405, %v2482
    %v2484 = vand.u32 %v422, 4294901760
    %v2485 = vsub.f32 %v422, %v2484
    %v2486 = vand.u32 %v2485, 4294901760
    %2487 = vmatmul.f32.gmra.mxu0 %v2486
    %v2488 = vpop.f32.mrf.mxu0
    %v2489 = vadd.f32 %v2410, %v2488
    %v2490 = vand.u32 %v423, 4294901760
    %v2491 = vsub.f32 %v423, %v2490
    %v2492 = vand.u32 %v2491, 4294901760
    %2493 = vmatmul.f32.gmra.mxu0 %v2492
    %v2494 = vpop.f32.mrf.mxu0
    %v2495 = vadd.f32 %v2415, %v2494
    %v2496 = vand.u32 %v424, 4294901760
    %v2497 = vsub.f32 %v424, %v2496
    %v2498 = vand.u32 %v2497, 4294901760
    %2499 = vmatmul.f32.gmra.mxu0 %v2498
    %v2500 = vpop.f32.mrf.mxu0
    %v2501 = vadd.f32 %v2420, %v2500
    %2502 = vdwg.mxu0
    %v2503 = vand.u32 %v304, 4294901760
    %v2504 = vsub.f32 %v304, %v2503
    %v2505 = vand.u32 %v2504, 4294901760
    %2506 = vmatpush.msra.mxu0 %v2505
    %v2507 = vand.u32 %v302, 4294901760
    %v2508 = vsub.f32 %v302, %v2507
    %v2509 = vand.u32 %v2508, 4294901760
    %2510 = vmatpush.msra.mxu0 %v2509
    %v2511 = vand.u32 %v300, 4294901760
    %v2512 = vsub.f32 %v300, %v2511
    %v2513 = vand.u32 %v2512, 4294901760
    %2514 = vmatpush.msra.mxu0 %v2513
    %v2515 = vand.u32 %v298, 4294901760
    %v2516 = vsub.f32 %v298, %v2515
    %v2517 = vand.u32 %v2516, 4294901760
    %2518 = vmatpush.msra.mxu0 %v2517
    %v2519 = vand.u32 %v296, 4294901760
    %v2520 = vsub.f32 %v296, %v2519
    %v2521 = vand.u32 %v2520, 4294901760
    %2522 = vmatpush.msra.mxu0 %v2521
    %v2523 = vand.u32 %v294, 4294901760
    %v2524 = vsub.f32 %v294, %v2523
    %v2525 = vand.u32 %v2524, 4294901760
    %2526 = vmatpush.msra.mxu0 %v2525
    %v2527 = vand.u32 %v292, 4294901760
    %v2528 = vsub.f32 %v292, %v2527
    %v2529 = vand.u32 %v2528, 4294901760
    %2530 = vmatpush.msra.mxu0 %v2529
    %v2531 = vand.u32 %v290, 4294901760
    %v2532 = vsub.f32 %v290, %v2531
    %v2533 = vand.u32 %v2532, 4294901760
    %2534 = vmatpush.msra.mxu0 %v2533
    %v2535 = vand.u32 %v288, 4294901760
    %v2536 = vsub.f32 %v288, %v2535
    %v2537 = vand.u32 %v2536, 4294901760
    %2538 = vmatpush.msra.mxu0 %v2537
    %v2539 = vand.u32 %v286, 4294901760
    %v2540 = vsub.f32 %v286, %v2539
    %v2541 = vand.u32 %v2540, 4294901760
    %2542 = vmatpush.msra.mxu0 %v2541
    %v2543 = vand.u32 %v284, 4294901760
    %v2544 = vsub.f32 %v284, %v2543
    %v2545 = vand.u32 %v2544, 4294901760
    %2546 = vmatpush.msra.mxu0 %v2545
    %v2547 = vand.u32 %v282, 4294901760
    %v2548 = vsub.f32 %v282, %v2547
    %v2549 = vand.u32 %v2548, 4294901760
    %2550 = vmatpush.msra.mxu0 %v2549
    %v2551 = vand.u32 %v280, 4294901760
    %v2552 = vsub.f32 %v280, %v2551
    %v2553 = vand.u32 %v2552, 4294901760
    %2554 = vmatpush.msra.mxu0 %v2553
    %v2555 = vand.u32 %v278, 4294901760
    %v2556 = vsub.f32 %v278, %v2555
    %v2557 = vand.u32 %v2556, 4294901760
    %2558 = vmatpush.msra.mxu0 %v2557
    %v2559 = vand.u32 %v276, 4294901760
    %v2560 = vsub.f32 %v276, %v2559
    %v2561 = vand.u32 %v2560, 4294901760
    %2562 = vmatpush.msra.mxu0 %v2561
    %v2563 = vand.u32 %v274, 4294901760
    %v2564 = vsub.f32 %v274, %v2563
    %v2565 = vand.u32 %v2564, 4294901760
    %2566 = vmatpush.msra.mxu0 %v2565
    %v2567 = vand.u32 %v417, 4294901760
    %2568 = vmatmul.f32.gmra.mxu0 %v2567
    %v2569 = vpop.f32.mrf.mxu0
    %v2570 = vadd.f32 %v2459, %v2569
    %v2571 = vand.u32 %v418, 4294901760
    %2572 = vmatmul.f32.gmra.mxu0 %v2571
    %v2573 = vpop.f32.mrf.mxu0
    %v2574 = vadd.f32 %v2465, %v2573
    %v2575 = vand.u32 %v419, 4294901760
    %2576 = vmatmul.f32.gmra.mxu0 %v2575
    %v2577 = vpop.f32.mrf.mxu0
    %v2578 = vadd.f32 %v2471, %v2577
    %v2579 = vand.u32 %v420, 4294901760
    %2580 = vmatmul.f32.gmra.mxu0 %v2579
    %v2581 = vpop.f32.mrf.mxu0
    %v2582 = vadd.f32 %v2477, %v2581
    %v2583 = vand.u32 %v421, 4294901760
    %2584 = vmatmul.f32.gmra.mxu0 %v2583
    %v2585 = vpop.f32.mrf.mxu0
    %v2586 = vadd.f32 %v2483, %v2585
    %v2587 = vand.u32 %v422, 4294901760
    %2588 = vmatmul.f32.gmra.mxu0 %v2587
    %v2589 = vpop.f32.mrf.mxu0
    %v2590 = vadd.f32 %v2489, %v2589
    %v2591 = vand.u32 %v423, 4294901760
    %2592 = vmatmul.f32.gmra.mxu0 %v2591
    %v2593 = vpop.f32.mrf.mxu0
    %v2594 = vadd.f32 %v2495, %v2593
    %v2595 = vand.u32 %v424, 4294901760
    %2596 = vmatmul.f32.gmra.mxu0 %v2595
    %v2597 = vpop.f32.mrf.mxu0
    %v2598 = vadd.f32 %v2501, %v2597
    %2599 = vdwg.mxu0
    %v2600 = vand.u32 %v304, 4294901760
    %2601 = vmatpush.msra.mxu0 %v2600
    %v2602 = vand.u32 %v302, 4294901760
    %2603 = vmatpush.msra.mxu0 %v2602
    %v2604 = vand.u32 %v300, 4294901760
    %2605 = vmatpush.msra.mxu0 %v2604
    %v2606 = vand.u32 %v298, 4294901760
    %2607 = vmatpush.msra.mxu0 %v2606
    %v2608 = vand.u32 %v296, 4294901760
    %2609 = vmatpush.msra.mxu0 %v2608
    %v2610 = vand.u32 %v294, 4294901760
    %2611 = vmatpush.msra.mxu0 %v2610
    %v2612 = vand.u32 %v292, 4294901760
    %2613 = vmatpush.msra.mxu0 %v2612
    %v2614 = vand.u32 %v290, 4294901760
    %2615 = vmatpush.msra.mxu0 %v2614
    %v2616 = vand.u32 %v288, 4294901760
    %2617 = vmatpush.msra.mxu0 %v2616
    %v2618 = vand.u32 %v286, 4294901760
    %2619 = vmatpush.msra.mxu0 %v2618
    %v2620 = vand.u32 %v284, 4294901760
    %2621 = vmatpush.msra.mxu0 %v2620
    %v2622 = vand.u32 %v282, 4294901760
    %2623 = vmatpush.msra.mxu0 %v2622
    %v2624 = vand.u32 %v280, 4294901760
    %2625 = vmatpush.msra.mxu0 %v2624
    %v2626 = vand.u32 %v278, 4294901760
    %2627 = vmatpush.msra.mxu0 %v2626
    %v2628 = vand.u32 %v276, 4294901760
    %2629 = vmatpush.msra.mxu0 %v2628
    %v2630 = vand.u32 %v274, 4294901760
    %2631 = vmatpush.msra.mxu0 %v2630
    %v2632 = vand.u32 %v417, 4294901760
    %2633 = vmatmul.f32.gmra.mxu0 %v2632
    %v2634 = vpop.f32.mrf.mxu0
    %v2635 = vadd.f32 %v2570, %v2634
    %v2636 = vand.u32 %v418, 4294901760
    %2637 = vmatmul.f32.gmra.mxu0 %v2636
    %v2638 = vpop.f32.mrf.mxu0
    %v2639 = vadd.f32 %v2574, %v2638
    %v2640 = vand.u32 %v419, 4294901760
    %2641 = vmatmul.f32.gmra.mxu0 %v2640
    %v2642 = vpop.f32.mrf.mxu0
    %v2643 = vadd.f32 %v2578, %v2642
    %v2644 = vand.u32 %v420, 4294901760
    %2645 = vmatmul.f32.gmra.mxu0 %v2644
    %v2646 = vpop.f32.mrf.mxu0
    %v2647 = vadd.f32 %v2582, %v2646
    %v2648 = vand.u32 %v421, 4294901760
    %2649 = vmatmul.f32.gmra.mxu0 %v2648
    %v2650 = vpop.f32.mrf.mxu0
    %v2651 = vadd.f32 %v2586, %v2650
    %v2652 = vand.u32 %v422, 4294901760
    %2653 = vmatmul.f32.gmra.mxu0 %v2652
    %v2654 = vpop.f32.mrf.mxu0
    %v2655 = vadd.f32 %v2590, %v2654
    %v2656 = vand.u32 %v423, 4294901760
    %2657 = vmatmul.f32.gmra.mxu0 %v2656
    %v2658 = vpop.f32.mrf.mxu0
    %v2659 = vadd.f32 %v2594, %v2658
    %v2660 = vand.u32 %v424, 4294901760
    %2661 = vmatmul.f32.gmra.mxu0 %v2660
    %v2662 = vpop.f32.mrf.mxu0
    %v2663 = vadd.f32 %v2598, %v2662
    %2664 = vdwg.mxu0
    %2665 = vxpose.xlu0.b32.start [1/16] %v209, 128
    %2666 = vxpose.xlu0.b32.cont [2/16] %v210, 128
    %2667 = vxpose.xlu0.b32.cont [3/16] %v211, 128
    %2668 = vxpose.xlu0.b32.cont [4/16] %v212, 128
    %2669 = vxpose.xlu0.b32.cont [5/16] %v213, 128
    %2670 = vxpose.xlu0.b32.cont [6/16] %v214, 128
    %2671 = vxpose.xlu0.b32.cont [7/16] %v215, 128
    %2672 = vxpose.xlu0.b32.cont [8/16] %v216, 128
    %2673 = vxpose.xlu0.b32.cont [9/16] %v217, 128
    %2674 = vxpose.xlu0.b32.cont [10/16] %v218, 128
    %2675 = vxpose.xlu0.b32.cont [11/16] %v219, 128
    %2676 = vxpose.xlu0.b32.cont [12/16] %v220, 128
    %2677 = vxpose.xlu0.b32.cont [13/16] %v221, 128
    %2678 = vxpose.xlu0.b32.cont [14/16] %v222, 128
    %2679 = vxpose.xlu0.b32.cont [15/16] %v223, 128
    %2680 = vxpose.xlu0.b32.end [16/16] %v224, 128
    %v2681 = vpop.trf.xlu0
    %v2682 = vpop.trf.xlu0
    %v2683 = vpop.trf.xlu0
    %v2684 = vpop.trf.xlu0
    %v2685 = vpop.trf.xlu0
    %v2686 = vpop.trf.xlu0
    %v2687 = vpop.trf.xlu0
    %v2688 = vpop.trf.xlu0
    %v2689 = vpop.trf.xlu0
    %v2690 = vpop.trf.xlu0
    %v2691 = vpop.trf.xlu0
    %v2692 = vpop.trf.xlu0
    %v2693 = vpop.trf.xlu0
    %v2694 = vpop.trf.xlu0
    %v2695 = vpop.trf.xlu0
    %v2696 = vpop.trf.xlu0
    %2697 = vxpose.xlu0.b32.start [1/16] %v225, 128
    %2698 = vxpose.xlu0.b32.cont [2/16] %v226, 128
    %2699 = vxpose.xlu0.b32.cont [3/16] %v227, 128
    %2700 = vxpose.xlu0.b32.cont [4/16] %v228, 128
    %2701 = vxpose.xlu0.b32.cont [5/16] %v229, 128
    %2702 = vxpose.xlu0.b32.cont [6/16] %v230, 128
    %2703 = vxpose.xlu0.b32.cont [7/16] %v231, 128
    %2704 = vxpose.xlu0.b32.cont [8/16] %v232, 128
    %2705 = vxpose.xlu0.b32.cont [9/16] %v233, 128
    %2706 = vxpose.xlu0.b32.cont [10/16] %v234, 128
    %2707 = vxpose.xlu0.b32.cont [11/16] %v235, 128
    %2708 = vxpose.xlu0.b32.cont [12/16] %v236, 128
    %2709 = vxpose.xlu0.b32.cont [13/16] %v237, 128
    %2710 = vxpose.xlu0.b32.cont [14/16] %v238, 128
    %2711 = vxpose.xlu0.b32.cont [15/16] %v239, 128
    %2712 = vxpose.xlu0.b32.end [16/16] %v240, 128
    %v2713 = vpop.trf.xlu0
    %v2714 = vpop.trf.xlu0
    %v2715 = vpop.trf.xlu0
    %v2716 = vpop.trf.xlu0
    %v2717 = vpop.trf.xlu0
    %v2718 = vpop.trf.xlu0
    %v2719 = vpop.trf.xlu0
    %v2720 = vpop.trf.xlu0
    %v2721 = vpop.trf.xlu0
    %v2722 = vpop.trf.xlu0
    %v2723 = vpop.trf.xlu0
    %v2724 = vpop.trf.xlu0
    %v2725 = vpop.trf.xlu0
    %v2726 = vpop.trf.xlu0
    %v2727 = vpop.trf.xlu0
    %v2728 = vpop.trf.xlu0
    %v2729 = vand.u32 %v335, 4294901760
    %2730 = vmatpush.msra.mxu0 %v2729
    %v2731 = vand.u32 %v333, 4294901760
    %2732 = vmatpush.msra.mxu0 %v2731
    %v2733 = vand.u32 %v331, 4294901760
    %2734 = vmatpush.msra.mxu0 %v2733
    %v2735 = vand.u32 %v329, 4294901760
    %2736 = vmatpush.msra.mxu0 %v2735
    %v2737 = vand.u32 %v327, 4294901760
    %2738 = vmatpush.msra.mxu0 %v2737
    %v2739 = vand.u32 %v325, 4294901760
    %2740 = vmatpush.msra.mxu0 %v2739
    %v2741 = vand.u32 %v323, 4294901760
    %2742 = vmatpush.msra.mxu0 %v2741
    %v2743 = vand.u32 %v321, 4294901760
    %2744 = vmatpush.msra.mxu0 %v2743
    %v2745 = vand.u32 %v319, 4294901760
    %2746 = vmatpush.msra.mxu0 %v2745
    %v2747 = vand.u32 %v317, 4294901760
    %2748 = vmatpush.msra.mxu0 %v2747
    %v2749 = vand.u32 %v315, 4294901760
    %2750 = vmatpush.msra.mxu0 %v2749
    %v2751 = vand.u32 %v313, 4294901760
    %2752 = vmatpush.msra.mxu0 %v2751
    %v2753 = vand.u32 %v311, 4294901760
    %2754 = vmatpush.msra.mxu0 %v2753
    %v2755 = vand.u32 %v309, 4294901760
    %2756 = vmatpush.msra.mxu0 %v2755
    %v2757 = vand.u32 %v307, 4294901760
    %2758 = vmatpush.msra.mxu0 %v2757
    %v2759 = vand.u32 %v305, 4294901760
    %2760 = vmatpush.msra.mxu0 %v2759
    %v2761 = vand.u32 %v2681, 4294901760
    %v2762 = vsub.f32 %v2681, %v2761
    %v2763 = vand.u32 %v2762, 4294901760
    %v2764 = vsub.f32 %v2762, %v2763
    %v2765 = vand.u32 %v2764, 4294901760
    %2766 = vmatmul.f32.gmra.mxu0 %v2765
    %v2767 = vpop.f32.mrf.mxu0
    %v2768 = vadd.f32 0.0, %v2767
    %v2769 = vand.u32 %v2682, 4294901760
    %v2770 = vsub.f32 %v2682, %v2769
    %v2771 = vand.u32 %v2770, 4294901760
    %v2772 = vsub.f32 %v2770, %v2771
    %v2773 = vand.u32 %v2772, 4294901760
    %2774 = vmatmul.f32.gmra.mxu0 %v2773
    %v2775 = vpop.f32.mrf.mxu0
    %v2776 = vadd.f32 0.0, %v2775
    %v2777 = vand.u32 %v2683, 4294901760
    %v2778 = vsub.f32 %v2683, %v2777
    %v2779 = vand.u32 %v2778, 4294901760
    %v2780 = vsub.f32 %v2778, %v2779
    %v2781 = vand.u32 %v2780, 4294901760
    %2782 = vmatmul.f32.gmra.mxu0 %v2781
    %v2783 = vpop.f32.mrf.mxu0
    %v2784 = vadd.f32 0.0, %v2783
    %v2785 = vand.u32 %v2684, 4294901760
    %v2786 = vsub.f32 %v2684, %v2785
    %v2787 = vand.u32 %v2786, 4294901760
    %v2788 = vsub.f32 %v2786, %v2787
    %v2789 = vand.u32 %v2788, 4294901760
    %2790 = vmatmul.f32.gmra.mxu0 %v2789
    %v2791 = vpop.f32.mrf.mxu0
    %v2792 = vadd.f32 0.0, %v2791
    %v2793 = vand.u32 %v2685, 4294901760
    %v2794 = vsub.f32 %v2685, %v2793
    %v2795 = vand.u32 %v2794, 4294901760
    %v2796 = vsub.f32 %v2794, %v2795
    %v2797 = vand.u32 %v2796, 4294901760
    %2798 = vmatmul.f32.gmra.mxu0 %v2797
    %v2799 = vpop.f32.mrf.mxu0
    %v2800 = vadd.f32 0.0, %v2799
    %v2801 = vand.u32 %v2686, 4294901760
    %v2802 = vsub.f32 %v2686, %v2801
    %v2803 = vand.u32 %v2802, 4294901760
    %v2804 = vsub.f32 %v2802, %v2803
    %v2805 = vand.u32 %v2804, 4294901760
    %2806 = vmatmul.f32.gmra.mxu0 %v2805
    %v2807 = vpop.f32.mrf.mxu0
    %v2808 = vadd.f32 0.0, %v2807
    %v2809 = vand.u32 %v2687, 4294901760
    %v2810 = vsub.f32 %v2687, %v2809
    %v2811 = vand.u32 %v2810, 4294901760
    %v2812 = vsub.f32 %v2810, %v2811
    %v2813 = vand.u32 %v2812, 4294901760
    %2814 = vmatmul.f32.gmra.mxu0 %v2813
    %v2815 = vpop.f32.mrf.mxu0
    %v2816 = vadd.f32 0.0, %v2815
    %v2817 = vand.u32 %v2688, 4294901760
    %v2818 = vsub.f32 %v2688, %v2817
    %v2819 = vand.u32 %v2818, 4294901760
    %v2820 = vsub.f32 %v2818, %v2819
    %v2821 = vand.u32 %v2820, 4294901760
    %2822 = vmatmul.f32.gmra.mxu0 %v2821
    %v2823 = vpop.f32.mrf.mxu0
    %v2824 = vadd.f32 0.0, %v2823
    %2825 = vdwg.mxu0
    %v2826 = vand.u32 %v335, 4294901760
    %v2827 = vsub.f32 %v335, %v2826
    %v2828 = vand.u32 %v2827, 4294901760
    %v2829 = vsub.f32 %v2827, %v2828
    %v2830 = vand.u32 %v2829, 4294901760
    %2831 = vmatpush.msra.mxu0 %v2830
    %v2832 = vand.u32 %v333, 4294901760
    %v2833 = vsub.f32 %v333, %v2832
    %v2834 = vand.u32 %v2833, 4294901760
    %v2835 = vsub.f32 %v2833, %v2834
    %v2836 = vand.u32 %v2835, 4294901760
    %2837 = vmatpush.msra.mxu0 %v2836
    %v2838 = vand.u32 %v331, 4294901760
    %v2839 = vsub.f32 %v331, %v2838
    %v2840 = vand.u32 %v2839, 4294901760
    %v2841 = vsub.f32 %v2839, %v2840
    %v2842 = vand.u32 %v2841, 4294901760
    %2843 = vmatpush.msra.mxu0 %v2842
    %v2844 = vand.u32 %v329, 4294901760
    %v2845 = vsub.f32 %v329, %v2844
    %v2846 = vand.u32 %v2845, 4294901760
    %v2847 = vsub.f32 %v2845, %v2846
    %v2848 = vand.u32 %v2847, 4294901760
    %2849 = vmatpush.msra.mxu0 %v2848
    %v2850 = vand.u32 %v327, 4294901760
    %v2851 = vsub.f32 %v327, %v2850
    %v2852 = vand.u32 %v2851, 4294901760
    %v2853 = vsub.f32 %v2851, %v2852
    %v2854 = vand.u32 %v2853, 4294901760
    %2855 = vmatpush.msra.mxu0 %v2854
    %v2856 = vand.u32 %v325, 4294901760
    %v2857 = vsub.f32 %v325, %v2856
    %v2858 = vand.u32 %v2857, 4294901760
    %v2859 = vsub.f32 %v2857, %v2858
    %v2860 = vand.u32 %v2859, 4294901760
    %2861 = vmatpush.msra.mxu0 %v2860
    %v2862 = vand.u32 %v323, 4294901760
    %v2863 = vsub.f32 %v323, %v2862
    %v2864 = vand.u32 %v2863, 4294901760
    %v2865 = vsub.f32 %v2863, %v2864
    %v2866 = vand.u32 %v2865, 4294901760
    %2867 = vmatpush.msra.mxu0 %v2866
    %v2868 = vand.u32 %v321, 4294901760
    %v2869 = vsub.f32 %v321, %v2868
    %v2870 = vand.u32 %v2869, 4294901760
    %v2871 = vsub.f32 %v2869, %v2870
    %v2872 = vand.u32 %v2871, 4294901760
    %2873 = vmatpush.msra.mxu0 %v2872
    %v2874 = vand.u32 %v319, 4294901760
    %v2875 = vsub.f32 %v319, %v2874
    %v2876 = vand.u32 %v2875, 4294901760
    %v2877 = vsub.f32 %v2875, %v2876
    %v2878 = vand.u32 %v2877, 4294901760
    %2879 = vmatpush.msra.mxu0 %v2878
    %v2880 = vand.u32 %v317, 4294901760
    %v2881 = vsub.f32 %v317, %v2880
    %v2882 = vand.u32 %v2881, 4294901760
    %v2883 = vsub.f32 %v2881, %v2882
    %v2884 = vand.u32 %v2883, 4294901760
    %2885 = vmatpush.msra.mxu0 %v2884
    %v2886 = vand.u32 %v315, 4294901760
    %v2887 = vsub.f32 %v315, %v2886
    %v2888 = vand.u32 %v2887, 4294901760
    %v2889 = vsub.f32 %v2887, %v2888
    %v2890 = vand.u32 %v2889, 4294901760
    %2891 = vmatpush.msra.mxu0 %v2890
    %v2892 = vand.u32 %v313, 4294901760
    %v2893 = vsub.f32 %v313, %v2892
    %v2894 = vand.u32 %v2893, 4294901760
    %v2895 = vsub.f32 %v2893, %v2894
    %v2896 = vand.u32 %v2895, 4294901760
    %2897 = vmatpush.msra.mxu0 %v2896
    %v2898 = vand.u32 %v311, 4294901760
    %v2899 = vsub.f32 %v311, %v2898
    %v2900 = vand.u32 %v2899, 4294901760
    %v2901 = vsub.f32 %v2899, %v2900
    %v2902 = vand.u32 %v2901, 4294901760
    %2903 = vmatpush.msra.mxu0 %v2902
    %v2904 = vand.u32 %v309, 4294901760
    %v2905 = vsub.f32 %v309, %v2904
    %v2906 = vand.u32 %v2905, 4294901760
    %v2907 = vsub.f32 %v2905, %v2906
    %v2908 = vand.u32 %v2907, 4294901760
    %2909 = vmatpush.msra.mxu0 %v2908
    %v2910 = vand.u32 %v307, 4294901760
    %v2911 = vsub.f32 %v307, %v2910
    %v2912 = vand.u32 %v2911, 4294901760
    %v2913 = vsub.f32 %v2911, %v2912
    %v2914 = vand.u32 %v2913, 4294901760
    %2915 = vmatpush.msra.mxu0 %v2914
    %v2916 = vand.u32 %v305, 4294901760
    %v2917 = vsub.f32 %v305, %v2916
    %v2918 = vand.u32 %v2917, 4294901760
    %v2919 = vsub.f32 %v2917, %v2918
    %v2920 = vand.u32 %v2919, 4294901760
    %2921 = vmatpush.msra.mxu0 %v2920
    %v2922 = vand.u32 %v2681, 4294901760
    %2923 = vmatmul.f32.gmra.mxu0 %v2922
    %v2924 = vpop.f32.mrf.mxu0
    %v2925 = vadd.f32 %v2768, %v2924
    %v2926 = vand.u32 %v2682, 4294901760
    %2927 = vmatmul.f32.gmra.mxu0 %v2926
    %v2928 = vpop.f32.mrf.mxu0
    %v2929 = vadd.f32 %v2776, %v2928
    %v2930 = vand.u32 %v2683, 4294901760
    %2931 = vmatmul.f32.gmra.mxu0 %v2930
    %v2932 = vpop.f32.mrf.mxu0
    %v2933 = vadd.f32 %v2784, %v2932
    %v2934 = vand.u32 %v2684, 4294901760
    %2935 = vmatmul.f32.gmra.mxu0 %v2934
    %v2936 = vpop.f32.mrf.mxu0
    %v2937 = vadd.f32 %v2792, %v2936
    %v2938 = vand.u32 %v2685, 4294901760
    %2939 = vmatmul.f32.gmra.mxu0 %v2938
    %v2940 = vpop.f32.mrf.mxu0
    %v2941 = vadd.f32 %v2800, %v2940
    %v2942 = vand.u32 %v2686, 4294901760
    %2943 = vmatmul.f32.gmra.mxu0 %v2942
    %v2944 = vpop.f32.mrf.mxu0
    %v2945 = vadd.f32 %v2808, %v2944
    %v2946 = vand.u32 %v2687, 4294901760
    %2947 = vmatmul.f32.gmra.mxu0 %v2946
    %v2948 = vpop.f32.mrf.mxu0
    %v2949 = vadd.f32 %v2816, %v2948
    %v2950 = vand.u32 %v2688, 4294901760
    %2951 = vmatmul.f32.gmra.mxu0 %v2950
    %v2952 = vpop.f32.mrf.mxu0
    %v2953 = vadd.f32 %v2824, %v2952
    %2954 = vdwg.mxu0
    %v2955 = vand.u32 %v335, 4294901760
    %v2956 = vsub.f32 %v335, %v2955
    %2957 = vmatpush.msra.mxu0 %v2956
    %v2958 = vand.u32 %v333, 4294901760
    %v2959 = vsub.f32 %v333, %v2958
    %2960 = vmatpush.msra.mxu0 %v2959
    %v2961 = vand.u32 %v331, 4294901760
    %v2962 = vsub.f32 %v331, %v2961
    %2963 = vmatpush.msra.mxu0 %v2962
    %v2964 = vand.u32 %v329, 4294901760
    %v2965 = vsub.f32 %v329, %v2964
    %2966 = vmatpush.msra.mxu0 %v2965
    %v2967 = vand.u32 %v327, 4294901760
    %v2968 = vsub.f32 %v327, %v2967
    %2969 = vmatpush.msra.mxu0 %v2968
    %v2970 = vand.u32 %v325, 4294901760
    %v2971 = vsub.f32 %v325, %v2970
    %2972 = vmatpush.msra.mxu0 %v2971
    %v2973 = vand.u32 %v323, 4294901760
    %v2974 = vsub.f32 %v323, %v2973
    %2975 = vmatpush.msra.mxu0 %v2974
    %v2976 = vand.u32 %v321, 4294901760
    %v2977 = vsub.f32 %v321, %v2976
    %2978 = vmatpush.msra.mxu0 %v2977
    %v2979 = vand.u32 %v319, 4294901760
    %v2980 = vsub.f32 %v319, %v2979
    %2981 = vmatpush.msra.mxu0 %v2980
    %v2982 = vand.u32 %v317, 4294901760
    %v2983 = vsub.f32 %v317, %v2982
    %2984 = vmatpush.msra.mxu0 %v2983
    %v2985 = vand.u32 %v315, 4294901760
    %v2986 = vsub.f32 %v315, %v2985
    %2987 = vmatpush.msra.mxu0 %v2986
    %v2988 = vand.u32 %v313, 4294901760
    %v2989 = vsub.f32 %v313, %v2988
    %2990 = vmatpush.msra.mxu0 %v2989
    %v2991 = vand.u32 %v311, 4294901760
    %v2992 = vsub.f32 %v311, %v2991
    %2993 = vmatpush.msra.mxu0 %v2992
    %v2994 = vand.u32 %v309, 4294901760
    %v2995 = vsub.f32 %v309, %v2994
    %2996 = vmatpush.msra.mxu0 %v2995
    %v2997 = vand.u32 %v307, 4294901760
    %v2998 = vsub.f32 %v307, %v2997
    %2999 = vmatpush.msra.mxu0 %v2998
    %v3000 = vand.u32 %v305, 4294901760
    %v3001 = vsub.f32 %v305, %v3000
    %3002 = vmatpush.msra.mxu0 %v3001
    %v3003 = vand.u32 %v2681, 4294901760
    %v3004 = vsub.f32 %v2681, %v3003
    %3005 = vmatmul.f32.gmra.mxu0 %v3004
    %v3006 = vpop.f32.mrf.mxu0
    %v3007 = vadd.f32 %v2925, %v3006
    %v3008 = vand.u32 %v2682, 4294901760
    %v3009 = vsub.f32 %v2682, %v3008
    %3010 = vmatmul.f32.gmra.mxu0 %v3009
    %v3011 = vpop.f32.mrf.mxu0
    %v3012 = vadd.f32 %v2929, %v3011
    %v3013 = vand.u32 %v2683, 4294901760
    %v3014 = vsub.f32 %v2683, %v3013
    %3015 = vmatmul.f32.gmra.mxu0 %v3014
    %v3016 = vpop.f32.mrf.mxu0
    %v3017 = vadd.f32 %v2933, %v3016
    %v3018 = vand.u32 %v2684, 4294901760
    %v3019 = vsub.f32 %v2684, %v3018
    %3020 = vmatmul.f32.gmra.mxu0 %v3019
    %v3021 = vpop.f32.mrf.mxu0
    %v3022 = vadd.f32 %v2937, %v3021
    %v3023 = vand.u32 %v2685, 4294901760
    %v3024 = vsub.f32 %v2685, %v3023
    %3025 = vmatmul.f32.gmra.mxu0 %v3024
    %v3026 = vpop.f32.mrf.mxu0
    %v3027 = vadd.f32 %v2941, %v3026
    %v3028 = vand.u32 %v2686, 4294901760
    %v3029 = vsub.f32 %v2686, %v3028
    %3030 = vmatmul.f32.gmra.mxu0 %v3029
    %v3031 = vpop.f32.mrf.mxu0
    %v3032 = vadd.f32 %v2945, %v3031
    %v3033 = vand.u32 %v2687, 4294901760
    %v3034 = vsub.f32 %v2687, %v3033
    %3035 = vmatmul.f32.gmra.mxu0 %v3034
    %v3036 = vpop.f32.mrf.mxu0
    %v3037 = vadd.f32 %v2949, %v3036
    %v3038 = vand.u32 %v2688, 4294901760
    %v3039 = vsub.f32 %v2688, %v3038
    %3040 = vmatmul.f32.gmra.mxu0 %v3039
    %v3041 = vpop.f32.mrf.mxu0
    %v3042 = vadd.f32 %v2953, %v3041
    %3043 = vdwg.mxu0
    %v3044 = vand.u32 %v335, 4294901760
    %3045 = vmatpush.msra.mxu0 %v3044
    %v3046 = vand.u32 %v333, 4294901760
    %3047 = vmatpush.msra.mxu0 %v3046
    %v3048 = vand.u32 %v331, 4294901760
    %3049 = vmatpush.msra.mxu0 %v3048
    %v3050 = vand.u32 %v329, 4294901760
    %3051 = vmatpush.msra.mxu0 %v3050
    %v3052 = vand.u32 %v327, 4294901760
    %3053 = vmatpush.msra.mxu0 %v3052
    %v3054 = vand.u32 %v325, 4294901760
    %3055 = vmatpush.msra.mxu0 %v3054
    %v3056 = vand.u32 %v323, 4294901760
    %3057 = vmatpush.msra.mxu0 %v3056
    %v3058 = vand.u32 %v321, 4294901760
    %3059 = vmatpush.msra.mxu0 %v3058
    %v3060 = vand.u32 %v319, 4294901760
    %3061 = vmatpush.msra.mxu0 %v3060
    %v3062 = vand.u32 %v317, 4294901760
    %3063 = vmatpush.msra.mxu0 %v3062
    %v3064 = vand.u32 %v315, 4294901760
    %3065 = vmatpush.msra.mxu0 %v3064
    %v3066 = vand.u32 %v313, 4294901760
    %3067 = vmatpush.msra.mxu0 %v3066
    %v3068 = vand.u32 %v311, 4294901760
    %3069 = vmatpush.msra.mxu0 %v3068
    %v3070 = vand.u32 %v309, 4294901760
    %3071 = vmatpush.msra.mxu0 %v3070
    %v3072 = vand.u32 %v307, 4294901760
    %3073 = vmatpush.msra.mxu0 %v3072
    %v3074 = vand.u32 %v305, 4294901760
    %3075 = vmatpush.msra.mxu0 %v3074
    %v3076 = vand.u32 %v2681, 4294901760
    %v3077 = vsub.f32 %v2681, %v3076
    %v3078 = vand.u32 %v3077, 4294901760
    %3079 = vmatmul.f32.gmra.mxu0 %v3078
    %v3080 = vpop.f32.mrf.mxu0
    %v3081 = vadd.f32 %v3007, %v3080
    %v3082 = vand.u32 %v2682, 4294901760
    %v3083 = vsub.f32 %v2682, %v3082
    %v3084 = vand.u32 %v3083, 4294901760
    %3085 = vmatmul.f32.gmra.mxu0 %v3084
    %v3086 = vpop.f32.mrf.mxu0
    %v3087 = vadd.f32 %v3012, %v3086
    %v3088 = vand.u32 %v2683, 4294901760
    %v3089 = vsub.f32 %v2683, %v3088
    %v3090 = vand.u32 %v3089, 4294901760
    %3091 = vmatmul.f32.gmra.mxu0 %v3090
    %v3092 = vpop.f32.mrf.mxu0
    %v3093 = vadd.f32 %v3017, %v3092
    %v3094 = vand.u32 %v2684, 4294901760
    %v3095 = vsub.f32 %v2684, %v3094
    %v3096 = vand.u32 %v3095, 4294901760
    %3097 = vmatmul.f32.gmra.mxu0 %v3096
    %v3098 = vpop.f32.mrf.mxu0
    %v3099 = vadd.f32 %v3022, %v3098
    %v3100 = vand.u32 %v2685, 4294901760
    %v3101 = vsub.f32 %v2685, %v3100
    %v3102 = vand.u32 %v3101, 4294901760
    %3103 = vmatmul.f32.gmra.mxu0 %v3102
    %v3104 = vpop.f32.mrf.mxu0
    %v3105 = vadd.f32 %v3027, %v3104
    %v3106 = vand.u32 %v2686, 4294901760
    %v3107 = vsub.f32 %v2686, %v3106
    %v3108 = vand.u32 %v3107, 4294901760
    %3109 = vmatmul.f32.gmra.mxu0 %v3108
    %v3110 = vpop.f32.mrf.mxu0
    %v3111 = vadd.f32 %v3032, %v3110
    %v3112 = vand.u32 %v2687, 4294901760
    %v3113 = vsub.f32 %v2687, %v3112
    %v3114 = vand.u32 %v3113, 4294901760
    %3115 = vmatmul.f32.gmra.mxu0 %v3114
    %v3116 = vpop.f32.mrf.mxu0
    %v3117 = vadd.f32 %v3037, %v3116
    %v3118 = vand.u32 %v2688, 4294901760
    %v3119 = vsub.f32 %v2688, %v3118
    %v3120 = vand.u32 %v3119, 4294901760
    %3121 = vmatmul.f32.gmra.mxu0 %v3120
    %v3122 = vpop.f32.mrf.mxu0
    %v3123 = vadd.f32 %v3042, %v3122
    %3124 = vdwg.mxu0
    %v3125 = vand.u32 %v335, 4294901760
    %v3126 = vsub.f32 %v335, %v3125
    %v3127 = vand.u32 %v3126, 4294901760
    %3128 = vmatpush.msra.mxu0 %v3127
    %v3129 = vand.u32 %v333, 4294901760
    %v3130 = vsub.f32 %v333, %v3129
    %v3131 = vand.u32 %v3130, 4294901760
    %3132 = vmatpush.msra.mxu0 %v3131
    %v3133 = vand.u32 %v331, 4294901760
    %v3134 = vsub.f32 %v331, %v3133
    %v3135 = vand.u32 %v3134, 4294901760
    %3136 = vmatpush.msra.mxu0 %v3135
    %v3137 = vand.u32 %v329, 4294901760
    %v3138 = vsub.f32 %v329, %v3137
    %v3139 = vand.u32 %v3138, 4294901760
    %3140 = vmatpush.msra.mxu0 %v3139
    %v3141 = vand.u32 %v327, 4294901760
    %v3142 = vsub.f32 %v327, %v3141
    %v3143 = vand.u32 %v3142, 4294901760
    %3144 = vmatpush.msra.mxu0 %v3143
    %v3145 = vand.u32 %v325, 4294901760
    %v3146 = vsub.f32 %v325, %v3145
    %v3147 = vand.u32 %v3146, 4294901760
    %3148 = vmatpush.msra.mxu0 %v3147
    %v3149 = vand.u32 %v323, 4294901760
    %v3150 = vsub.f32 %v323, %v3149
    %v3151 = vand.u32 %v3150, 4294901760
    %3152 = vmatpush.msra.mxu0 %v3151
    %v3153 = vand.u32 %v321, 4294901760
    %v3154 = vsub.f32 %v321, %v3153
    %v3155 = vand.u32 %v3154, 4294901760
    %3156 = vmatpush.msra.mxu0 %v3155
    %v3157 = vand.u32 %v319, 4294901760
    %v3158 = vsub.f32 %v319, %v3157
    %v3159 = vand.u32 %v3158, 4294901760
    %3160 = vmatpush.msra.mxu0 %v3159
    %v3161 = vand.u32 %v317, 4294901760
    %v3162 = vsub.f32 %v317, %v3161
    %v3163 = vand.u32 %v3162, 4294901760
    %3164 = vmatpush.msra.mxu0 %v3163
    %v3165 = vand.u32 %v315, 4294901760
    %v3166 = vsub.f32 %v315, %v3165
    %v3167 = vand.u32 %v3166, 4294901760
    %3168 = vmatpush.msra.mxu0 %v3167
    %v3169 = vand.u32 %v313, 4294901760
    %v3170 = vsub.f32 %v313, %v3169
    %v3171 = vand.u32 %v3170, 4294901760
    %3172 = vmatpush.msra.mxu0 %v3171
    %v3173 = vand.u32 %v311, 4294901760
    %v3174 = vsub.f32 %v311, %v3173
    %v3175 = vand.u32 %v3174, 4294901760
    %3176 = vmatpush.msra.mxu0 %v3175
    %v3177 = vand.u32 %v309, 4294901760
    %v3178 = vsub.f32 %v309, %v3177
    %v3179 = vand.u32 %v3178, 4294901760
    %3180 = vmatpush.msra.mxu0 %v3179
    %v3181 = vand.u32 %v307, 4294901760
    %v3182 = vsub.f32 %v307, %v3181
    %v3183 = vand.u32 %v3182, 4294901760
    %3184 = vmatpush.msra.mxu0 %v3183
    %v3185 = vand.u32 %v305, 4294901760
    %v3186 = vsub.f32 %v305, %v3185
    %v3187 = vand.u32 %v3186, 4294901760
    %3188 = vmatpush.msra.mxu0 %v3187
    %v3189 = vand.u32 %v2681, 4294901760
    %3190 = vmatmul.f32.gmra.mxu0 %v3189
    %v3191 = vpop.f32.mrf.mxu0
    %v3192 = vadd.f32 %v3081, %v3191
    %v3193 = vand.u32 %v2682, 4294901760
    %3194 = vmatmul.f32.gmra.mxu0 %v3193
    %v3195 = vpop.f32.mrf.mxu0
    %v3196 = vadd.f32 %v3087, %v3195
    %v3197 = vand.u32 %v2683, 4294901760
    %3198 = vmatmul.f32.gmra.mxu0 %v3197
    %v3199 = vpop.f32.mrf.mxu0
    %v3200 = vadd.f32 %v3093, %v3199
    %v3201 = vand.u32 %v2684, 4294901760
    %3202 = vmatmul.f32.gmra.mxu0 %v3201
    %v3203 = vpop.f32.mrf.mxu0
    %v3204 = vadd.f32 %v3099, %v3203
    %v3205 = vand.u32 %v2685, 4294901760
    %3206 = vmatmul.f32.gmra.mxu0 %v3205
    %v3207 = vpop.f32.mrf.mxu0
    %v3208 = vadd.f32 %v3105, %v3207
    %v3209 = vand.u32 %v2686, 4294901760
    %3210 = vmatmul.f32.gmra.mxu0 %v3209
    %v3211 = vpop.f32.mrf.mxu0
    %v3212 = vadd.f32 %v3111, %v3211
    %v3213 = vand.u32 %v2687, 4294901760
    %3214 = vmatmul.f32.gmra.mxu0 %v3213
    %v3215 = vpop.f32.mrf.mxu0
    %v3216 = vadd.f32 %v3117, %v3215
    %v3217 = vand.u32 %v2688, 4294901760
    %3218 = vmatmul.f32.gmra.mxu0 %v3217
    %v3219 = vpop.f32.mrf.mxu0
    %v3220 = vadd.f32 %v3123, %v3219
    %3221 = vdwg.mxu0
    %v3222 = vand.u32 %v335, 4294901760
    %3223 = vmatpush.msra.mxu0 %v3222
    %v3224 = vand.u32 %v333, 4294901760
    %3225 = vmatpush.msra.mxu0 %v3224
    %v3226 = vand.u32 %v331, 4294901760
    %3227 = vmatpush.msra.mxu0 %v3226
    %v3228 = vand.u32 %v329, 4294901760
    %3229 = vmatpush.msra.mxu0 %v3228
    %v3230 = vand.u32 %v327, 4294901760
    %3231 = vmatpush.msra.mxu0 %v3230
    %v3232 = vand.u32 %v325, 4294901760
    %3233 = vmatpush.msra.mxu0 %v3232
    %v3234 = vand.u32 %v323, 4294901760
    %3235 = vmatpush.msra.mxu0 %v3234
    %v3236 = vand.u32 %v321, 4294901760
    %3237 = vmatpush.msra.mxu0 %v3236
    %v3238 = vand.u32 %v319, 4294901760
    %3239 = vmatpush.msra.mxu0 %v3238
    %v3240 = vand.u32 %v317, 4294901760
    %3241 = vmatpush.msra.mxu0 %v3240
    %v3242 = vand.u32 %v315, 4294901760
    %3243 = vmatpush.msra.mxu0 %v3242
    %v3244 = vand.u32 %v313, 4294901760
    %3245 = vmatpush.msra.mxu0 %v3244
    %v3246 = vand.u32 %v311, 4294901760
    %3247 = vmatpush.msra.mxu0 %v3246
    %v3248 = vand.u32 %v309, 4294901760
    %3249 = vmatpush.msra.mxu0 %v3248
    %v3250 = vand.u32 %v307, 4294901760
    %3251 = vmatpush.msra.mxu0 %v3250
    %v3252 = vand.u32 %v305, 4294901760
    %3253 = vmatpush.msra.mxu0 %v3252
    %v3254 = vand.u32 %v2681, 4294901760
    %3255 = vmatmul.f32.gmra.mxu0 %v3254
    %v3256 = vpop.f32.mrf.mxu0
    %v3257 = vadd.f32 %v3192, %v3256
    %v3258 = vand.u32 %v2682, 4294901760
    %3259 = vmatmul.f32.gmra.mxu0 %v3258
    %v3260 = vpop.f32.mrf.mxu0
    %v3261 = vadd.f32 %v3196, %v3260
    %v3262 = vand.u32 %v2683, 4294901760
    %3263 = vmatmul.f32.gmra.mxu0 %v3262
    %v3264 = vpop.f32.mrf.mxu0
    %v3265 = vadd.f32 %v3200, %v3264
    %v3266 = vand.u32 %v2684, 4294901760
    %3267 = vmatmul.f32.gmra.mxu0 %v3266
    %v3268 = vpop.f32.mrf.mxu0
    %v3269 = vadd.f32 %v3204, %v3268
    %v3270 = vand.u32 %v2685, 4294901760
    %3271 = vmatmul.f32.gmra.mxu0 %v3270
    %v3272 = vpop.f32.mrf.mxu0
    %v3273 = vadd.f32 %v3208, %v3272
    %v3274 = vand.u32 %v2686, 4294901760
    %3275 = vmatmul.f32.gmra.mxu0 %v3274
    %v3276 = vpop.f32.mrf.mxu0
    %v3277 = vadd.f32 %v3212, %v3276
    %v3278 = vand.u32 %v2687, 4294901760
    %3279 = vmatmul.f32.gmra.mxu0 %v3278
    %v3280 = vpop.f32.mrf.mxu0
    %v3281 = vadd.f32 %v3216, %v3280
    %v3282 = vand.u32 %v2688, 4294901760
    %3283 = vmatmul.f32.gmra.mxu0 %v3282
    %v3284 = vpop.f32.mrf.mxu0
    %v3285 = vadd.f32 %v3220, %v3284
    %3286 = vdwg.mxu0
    %v3287 = vand.u32 %v367, 4294901760
    %3288 = vmatpush.msra.mxu0 %v3287
    %v3289 = vand.u32 %v365, 4294901760
    %3290 = vmatpush.msra.mxu0 %v3289
    %v3291 = vand.u32 %v363, 4294901760
    %3292 = vmatpush.msra.mxu0 %v3291
    %v3293 = vand.u32 %v361, 4294901760
    %3294 = vmatpush.msra.mxu0 %v3293
    %v3295 = vand.u32 %v359, 4294901760
    %3296 = vmatpush.msra.mxu0 %v3295
    %v3297 = vand.u32 %v357, 4294901760
    %3298 = vmatpush.msra.mxu0 %v3297
    %v3299 = vand.u32 %v355, 4294901760
    %3300 = vmatpush.msra.mxu0 %v3299
    %v3301 = vand.u32 %v353, 4294901760
    %3302 = vmatpush.msra.mxu0 %v3301
    %v3303 = vand.u32 %v351, 4294901760
    %3304 = vmatpush.msra.mxu0 %v3303
    %v3305 = vand.u32 %v349, 4294901760
    %3306 = vmatpush.msra.mxu0 %v3305
    %v3307 = vand.u32 %v347, 4294901760
    %3308 = vmatpush.msra.mxu0 %v3307
    %v3309 = vand.u32 %v345, 4294901760
    %3310 = vmatpush.msra.mxu0 %v3309
    %v3311 = vand.u32 %v343, 4294901760
    %3312 = vmatpush.msra.mxu0 %v3311
    %v3313 = vand.u32 %v341, 4294901760
    %3314 = vmatpush.msra.mxu0 %v3313
    %v3315 = vand.u32 %v339, 4294901760
    %3316 = vmatpush.msra.mxu0 %v3315
    %v3317 = vand.u32 %v337, 4294901760
    %3318 = vmatpush.msra.mxu0 %v3317
    %v3319 = vand.u32 %v2713, 4294901760
    %v3320 = vsub.f32 %v2713, %v3319
    %v3321 = vand.u32 %v3320, 4294901760
    %v3322 = vsub.f32 %v3320, %v3321
    %v3323 = vand.u32 %v3322, 4294901760
    %3324 = vmatmul.f32.gmra.mxu0 %v3323
    %v3325 = vpop.f32.mrf.mxu0
    %v3326 = vadd.f32 %v3257, %v3325
    %v3327 = vand.u32 %v2714, 4294901760
    %v3328 = vsub.f32 %v2714, %v3327
    %v3329 = vand.u32 %v3328, 4294901760
    %v3330 = vsub.f32 %v3328, %v3329
    %v3331 = vand.u32 %v3330, 4294901760
    %3332 = vmatmul.f32.gmra.mxu0 %v3331
    %v3333 = vpop.f32.mrf.mxu0
    %v3334 = vadd.f32 %v3261, %v3333
    %v3335 = vand.u32 %v2715, 4294901760
    %v3336 = vsub.f32 %v2715, %v3335
    %v3337 = vand.u32 %v3336, 4294901760
    %v3338 = vsub.f32 %v3336, %v3337
    %v3339 = vand.u32 %v3338, 4294901760
    %3340 = vmatmul.f32.gmra.mxu0 %v3339
    %v3341 = vpop.f32.mrf.mxu0
    %v3342 = vadd.f32 %v3265, %v3341
    %v3343 = vand.u32 %v2716, 4294901760
    %v3344 = vsub.f32 %v2716, %v3343
    %v3345 = vand.u32 %v3344, 4294901760
    %v3346 = vsub.f32 %v3344, %v3345
    %v3347 = vand.u32 %v3346, 4294901760
    %3348 = vmatmul.f32.gmra.mxu0 %v3347
    %v3349 = vpop.f32.mrf.mxu0
    %v3350 = vadd.f32 %v3269, %v3349
    %v3351 = vand.u32 %v2717, 4294901760
    %v3352 = vsub.f32 %v2717, %v3351
    %v3353 = vand.u32 %v3352, 4294901760
    %v3354 = vsub.f32 %v3352, %v3353
    %v3355 = vand.u32 %v3354, 4294901760
    %3356 = vmatmul.f32.gmra.mxu0 %v3355
    %v3357 = vpop.f32.mrf.mxu0
    %v3358 = vadd.f32 %v3273, %v3357
    %v3359 = vand.u32 %v2718, 4294901760
    %v3360 = vsub.f32 %v2718, %v3359
    %v3361 = vand.u32 %v3360, 4294901760
    %v3362 = vsub.f32 %v3360, %v3361
    %v3363 = vand.u32 %v3362, 4294901760
    %3364 = vmatmul.f32.gmra.mxu0 %v3363
    %v3365 = vpop.f32.mrf.mxu0
    %v3366 = vadd.f32 %v3277, %v3365
    %v3367 = vand.u32 %v2719, 4294901760
    %v3368 = vsub.f32 %v2719, %v3367
    %v3369 = vand.u32 %v3368, 4294901760
    %v3370 = vsub.f32 %v3368, %v3369
    %v3371 = vand.u32 %v3370, 4294901760
    %3372 = vmatmul.f32.gmra.mxu0 %v3371
    %v3373 = vpop.f32.mrf.mxu0
    %v3374 = vadd.f32 %v3281, %v3373
    %v3375 = vand.u32 %v2720, 4294901760
    %v3376 = vsub.f32 %v2720, %v3375
    %v3377 = vand.u32 %v3376, 4294901760
    %v3378 = vsub.f32 %v3376, %v3377
    %v3379 = vand.u32 %v3378, 4294901760
    %3380 = vmatmul.f32.gmra.mxu0 %v3379
    %v3381 = vpop.f32.mrf.mxu0
    %v3382 = vadd.f32 %v3285, %v3381
    %3383 = vdwg.mxu0
    %v3384 = vand.u32 %v367, 4294901760
    %v3385 = vsub.f32 %v367, %v3384
    %v3386 = vand.u32 %v3385, 4294901760
    %v3387 = vsub.f32 %v3385, %v3386
    %v3388 = vand.u32 %v3387, 4294901760
    %3389 = vmatpush.msra.mxu0 %v3388
    %v3390 = vand.u32 %v365, 4294901760
    %v3391 = vsub.f32 %v365, %v3390
    %v3392 = vand.u32 %v3391, 4294901760
    %v3393 = vsub.f32 %v3391, %v3392
    %v3394 = vand.u32 %v3393, 4294901760
    %3395 = vmatpush.msra.mxu0 %v3394
    %v3396 = vand.u32 %v363, 4294901760
    %v3397 = vsub.f32 %v363, %v3396
    %v3398 = vand.u32 %v3397, 4294901760
    %v3399 = vsub.f32 %v3397, %v3398
    %v3400 = vand.u32 %v3399, 4294901760
    %3401 = vmatpush.msra.mxu0 %v3400
    %v3402 = vand.u32 %v361, 4294901760
    %v3403 = vsub.f32 %v361, %v3402
    %v3404 = vand.u32 %v3403, 4294901760
    %v3405 = vsub.f32 %v3403, %v3404
    %v3406 = vand.u32 %v3405, 4294901760
    %3407 = vmatpush.msra.mxu0 %v3406
    %v3408 = vand.u32 %v359, 4294901760
    %v3409 = vsub.f32 %v359, %v3408
    %v3410 = vand.u32 %v3409, 4294901760
    %v3411 = vsub.f32 %v3409, %v3410
    %v3412 = vand.u32 %v3411, 4294901760
    %3413 = vmatpush.msra.mxu0 %v3412
    %v3414 = vand.u32 %v357, 4294901760
    %v3415 = vsub.f32 %v357, %v3414
    %v3416 = vand.u32 %v3415, 4294901760
    %v3417 = vsub.f32 %v3415, %v3416
    %v3418 = vand.u32 %v3417, 4294901760
    %3419 = vmatpush.msra.mxu0 %v3418
    %v3420 = vand.u32 %v355, 4294901760
    %v3421 = vsub.f32 %v355, %v3420
    %v3422 = vand.u32 %v3421, 4294901760
    %v3423 = vsub.f32 %v3421, %v3422
    %v3424 = vand.u32 %v3423, 4294901760
    %3425 = vmatpush.msra.mxu0 %v3424
    %v3426 = vand.u32 %v353, 4294901760
    %v3427 = vsub.f32 %v353, %v3426
    %v3428 = vand.u32 %v3427, 4294901760
    %v3429 = vsub.f32 %v3427, %v3428
    %v3430 = vand.u32 %v3429, 4294901760
    %3431 = vmatpush.msra.mxu0 %v3430
    %v3432 = vand.u32 %v351, 4294901760
    %v3433 = vsub.f32 %v351, %v3432
    %v3434 = vand.u32 %v3433, 4294901760
    %v3435 = vsub.f32 %v3433, %v3434
    %v3436 = vand.u32 %v3435, 4294901760
    %3437 = vmatpush.msra.mxu0 %v3436
    %v3438 = vand.u32 %v349, 4294901760
    %v3439 = vsub.f32 %v349, %v3438
    %v3440 = vand.u32 %v3439, 4294901760
    %v3441 = vsub.f32 %v3439, %v3440
    %v3442 = vand.u32 %v3441, 4294901760
    %3443 = vmatpush.msra.mxu0 %v3442
    %v3444 = vand.u32 %v347, 4294901760
    %v3445 = vsub.f32 %v347, %v3444
    %v3446 = vand.u32 %v3445, 4294901760
    %v3447 = vsub.f32 %v3445, %v3446
    %v3448 = vand.u32 %v3447, 4294901760
    %3449 = vmatpush.msra.mxu0 %v3448
    %v3450 = vand.u32 %v345, 4294901760
    %v3451 = vsub.f32 %v345, %v3450
    %v3452 = vand.u32 %v3451, 4294901760
    %v3453 = vsub.f32 %v3451, %v3452
    %v3454 = vand.u32 %v3453, 4294901760
    %3455 = vmatpush.msra.mxu0 %v3454
    %v3456 = vand.u32 %v343, 4294901760
    %v3457 = vsub.f32 %v343, %v3456
    %v3458 = vand.u32 %v3457, 4294901760
    %v3459 = vsub.f32 %v3457, %v3458
    %v3460 = vand.u32 %v3459, 4294901760
    %3461 = vmatpush.msra.mxu0 %v3460
    %v3462 = vand.u32 %v341, 4294901760
    %v3463 = vsub.f32 %v341, %v3462
    %v3464 = vand.u32 %v3463, 4294901760
    %v3465 = vsub.f32 %v3463, %v3464
    %v3466 = vand.u32 %v3465, 4294901760
    %3467 = vmatpush.msra.mxu0 %v3466
    %v3468 = vand.u32 %v339, 4294901760
    %v3469 = vsub.f32 %v339, %v3468
    %v3470 = vand.u32 %v3469, 4294901760
    %v3471 = vsub.f32 %v3469, %v3470
    %v3472 = vand.u32 %v3471, 4294901760
    %3473 = vmatpush.msra.mxu0 %v3472
    %v3474 = vand.u32 %v337, 4294901760
    %v3475 = vsub.f32 %v337, %v3474
    %v3476 = vand.u32 %v3475, 4294901760
    %v3477 = vsub.f32 %v3475, %v3476
    %v3478 = vand.u32 %v3477, 4294901760
    %3479 = vmatpush.msra.mxu0 %v3478
    %v3480 = vand.u32 %v2713, 4294901760
    %3481 = vmatmul.f32.gmra.mxu0 %v3480
    %v3482 = vpop.f32.mrf.mxu0
    %v3483 = vadd.f32 %v3326, %v3482
    %v3484 = vand.u32 %v2714, 4294901760
    %3485 = vmatmul.f32.gmra.mxu0 %v3484
    %v3486 = vpop.f32.mrf.mxu0
    %v3487 = vadd.f32 %v3334, %v3486
    %v3488 = vand.u32 %v2715, 4294901760
    %3489 = vmatmul.f32.gmra.mxu0 %v3488
    %v3490 = vpop.f32.mrf.mxu0
    %v3491 = vadd.f32 %v3342, %v3490
    %v3492 = vand.u32 %v2716, 4294901760
    %3493 = vmatmul.f32.gmra.mxu0 %v3492
    %v3494 = vpop.f32.mrf.mxu0
    %v3495 = vadd.f32 %v3350, %v3494
    %v3496 = vand.u32 %v2717, 4294901760
    %3497 = vmatmul.f32.gmra.mxu0 %v3496
    %v3498 = vpop.f32.mrf.mxu0
    %v3499 = vadd.f32 %v3358, %v3498
    %v3500 = vand.u32 %v2718, 4294901760
    %3501 = vmatmul.f32.gmra.mxu0 %v3500
    %v3502 = vpop.f32.mrf.mxu0
    %v3503 = vadd.f32 %v3366, %v3502
    %v3504 = vand.u32 %v2719, 4294901760
    %3505 = vmatmul.f32.gmra.mxu0 %v3504
    %v3506 = vpop.f32.mrf.mxu0
    %v3507 = vadd.f32 %v3374, %v3506
    %v3508 = vand.u32 %v2720, 4294901760
    %3509 = vmatmul.f32.gmra.mxu0 %v3508
    %v3510 = vpop.f32.mrf.mxu0
    %v3511 = vadd.f32 %v3382, %v3510
    %3512 = vdwg.mxu0
    %v3513 = vand.u32 %v367, 4294901760
    %v3514 = vsub.f32 %v367, %v3513
    %3515 = vmatpush.msra.mxu0 %v3514
    %v3516 = vand.u32 %v365, 4294901760
    %v3517 = vsub.f32 %v365, %v3516
    %3518 = vmatpush.msra.mxu0 %v3517
    %v3519 = vand.u32 %v363, 4294901760
    %v3520 = vsub.f32 %v363, %v3519
    %3521 = vmatpush.msra.mxu0 %v3520
    %v3522 = vand.u32 %v361, 4294901760
    %v3523 = vsub.f32 %v361, %v3522
    %3524 = vmatpush.msra.mxu0 %v3523
    %v3525 = vand.u32 %v359, 4294901760
    %v3526 = vsub.f32 %v359, %v3525
    %3527 = vmatpush.msra.mxu0 %v3526
    %v3528 = vand.u32 %v357, 4294901760
    %v3529 = vsub.f32 %v357, %v3528
    %3530 = vmatpush.msra.mxu0 %v3529
    %v3531 = vand.u32 %v355, 4294901760
    %v3532 = vsub.f32 %v355, %v3531
    %3533 = vmatpush.msra.mxu0 %v3532
    %v3534 = vand.u32 %v353, 4294901760
    %v3535 = vsub.f32 %v353, %v3534
    %3536 = vmatpush.msra.mxu0 %v3535
    %v3537 = vand.u32 %v351, 4294901760
    %v3538 = vsub.f32 %v351, %v3537
    %3539 = vmatpush.msra.mxu0 %v3538
    %v3540 = vand.u32 %v349, 4294901760
    %v3541 = vsub.f32 %v349, %v3540
    %3542 = vmatpush.msra.mxu0 %v3541
    %v3543 = vand.u32 %v347, 4294901760
    %v3544 = vsub.f32 %v347, %v3543
    %3545 = vmatpush.msra.mxu0 %v3544
    %v3546 = vand.u32 %v345, 4294901760
    %v3547 = vsub.f32 %v345, %v3546
    %3548 = vmatpush.msra.mxu0 %v3547
    %v3549 = vand.u32 %v343, 4294901760
    %v3550 = vsub.f32 %v343, %v3549
    %3551 = vmatpush.msra.mxu0 %v3550
    %v3552 = vand.u32 %v341, 4294901760
    %v3553 = vsub.f32 %v341, %v3552
    %3554 = vmatpush.msra.mxu0 %v3553
    %v3555 = vand.u32 %v339, 4294901760
    %v3556 = vsub.f32 %v339, %v3555
    %3557 = vmatpush.msra.mxu0 %v3556
    %v3558 = vand.u32 %v337, 4294901760
    %v3559 = vsub.f32 %v337, %v3558
    %3560 = vmatpush.msra.mxu0 %v3559
    %v3561 = vand.u32 %v2713, 4294901760
    %v3562 = vsub.f32 %v2713, %v3561
    %3563 = vmatmul.f32.gmra.mxu0 %v3562
    %v3564 = vpop.f32.mrf.mxu0
    %v3565 = vadd.f32 %v3483, %v3564
    %v3566 = vand.u32 %v2714, 4294901760
    %v3567 = vsub.f32 %v2714, %v3566
    %3568 = vmatmul.f32.gmra.mxu0 %v3567
    %v3569 = vpop.f32.mrf.mxu0
    %v3570 = vadd.f32 %v3487, %v3569
    %v3571 = vand.u32 %v2715, 4294901760
    %v3572 = vsub.f32 %v2715, %v3571
    %3573 = vmatmul.f32.gmra.mxu0 %v3572
    %v3574 = vpop.f32.mrf.mxu0
    %v3575 = vadd.f32 %v3491, %v3574
    %v3576 = vand.u32 %v2716, 4294901760
    %v3577 = vsub.f32 %v2716, %v3576
    %3578 = vmatmul.f32.gmra.mxu0 %v3577
    %v3579 = vpop.f32.mrf.mxu0
    %v3580 = vadd.f32 %v3495, %v3579
    %v3581 = vand.u32 %v2717, 4294901760
    %v3582 = vsub.f32 %v2717, %v3581
    %3583 = vmatmul.f32.gmra.mxu0 %v3582
    %v3584 = vpop.f32.mrf.mxu0
    %v3585 = vadd.f32 %v3499, %v3584
    %v3586 = vand.u32 %v2718, 4294901760
    %v3587 = vsub.f32 %v2718, %v3586
    %3588 = vmatmul.f32.gmra.mxu0 %v3587
    %v3589 = vpop.f32.mrf.mxu0
    %v3590 = vadd.f32 %v3503, %v3589
    %v3591 = vand.u32 %v2719, 4294901760
    %v3592 = vsub.f32 %v2719, %v3591
    %3593 = vmatmul.f32.gmra.mxu0 %v3592
    %v3594 = vpop.f32.mrf.mxu0
    %v3595 = vadd.f32 %v3507, %v3594
    %v3596 = vand.u32 %v2720, 4294901760
    %v3597 = vsub.f32 %v2720, %v3596
    %3598 = vmatmul.f32.gmra.mxu0 %v3597
    %v3599 = vpop.f32.mrf.mxu0
    %v3600 = vadd.f32 %v3511, %v3599
    %3601 = vdwg.mxu0
    %v3602 = vand.u32 %v367, 4294901760
    %3603 = vmatpush.msra.mxu0 %v3602
    %v3604 = vand.u32 %v365, 4294901760
    %3605 = vmatpush.msra.mxu0 %v3604
    %v3606 = vand.u32 %v363, 4294901760
    %3607 = vmatpush.msra.mxu0 %v3606
    %v3608 = vand.u32 %v361, 4294901760
    %3609 = vmatpush.msra.mxu0 %v3608
    %v3610 = vand.u32 %v359, 4294901760
    %3611 = vmatpush.msra.mxu0 %v3610
    %v3612 = vand.u32 %v357, 4294901760
    %3613 = vmatpush.msra.mxu0 %v3612
    %v3614 = vand.u32 %v355, 4294901760
    %3615 = vmatpush.msra.mxu0 %v3614
    %v3616 = vand.u32 %v353, 4294901760
    %3617 = vmatpush.msra.mxu0 %v3616
    %v3618 = vand.u32 %v351, 4294901760
    %3619 = vmatpush.msra.mxu0 %v3618
    %v3620 = vand.u32 %v349, 4294901760
    %3621 = vmatpush.msra.mxu0 %v3620
    %v3622 = vand.u32 %v347, 4294901760
    %3623 = vmatpush.msra.mxu0 %v3622
    %v3624 = vand.u32 %v345, 4294901760
    %3625 = vmatpush.msra.mxu0 %v3624
    %v3626 = vand.u32 %v343, 4294901760
    %3627 = vmatpush.msra.mxu0 %v3626
    %v3628 = vand.u32 %v341, 4294901760
    %3629 = vmatpush.msra.mxu0 %v3628
    %v3630 = vand.u32 %v339, 4294901760
    %3631 = vmatpush.msra.mxu0 %v3630
    %v3632 = vand.u32 %v337, 4294901760
    %3633 = vmatpush.msra.mxu0 %v3632
    %v3634 = vand.u32 %v2713, 4294901760
    %v3635 = vsub.f32 %v2713, %v3634
    %v3636 = vand.u32 %v3635, 4294901760
    %3637 = vmatmul.f32.gmra.mxu0 %v3636
    %v3638 = vpop.f32.mrf.mxu0
    %v3639 = vadd.f32 %v3565, %v3638
    %v3640 = vand.u32 %v2714, 4294901760
    %v3641 = vsub.f32 %v2714, %v3640
    %v3642 = vand.u32 %v3641, 4294901760
    %3643 = vmatmul.f32.gmra.mxu0 %v3642
    %v3644 = vpop.f32.mrf.mxu0
    %v3645 = vadd.f32 %v3570, %v3644
    %v3646 = vand.u32 %v2715, 4294901760
    %v3647 = vsub.f32 %v2715, %v3646
    %v3648 = vand.u32 %v3647, 4294901760
    %3649 = vmatmul.f32.gmra.mxu0 %v3648
    %v3650 = vpop.f32.mrf.mxu0
    %v3651 = vadd.f32 %v3575, %v3650
    %v3652 = vand.u32 %v2716, 4294901760
    %v3653 = vsub.f32 %v2716, %v3652
    %v3654 = vand.u32 %v3653, 4294901760
    %3655 = vmatmul.f32.gmra.mxu0 %v3654
    %v3656 = vpop.f32.mrf.mxu0
    %v3657 = vadd.f32 %v3580, %v3656
    %v3658 = vand.u32 %v2717, 4294901760
    %v3659 = vsub.f32 %v2717, %v3658
    %v3660 = vand.u32 %v3659, 4294901760
    %3661 = vmatmul.f32.gmra.mxu0 %v3660
    %v3662 = vpop.f32.mrf.mxu0
    %v3663 = vadd.f32 %v3585, %v3662
    %v3664 = vand.u32 %v2718, 4294901760
    %v3665 = vsub.f32 %v2718, %v3664
    %v3666 = vand.u32 %v3665, 4294901760
    %3667 = vmatmul.f32.gmra.mxu0 %v3666
    %v3668 = vpop.f32.mrf.mxu0
    %v3669 = vadd.f32 %v3590, %v3668
    %v3670 = vand.u32 %v2719, 4294901760
    %v3671 = vsub.f32 %v2719, %v3670
    %v3672 = vand.u32 %v3671, 4294901760
    %3673 = vmatmul.f32.gmra.mxu0 %v3672
    %v3674 = vpop.f32.mrf.mxu0
    %v3675 = vadd.f32 %v3595, %v3674
    %v3676 = vand.u32 %v2720, 4294901760
    %v3677 = vsub.f32 %v2720, %v3676
    %v3678 = vand.u32 %v3677, 4294901760
    %3679 = vmatmul.f32.gmra.mxu0 %v3678
    %v3680 = vpop.f32.mrf.mxu0
    %v3681 = vadd.f32 %v3600, %v3680
    %3682 = vdwg.mxu0
    %v3683 = vand.u32 %v367, 4294901760
    %v3684 = vsub.f32 %v367, %v3683
    %v3685 = vand.u32 %v3684, 4294901760
    %3686 = vmatpush.msra.mxu0 %v3685
    %v3687 = vand.u32 %v365, 4294901760
    %v3688 = vsub.f32 %v365, %v3687
    %v3689 = vand.u32 %v3688, 4294901760
    %3690 = vmatpush.msra.mxu0 %v3689
    %v3691 = vand.u32 %v363, 4294901760
    %v3692 = vsub.f32 %v363, %v3691
    %v3693 = vand.u32 %v3692, 4294901760
    %3694 = vmatpush.msra.mxu0 %v3693
    %v3695 = vand.u32 %v361, 4294901760
    %v3696 = vsub.f32 %v361, %v3695
    %v3697 = vand.u32 %v3696, 4294901760
    %3698 = vmatpush.msra.mxu0 %v3697
    %v3699 = vand.u32 %v359, 4294901760
    %v3700 = vsub.f32 %v359, %v3699
    %v3701 = vand.u32 %v3700, 4294901760
    %3702 = vmatpush.msra.mxu0 %v3701
    %v3703 = vand.u32 %v357, 4294901760
    %v3704 = vsub.f32 %v357, %v3703
    %v3705 = vand.u32 %v3704, 4294901760
    %3706 = vmatpush.msra.mxu0 %v3705
    %v3707 = vand.u32 %v355, 4294901760
    %v3708 = vsub.f32 %v355, %v3707
    %v3709 = vand.u32 %v3708, 4294901760
    %3710 = vmatpush.msra.mxu0 %v3709
    %v3711 = vand.u32 %v353, 4294901760
    %v3712 = vsub.f32 %v353, %v3711
    %v3713 = vand.u32 %v3712, 4294901760
    %3714 = vmatpush.msra.mxu0 %v3713
    %v3715 = vand.u32 %v351, 4294901760
    %v3716 = vsub.f32 %v351, %v3715
    %v3717 = vand.u32 %v3716, 4294901760
    %3718 = vmatpush.msra.mxu0 %v3717
    %v3719 = vand.u32 %v349, 4294901760
    %v3720 = vsub.f32 %v349, %v3719
    %v3721 = vand.u32 %v3720, 4294901760
    %3722 = vmatpush.msra.mxu0 %v3721
    %v3723 = vand.u32 %v347, 4294901760
    %v3724 = vsub.f32 %v347, %v3723
    %v3725 = vand.u32 %v3724, 4294901760
    %3726 = vmatpush.msra.mxu0 %v3725
    %v3727 = vand.u32 %v345, 4294901760
    %v3728 = vsub.f32 %v345, %v3727
    %v3729 = vand.u32 %v3728, 4294901760
    %3730 = vmatpush.msra.mxu0 %v3729
    %v3731 = vand.u32 %v343, 4294901760
    %v3732 = vsub.f32 %v343, %v3731
    %v3733 = vand.u32 %v3732, 4294901760
    %3734 = vmatpush.msra.mxu0 %v3733
    %v3735 = vand.u32 %v341, 4294901760
    %v3736 = vsub.f32 %v341, %v3735
    %v3737 = vand.u32 %v3736, 4294901760
    %3738 = vmatpush.msra.mxu0 %v3737
    %v3739 = vand.u32 %v339, 4294901760
    %v3740 = vsub.f32 %v339, %v3739
    %v3741 = vand.u32 %v3740, 4294901760
    %3742 = vmatpush.msra.mxu0 %v3741
    %v3743 = vand.u32 %v337, 4294901760
    %v3744 = vsub.f32 %v337, %v3743
    %v3745 = vand.u32 %v3744, 4294901760
    %3746 = vmatpush.msra.mxu0 %v3745
    %v3747 = vand.u32 %v2713, 4294901760
    %3748 = vmatmul.f32.gmra.mxu0 %v3747
    %v3749 = vpop.f32.mrf.mxu0
    %v3750 = vadd.f32 %v3639, %v3749
    %v3751 = vand.u32 %v2714, 4294901760
    %3752 = vmatmul.f32.gmra.mxu0 %v3751
    %v3753 = vpop.f32.mrf.mxu0
    %v3754 = vadd.f32 %v3645, %v3753
    %v3755 = vand.u32 %v2715, 4294901760
    %3756 = vmatmul.f32.gmra.mxu0 %v3755
    %v3757 = vpop.f32.mrf.mxu0
    %v3758 = vadd.f32 %v3651, %v3757
    %v3759 = vand.u32 %v2716, 4294901760
    %3760 = vmatmul.f32.gmra.mxu0 %v3759
    %v3761 = vpop.f32.mrf.mxu0
    %v3762 = vadd.f32 %v3657, %v3761
    %v3763 = vand.u32 %v2717, 4294901760
    %3764 = vmatmul.f32.gmra.mxu0 %v3763
    %v3765 = vpop.f32.mrf.mxu0
    %v3766 = vadd.f32 %v3663, %v3765
    %v3767 = vand.u32 %v2718, 4294901760
    %3768 = vmatmul.f32.gmra.mxu0 %v3767
    %v3769 = vpop.f32.mrf.mxu0
    %v3770 = vadd.f32 %v3669, %v3769
    %v3771 = vand.u32 %v2719, 4294901760
    %3772 = vmatmul.f32.gmra.mxu0 %v3771
    %v3773 = vpop.f32.mrf.mxu0
    %v3774 = vadd.f32 %v3675, %v3773
    %v3775 = vand.u32 %v2720, 4294901760
    %3776 = vmatmul.f32.gmra.mxu0 %v3775
    %v3777 = vpop.f32.mrf.mxu0
    %v3778 = vadd.f32 %v3681, %v3777
    %3779 = vdwg.mxu0
    %v3780 = vand.u32 %v367, 4294901760
    %3781 = vmatpush.msra.mxu0 %v3780
    %v3782 = vand.u32 %v365, 4294901760
    %3783 = vmatpush.msra.mxu0 %v3782
    %v3784 = vand.u32 %v363, 4294901760
    %3785 = vmatpush.msra.mxu0 %v3784
    %v3786 = vand.u32 %v361, 4294901760
    %3787 = vmatpush.msra.mxu0 %v3786
    %v3788 = vand.u32 %v359, 4294901760
    %3789 = vmatpush.msra.mxu0 %v3788
    %v3790 = vand.u32 %v357, 4294901760
    %3791 = vmatpush.msra.mxu0 %v3790
    %v3792 = vand.u32 %v355, 4294901760
    %3793 = vmatpush.msra.mxu0 %v3792
    %v3794 = vand.u32 %v353, 4294901760
    %3795 = vmatpush.msra.mxu0 %v3794
    %v3796 = vand.u32 %v351, 4294901760
    %3797 = vmatpush.msra.mxu0 %v3796
    %v3798 = vand.u32 %v349, 4294901760
    %3799 = vmatpush.msra.mxu0 %v3798
    %v3800 = vand.u32 %v347, 4294901760
    %3801 = vmatpush.msra.mxu0 %v3800
    %v3802 = vand.u32 %v345, 4294901760
    %3803 = vmatpush.msra.mxu0 %v3802
    %v3804 = vand.u32 %v343, 4294901760
    %3805 = vmatpush.msra.mxu0 %v3804
    %v3806 = vand.u32 %v341, 4294901760
    %3807 = vmatpush.msra.mxu0 %v3806
    %v3808 = vand.u32 %v339, 4294901760
    %3809 = vmatpush.msra.mxu0 %v3808
    %v3810 = vand.u32 %v337, 4294901760
    %3811 = vmatpush.msra.mxu0 %v3810
    %v3812 = vand.u32 %v2713, 4294901760
    %3813 = vmatmul.f32.gmra.mxu0 %v3812
    %v3814 = vpop.f32.mrf.mxu0
    %v3815 = vadd.f32 %v3750, %v3814
    %v3816 = vand.u32 %v2714, 4294901760
    %3817 = vmatmul.f32.gmra.mxu0 %v3816
    %v3818 = vpop.f32.mrf.mxu0
    %v3819 = vadd.f32 %v3754, %v3818
    %v3820 = vand.u32 %v2715, 4294901760
    %3821 = vmatmul.f32.gmra.mxu0 %v3820
    %v3822 = vpop.f32.mrf.mxu0
    %v3823 = vadd.f32 %v3758, %v3822
    %v3824 = vand.u32 %v2716, 4294901760
    %3825 = vmatmul.f32.gmra.mxu0 %v3824
    %v3826 = vpop.f32.mrf.mxu0
    %v3827 = vadd.f32 %v3762, %v3826
    %v3828 = vand.u32 %v2717, 4294901760
    %3829 = vmatmul.f32.gmra.mxu0 %v3828
    %v3830 = vpop.f32.mrf.mxu0
    %v3831 = vadd.f32 %v3766, %v3830
    %v3832 = vand.u32 %v2718, 4294901760
    %3833 = vmatmul.f32.gmra.mxu0 %v3832
    %v3834 = vpop.f32.mrf.mxu0
    %v3835 = vadd.f32 %v3770, %v3834
    %v3836 = vand.u32 %v2719, 4294901760
    %3837 = vmatmul.f32.gmra.mxu0 %v3836
    %v3838 = vpop.f32.mrf.mxu0
    %v3839 = vadd.f32 %v3774, %v3838
    %v3840 = vand.u32 %v2720, 4294901760
    %3841 = vmatmul.f32.gmra.mxu0 %v3840
    %v3842 = vpop.f32.mrf.mxu0
    %v3843 = vadd.f32 %v3778, %v3842
    %3844 = vdwg.mxu0
    %v3845 = vand.u32 %v336, 4294901760
    %3846 = vmatpush.msra.mxu0 %v3845
    %v3847 = vand.u32 %v334, 4294901760
    %3848 = vmatpush.msra.mxu0 %v3847
    %v3849 = vand.u32 %v332, 4294901760
    %3850 = vmatpush.msra.mxu0 %v3849
    %v3851 = vand.u32 %v330, 4294901760
    %3852 = vmatpush.msra.mxu0 %v3851
    %v3853 = vand.u32 %v328, 4294901760
    %3854 = vmatpush.msra.mxu0 %v3853
    %v3855 = vand.u32 %v326, 4294901760
    %3856 = vmatpush.msra.mxu0 %v3855
    %v3857 = vand.u32 %v324, 4294901760
    %3858 = vmatpush.msra.mxu0 %v3857
    %v3859 = vand.u32 %v322, 4294901760
    %3860 = vmatpush.msra.mxu0 %v3859
    %v3861 = vand.u32 %v320, 4294901760
    %3862 = vmatpush.msra.mxu0 %v3861
    %v3863 = vand.u32 %v318, 4294901760
    %3864 = vmatpush.msra.mxu0 %v3863
    %v3865 = vand.u32 %v316, 4294901760
    %3866 = vmatpush.msra.mxu0 %v3865
    %v3867 = vand.u32 %v314, 4294901760
    %3868 = vmatpush.msra.mxu0 %v3867
    %v3869 = vand.u32 %v312, 4294901760
    %3870 = vmatpush.msra.mxu0 %v3869
    %v3871 = vand.u32 %v310, 4294901760
    %3872 = vmatpush.msra.mxu0 %v3871
    %v3873 = vand.u32 %v308, 4294901760
    %3874 = vmatpush.msra.mxu0 %v3873
    %v3875 = vand.u32 %v306, 4294901760
    %3876 = vmatpush.msra.mxu0 %v3875
    %v3877 = vand.u32 %v2681, 4294901760
    %v3878 = vsub.f32 %v2681, %v3877
    %v3879 = vand.u32 %v3878, 4294901760
    %v3880 = vsub.f32 %v3878, %v3879
    %v3881 = vand.u32 %v3880, 4294901760
    %3882 = vmatmul.f32.gmra.mxu0 %v3881
    %v3883 = vpop.f32.mrf.mxu0
    %v3884 = vadd.f32 0.0, %v3883
    %v3885 = vand.u32 %v2682, 4294901760
    %v3886 = vsub.f32 %v2682, %v3885
    %v3887 = vand.u32 %v3886, 4294901760
    %v3888 = vsub.f32 %v3886, %v3887
    %v3889 = vand.u32 %v3888, 4294901760
    %3890 = vmatmul.f32.gmra.mxu0 %v3889
    %v3891 = vpop.f32.mrf.mxu0
    %v3892 = vadd.f32 0.0, %v3891
    %v3893 = vand.u32 %v2683, 4294901760
    %v3894 = vsub.f32 %v2683, %v3893
    %v3895 = vand.u32 %v3894, 4294901760
    %v3896 = vsub.f32 %v3894, %v3895
    %v3897 = vand.u32 %v3896, 4294901760
    %3898 = vmatmul.f32.gmra.mxu0 %v3897
    %v3899 = vpop.f32.mrf.mxu0
    %v3900 = vadd.f32 0.0, %v3899
    %v3901 = vand.u32 %v2684, 4294901760
    %v3902 = vsub.f32 %v2684, %v3901
    %v3903 = vand.u32 %v3902, 4294901760
    %v3904 = vsub.f32 %v3902, %v3903
    %v3905 = vand.u32 %v3904, 4294901760
    %3906 = vmatmul.f32.gmra.mxu0 %v3905
    %v3907 = vpop.f32.mrf.mxu0
    %v3908 = vadd.f32 0.0, %v3907
    %v3909 = vand.u32 %v2685, 4294901760
    %v3910 = vsub.f32 %v2685, %v3909
    %v3911 = vand.u32 %v3910, 4294901760
    %v3912 = vsub.f32 %v3910, %v3911
    %v3913 = vand.u32 %v3912, 4294901760
    %3914 = vmatmul.f32.gmra.mxu0 %v3913
    %v3915 = vpop.f32.mrf.mxu0
    %v3916 = vadd.f32 0.0, %v3915
    %v3917 = vand.u32 %v2686, 4294901760
    %v3918 = vsub.f32 %v2686, %v3917
    %v3919 = vand.u32 %v3918, 4294901760
    %v3920 = vsub.f32 %v3918, %v3919
    %v3921 = vand.u32 %v3920, 4294901760
    %3922 = vmatmul.f32.gmra.mxu0 %v3921
    %v3923 = vpop.f32.mrf.mxu0
    %v3924 = vadd.f32 0.0, %v3923
    %v3925 = vand.u32 %v2687, 4294901760
    %v3926 = vsub.f32 %v2687, %v3925
    %v3927 = vand.u32 %v3926, 4294901760
    %v3928 = vsub.f32 %v3926, %v3927
    %v3929 = vand.u32 %v3928, 4294901760
    %3930 = vmatmul.f32.gmra.mxu0 %v3929
    %v3931 = vpop.f32.mrf.mxu0
    %v3932 = vadd.f32 0.0, %v3931
    %v3933 = vand.u32 %v2688, 4294901760
    %v3934 = vsub.f32 %v2688, %v3933
    %v3935 = vand.u32 %v3934, 4294901760
    %v3936 = vsub.f32 %v3934, %v3935
    %v3937 = vand.u32 %v3936, 4294901760
    %3938 = vmatmul.f32.gmra.mxu0 %v3937
    %v3939 = vpop.f32.mrf.mxu0
    %v3940 = vadd.f32 0.0, %v3939
    %3941 = vdwg.mxu0
    %v3942 = vand.u32 %v336, 4294901760
    %v3943 = vsub.f32 %v336, %v3942
    %v3944 = vand.u32 %v3943, 4294901760
    %v3945 = vsub.f32 %v3943, %v3944
    %v3946 = vand.u32 %v3945, 4294901760
    %3947 = vmatpush.msra.mxu0 %v3946
    %v3948 = vand.u32 %v334, 4294901760
    %v3949 = vsub.f32 %v334, %v3948
    %v3950 = vand.u32 %v3949, 4294901760
    %v3951 = vsub.f32 %v3949, %v3950
    %v3952 = vand.u32 %v3951, 4294901760
    %3953 = vmatpush.msra.mxu0 %v3952
    %v3954 = vand.u32 %v332, 4294901760
    %v3955 = vsub.f32 %v332, %v3954
    %v3956 = vand.u32 %v3955, 4294901760
    %v3957 = vsub.f32 %v3955, %v3956
    %v3958 = vand.u32 %v3957, 4294901760
    %3959 = vmatpush.msra.mxu0 %v3958
    %v3960 = vand.u32 %v330, 4294901760
    %v3961 = vsub.f32 %v330, %v3960
    %v3962 = vand.u32 %v3961, 4294901760
    %v3963 = vsub.f32 %v3961, %v3962
    %v3964 = vand.u32 %v3963, 4294901760
    %3965 = vmatpush.msra.mxu0 %v3964
    %v3966 = vand.u32 %v328, 4294901760
    %v3967 = vsub.f32 %v328, %v3966
    %v3968 = vand.u32 %v3967, 4294901760
    %v3969 = vsub.f32 %v3967, %v3968
    %v3970 = vand.u32 %v3969, 4294901760
    %3971 = vmatpush.msra.mxu0 %v3970
    %v3972 = vand.u32 %v326, 4294901760
    %v3973 = vsub.f32 %v326, %v3972
    %v3974 = vand.u32 %v3973, 4294901760
    %v3975 = vsub.f32 %v3973, %v3974
    %v3976 = vand.u32 %v3975, 4294901760
    %3977 = vmatpush.msra.mxu0 %v3976
    %v3978 = vand.u32 %v324, 4294901760
    %v3979 = vsub.f32 %v324, %v3978
    %v3980 = vand.u32 %v3979, 4294901760
    %v3981 = vsub.f32 %v3979, %v3980
    %v3982 = vand.u32 %v3981, 4294901760
    %3983 = vmatpush.msra.mxu0 %v3982
    %v3984 = vand.u32 %v322, 4294901760
    %v3985 = vsub.f32 %v322, %v3984
    %v3986 = vand.u32 %v3985, 4294901760
    %v3987 = vsub.f32 %v3985, %v3986
    %v3988 = vand.u32 %v3987, 4294901760
    %3989 = vmatpush.msra.mxu0 %v3988
    %v3990 = vand.u32 %v320, 4294901760
    %v3991 = vsub.f32 %v320, %v3990
    %v3992 = vand.u32 %v3991, 4294901760
    %v3993 = vsub.f32 %v3991, %v3992
    %v3994 = vand.u32 %v3993, 4294901760
    %3995 = vmatpush.msra.mxu0 %v3994
    %v3996 = vand.u32 %v318, 4294901760
    %v3997 = vsub.f32 %v318, %v3996
    %v3998 = vand.u32 %v3997, 4294901760
    %v3999 = vsub.f32 %v3997, %v3998
    %v4000 = vand.u32 %v3999, 4294901760
    %4001 = vmatpush.msra.mxu0 %v4000
    %v4002 = vand.u32 %v316, 4294901760
    %v4003 = vsub.f32 %v316, %v4002
    %v4004 = vand.u32 %v4003, 4294901760
    %v4005 = vsub.f32 %v4003, %v4004
    %v4006 = vand.u32 %v4005, 4294901760
    %4007 = vmatpush.msra.mxu0 %v4006
    %v4008 = vand.u32 %v314, 4294901760
    %v4009 = vsub.f32 %v314, %v4008
    %v4010 = vand.u32 %v4009, 4294901760
    %v4011 = vsub.f32 %v4009, %v4010
    %v4012 = vand.u32 %v4011, 4294901760
    %4013 = vmatpush.msra.mxu0 %v4012
    %v4014 = vand.u32 %v312, 4294901760
    %v4015 = vsub.f32 %v312, %v4014
    %v4016 = vand.u32 %v4015, 4294901760
    %v4017 = vsub.f32 %v4015, %v4016
    %v4018 = vand.u32 %v4017, 4294901760
    %4019 = vmatpush.msra.mxu0 %v4018
    %v4020 = vand.u32 %v310, 4294901760
    %v4021 = vsub.f32 %v310, %v4020
    %v4022 = vand.u32 %v4021, 4294901760
    %v4023 = vsub.f32 %v4021, %v4022
    %v4024 = vand.u32 %v4023, 4294901760
    %4025 = vmatpush.msra.mxu0 %v4024
    %v4026 = vand.u32 %v308, 4294901760
    %v4027 = vsub.f32 %v308, %v4026
    %v4028 = vand.u32 %v4027, 4294901760
    %v4029 = vsub.f32 %v4027, %v4028
    %v4030 = vand.u32 %v4029, 4294901760
    %4031 = vmatpush.msra.mxu0 %v4030
    %v4032 = vand.u32 %v306, 4294901760
    %v4033 = vsub.f32 %v306, %v4032
    %v4034 = vand.u32 %v4033, 4294901760
    %v4035 = vsub.f32 %v4033, %v4034
    %v4036 = vand.u32 %v4035, 4294901760
    %4037 = vmatpush.msra.mxu0 %v4036
    %v4038 = vand.u32 %v2681, 4294901760
    %4039 = vmatmul.f32.gmra.mxu0 %v4038
    %v4040 = vpop.f32.mrf.mxu0
    %v4041 = vadd.f32 %v3884, %v4040
    %v4042 = vand.u32 %v2682, 4294901760
    %4043 = vmatmul.f32.gmra.mxu0 %v4042
    %v4044 = vpop.f32.mrf.mxu0
    %v4045 = vadd.f32 %v3892, %v4044
    %v4046 = vand.u32 %v2683, 4294901760
    %4047 = vmatmul.f32.gmra.mxu0 %v4046
    %v4048 = vpop.f32.mrf.mxu0
    %v4049 = vadd.f32 %v3900, %v4048
    %v4050 = vand.u32 %v2684, 4294901760
    %4051 = vmatmul.f32.gmra.mxu0 %v4050
    %v4052 = vpop.f32.mrf.mxu0
    %v4053 = vadd.f32 %v3908, %v4052
    %v4054 = vand.u32 %v2685, 4294901760
    %4055 = vmatmul.f32.gmra.mxu0 %v4054
    %v4056 = vpop.f32.mrf.mxu0
    %v4057 = vadd.f32 %v3916, %v4056
    %v4058 = vand.u32 %v2686, 4294901760
    %4059 = vmatmul.f32.gmra.mxu0 %v4058
    %v4060 = vpop.f32.mrf.mxu0
    %v4061 = vadd.f32 %v3924, %v4060
    %v4062 = vand.u32 %v2687, 4294901760
    %4063 = vmatmul.f32.gmra.mxu0 %v4062
    %v4064 = vpop.f32.mrf.mxu0
    %v4065 = vadd.f32 %v3932, %v4064
    %v4066 = vand.u32 %v2688, 4294901760
    %4067 = vmatmul.f32.gmra.mxu0 %v4066
    %v4068 = vpop.f32.mrf.mxu0
    %v4069 = vadd.f32 %v3940, %v4068
    %4070 = vdwg.mxu0
    %v4071 = vand.u32 %v336, 4294901760
    %v4072 = vsub.f32 %v336, %v4071
    %4073 = vmatpush.msra.mxu0 %v4072
    %v4074 = vand.u32 %v334, 4294901760
    %v4075 = vsub.f32 %v334, %v4074
    %4076 = vmatpush.msra.mxu0 %v4075
    %v4077 = vand.u32 %v332, 4294901760
    %v4078 = vsub.f32 %v332, %v4077
    %4079 = vmatpush.msra.mxu0 %v4078
    %v4080 = vand.u32 %v330, 4294901760
    %v4081 = vsub.f32 %v330, %v4080
    %4082 = vmatpush.msra.mxu0 %v4081
    %v4083 = vand.u32 %v328, 4294901760
    %v4084 = vsub.f32 %v328, %v4083
    %4085 = vmatpush.msra.mxu0 %v4084
    %v4086 = vand.u32 %v326, 4294901760
    %v4087 = vsub.f32 %v326, %v4086
    %4088 = vmatpush.msra.mxu0 %v4087
    %v4089 = vand.u32 %v324, 4294901760
    %v4090 = vsub.f32 %v324, %v4089
    %4091 = vmatpush.msra.mxu0 %v4090
    %v4092 = vand.u32 %v322, 4294901760
    %v4093 = vsub.f32 %v322, %v4092
    %4094 = vmatpush.msra.mxu0 %v4093
    %v4095 = vand.u32 %v320, 4294901760
    %v4096 = vsub.f32 %v320, %v4095
    %4097 = vmatpush.msra.mxu0 %v4096
    %v4098 = vand.u32 %v318, 4294901760
    %v4099 = vsub.f32 %v318, %v4098
    %4100 = vmatpush.msra.mxu0 %v4099
    %v4101 = vand.u32 %v316, 4294901760
    %v4102 = vsub.f32 %v316, %v4101
    %4103 = vmatpush.msra.mxu0 %v4102
    %v4104 = vand.u32 %v314, 4294901760
    %v4105 = vsub.f32 %v314, %v4104
    %4106 = vmatpush.msra.mxu0 %v4105
    %v4107 = vand.u32 %v312, 4294901760
    %v4108 = vsub.f32 %v312, %v4107
    %4109 = vmatpush.msra.mxu0 %v4108
    %v4110 = vand.u32 %v310, 4294901760
    %v4111 = vsub.f32 %v310, %v4110
    %4112 = vmatpush.msra.mxu0 %v4111
    %v4113 = vand.u32 %v308, 4294901760
    %v4114 = vsub.f32 %v308, %v4113
    %4115 = vmatpush.msra.mxu0 %v4114
    %v4116 = vand.u32 %v306, 4294901760
    %v4117 = vsub.f32 %v306, %v4116
    %4118 = vmatpush.msra.mxu0 %v4117
    %v4119 = vand.u32 %v2681, 4294901760
    %v4120 = vsub.f32 %v2681, %v4119
    %4121 = vmatmul.f32.gmra.mxu0 %v4120
    %v4122 = vpop.f32.mrf.mxu0
    %v4123 = vadd.f32 %v4041, %v4122
    %v4124 = vand.u32 %v2682, 4294901760
    %v4125 = vsub.f32 %v2682, %v4124
    %4126 = vmatmul.f32.gmra.mxu0 %v4125
    %v4127 = vpop.f32.mrf.mxu0
    %v4128 = vadd.f32 %v4045, %v4127
    %v4129 = vand.u32 %v2683, 4294901760
    %v4130 = vsub.f32 %v2683, %v4129
    %4131 = vmatmul.f32.gmra.mxu0 %v4130
    %v4132 = vpop.f32.mrf.mxu0
    %v4133 = vadd.f32 %v4049, %v4132
    %v4134 = vand.u32 %v2684, 4294901760
    %v4135 = vsub.f32 %v2684, %v4134
    %4136 = vmatmul.f32.gmra.mxu0 %v4135
    %v4137 = vpop.f32.mrf.mxu0
    %v4138 = vadd.f32 %v4053, %v4137
    %v4139 = vand.u32 %v2685, 4294901760
    %v4140 = vsub.f32 %v2685, %v4139
    %4141 = vmatmul.f32.gmra.mxu0 %v4140
    %v4142 = vpop.f32.mrf.mxu0
    %v4143 = vadd.f32 %v4057, %v4142
    %v4144 = vand.u32 %v2686, 4294901760
    %v4145 = vsub.f32 %v2686, %v4144
    %4146 = vmatmul.f32.gmra.mxu0 %v4145
    %v4147 = vpop.f32.mrf.mxu0
    %v4148 = vadd.f32 %v4061, %v4147
    %v4149 = vand.u32 %v2687, 4294901760
    %v4150 = vsub.f32 %v2687, %v4149
    %4151 = vmatmul.f32.gmra.mxu0 %v4150
    %v4152 = vpop.f32.mrf.mxu0
    %v4153 = vadd.f32 %v4065, %v4152
    %v4154 = vand.u32 %v2688, 4294901760
    %v4155 = vsub.f32 %v2688, %v4154
    %4156 = vmatmul.f32.gmra.mxu0 %v4155
    %v4157 = vpop.f32.mrf.mxu0
    %v4158 = vadd.f32 %v4069, %v4157
    %4159 = vdwg.mxu0
    %v4160 = vand.u32 %v336, 4294901760
    %4161 = vmatpush.msra.mxu0 %v4160
    %v4162 = vand.u32 %v334, 4294901760
    %4163 = vmatpush.msra.mxu0 %v4162
    %v4164 = vand.u32 %v332, 4294901760
    %4165 = vmatpush.msra.mxu0 %v4164
    %v4166 = vand.u32 %v330, 4294901760
    %4167 = vmatpush.msra.mxu0 %v4166
    %v4168 = vand.u32 %v328, 4294901760
    %4169 = vmatpush.msra.mxu0 %v4168
    %v4170 = vand.u32 %v326, 4294901760
    %4171 = vmatpush.msra.mxu0 %v4170
    %v4172 = vand.u32 %v324, 4294901760
    %4173 = vmatpush.msra.mxu0 %v4172
    %v4174 = vand.u32 %v322, 4294901760
    %4175 = vmatpush.msra.mxu0 %v4174
    %v4176 = vand.u32 %v320, 4294901760
    %4177 = vmatpush.msra.mxu0 %v4176
    %v4178 = vand.u32 %v318, 4294901760
    %4179 = vmatpush.msra.mxu0 %v4178
    %v4180 = vand.u32 %v316, 4294901760
    %4181 = vmatpush.msra.mxu0 %v4180
    %v4182 = vand.u32 %v314, 4294901760
    %4183 = vmatpush.msra.mxu0 %v4182
    %v4184 = vand.u32 %v312, 4294901760
    %4185 = vmatpush.msra.mxu0 %v4184
    %v4186 = vand.u32 %v310, 4294901760
    %4187 = vmatpush.msra.mxu0 %v4186
    %v4188 = vand.u32 %v308, 4294901760
    %4189 = vmatpush.msra.mxu0 %v4188
    %v4190 = vand.u32 %v306, 4294901760
    %4191 = vmatpush.msra.mxu0 %v4190
    %v4192 = vand.u32 %v2681, 4294901760
    %v4193 = vsub.f32 %v2681, %v4192
    %v4194 = vand.u32 %v4193, 4294901760
    %4195 = vmatmul.f32.gmra.mxu0 %v4194
    %v4196 = vpop.f32.mrf.mxu0
    %v4197 = vadd.f32 %v4123, %v4196
    %v4198 = vand.u32 %v2682, 4294901760
    %v4199 = vsub.f32 %v2682, %v4198
    %v4200 = vand.u32 %v4199, 4294901760
    %4201 = vmatmul.f32.gmra.mxu0 %v4200
    %v4202 = vpop.f32.mrf.mxu0
    %v4203 = vadd.f32 %v4128, %v4202
    %v4204 = vand.u32 %v2683, 4294901760
    %v4205 = vsub.f32 %v2683, %v4204
    %v4206 = vand.u32 %v4205, 4294901760
    %4207 = vmatmul.f32.gmra.mxu0 %v4206
    %v4208 = vpop.f32.mrf.mxu0
    %v4209 = vadd.f32 %v4133, %v4208
    %v4210 = vand.u32 %v2684, 4294901760
    %v4211 = vsub.f32 %v2684, %v4210
    %v4212 = vand.u32 %v4211, 4294901760
    %4213 = vmatmul.f32.gmra.mxu0 %v4212
    %v4214 = vpop.f32.mrf.mxu0
    %v4215 = vadd.f32 %v4138, %v4214
    %v4216 = vand.u32 %v2685, 4294901760
    %v4217 = vsub.f32 %v2685, %v4216
    %v4218 = vand.u32 %v4217, 4294901760
    %4219 = vmatmul.f32.gmra.mxu0 %v4218
    %v4220 = vpop.f32.mrf.mxu0
    %v4221 = vadd.f32 %v4143, %v4220
    %v4222 = vand.u32 %v2686, 4294901760
    %v4223 = vsub.f32 %v2686, %v4222
    %v4224 = vand.u32 %v4223, 4294901760
    %4225 = vmatmul.f32.gmra.mxu0 %v4224
    %v4226 = vpop.f32.mrf.mxu0
    %v4227 = vadd.f32 %v4148, %v4226
    %v4228 = vand.u32 %v2687, 4294901760
    %v4229 = vsub.f32 %v2687, %v4228
    %v4230 = vand.u32 %v4229, 4294901760
    %4231 = vmatmul.f32.gmra.mxu0 %v4230
    %v4232 = vpop.f32.mrf.mxu0
    %v4233 = vadd.f32 %v4153, %v4232
    %v4234 = vand.u32 %v2688, 4294901760
    %v4235 = vsub.f32 %v2688, %v4234
    %v4236 = vand.u32 %v4235, 4294901760
    %4237 = vmatmul.f32.gmra.mxu0 %v4236
    %v4238 = vpop.f32.mrf.mxu0
    %v4239 = vadd.f32 %v4158, %v4238
    %4240 = vdwg.mxu0
    %v4241 = vand.u32 %v336, 4294901760
    %v4242 = vsub.f32 %v336, %v4241
    %v4243 = vand.u32 %v4242, 4294901760
    %4244 = vmatpush.msra.mxu0 %v4243
    %v4245 = vand.u32 %v334, 4294901760
    %v4246 = vsub.f32 %v334, %v4245
    %v4247 = vand.u32 %v4246, 4294901760
    %4248 = vmatpush.msra.mxu0 %v4247
    %v4249 = vand.u32 %v332, 4294901760
    %v4250 = vsub.f32 %v332, %v4249
    %v4251 = vand.u32 %v4250, 4294901760
    %4252 = vmatpush.msra.mxu0 %v4251
    %v4253 = vand.u32 %v330, 4294901760
    %v4254 = vsub.f32 %v330, %v4253
    %v4255 = vand.u32 %v4254, 4294901760
    %4256 = vmatpush.msra.mxu0 %v4255
    %v4257 = vand.u32 %v328, 4294901760
    %v4258 = vsub.f32 %v328, %v4257
    %v4259 = vand.u32 %v4258, 4294901760
    %4260 = vmatpush.msra.mxu0 %v4259
    %v4261 = vand.u32 %v326, 4294901760
    %v4262 = vsub.f32 %v326, %v4261
    %v4263 = vand.u32 %v4262, 4294901760
    %4264 = vmatpush.msra.mxu0 %v4263
    %v4265 = vand.u32 %v324, 4294901760
    %v4266 = vsub.f32 %v324, %v4265
    %v4267 = vand.u32 %v4266, 4294901760
    %4268 = vmatpush.msra.mxu0 %v4267
    %v4269 = vand.u32 %v322, 4294901760
    %v4270 = vsub.f32 %v322, %v4269
    %v4271 = vand.u32 %v4270, 4294901760
    %4272 = vmatpush.msra.mxu0 %v4271
    %v4273 = vand.u32 %v320, 4294901760
    %v4274 = vsub.f32 %v320, %v4273
    %v4275 = vand.u32 %v4274, 4294901760
    %4276 = vmatpush.msra.mxu0 %v4275
    %v4277 = vand.u32 %v318, 4294901760
    %v4278 = vsub.f32 %v318, %v4277
    %v4279 = vand.u32 %v4278, 4294901760
    %4280 = vmatpush.msra.mxu0 %v4279
    %v4281 = vand.u32 %v316, 4294901760
    %v4282 = vsub.f32 %v316, %v4281
    %v4283 = vand.u32 %v4282, 4294901760
    %4284 = vmatpush.msra.mxu0 %v4283
    %v4285 = vand.u32 %v314, 4294901760
    %v4286 = vsub.f32 %v314, %v4285
    %v4287 = vand.u32 %v4286, 4294901760
    %4288 = vmatpush.msra.mxu0 %v4287
    %v4289 = vand.u32 %v312, 4294901760
    %v4290 = vsub.f32 %v312, %v4289
    %v4291 = vand.u32 %v4290, 4294901760
    %4292 = vmatpush.msra.mxu0 %v4291
    %v4293 = vand.u32 %v310, 4294901760
    %v4294 = vsub.f32 %v310, %v4293
    %v4295 = vand.u32 %v4294, 4294901760
    %4296 = vmatpush.msra.mxu0 %v4295
    %v4297 = vand.u32 %v308, 4294901760
    %v4298 = vsub.f32 %v308, %v4297
    %v4299 = vand.u32 %v4298, 4294901760
    %4300 = vmatpush.msra.mxu0 %v4299
    %v4301 = vand.u32 %v306, 4294901760
    %v4302 = vsub.f32 %v306, %v4301
    %v4303 = vand.u32 %v4302, 4294901760
    %4304 = vmatpush.msra.mxu0 %v4303
    %v4305 = vand.u32 %v2681, 4294901760
    %4306 = vmatmul.f32.gmra.mxu0 %v4305
    %v4307 = vpop.f32.mrf.mxu0
    %v4308 = vadd.f32 %v4197, %v4307
    %v4309 = vand.u32 %v2682, 4294901760
    %4310 = vmatmul.f32.gmra.mxu0 %v4309
    %v4311 = vpop.f32.mrf.mxu0
    %v4312 = vadd.f32 %v4203, %v4311
    %v4313 = vand.u32 %v2683, 4294901760
    %4314 = vmatmul.f32.gmra.mxu0 %v4313
    %v4315 = vpop.f32.mrf.mxu0
    %v4316 = vadd.f32 %v4209, %v4315
    %v4317 = vand.u32 %v2684, 4294901760
    %4318 = vmatmul.f32.gmra.mxu0 %v4317
    %v4319 = vpop.f32.mrf.mxu0
    %v4320 = vadd.f32 %v4215, %v4319
    %v4321 = vand.u32 %v2685, 4294901760
    %4322 = vmatmul.f32.gmra.mxu0 %v4321
    %v4323 = vpop.f32.mrf.mxu0
    %v4324 = vadd.f32 %v4221, %v4323
    %v4325 = vand.u32 %v2686, 4294901760
    %4326 = vmatmul.f32.gmra.mxu0 %v4325
    %v4327 = vpop.f32.mrf.mxu0
    %v4328 = vadd.f32 %v4227, %v4327
    %v4329 = vand.u32 %v2687, 4294901760
    %4330 = vmatmul.f32.gmra.mxu0 %v4329
    %v4331 = vpop.f32.mrf.mxu0
    %v4332 = vadd.f32 %v4233, %v4331
    %v4333 = vand.u32 %v2688, 4294901760
    %4334 = vmatmul.f32.gmra.mxu0 %v4333
    %v4335 = vpop.f32.mrf.mxu0
    %v4336 = vadd.f32 %v4239, %v4335
    %4337 = vdwg.mxu0
    %v4338 = vand.u32 %v336, 4294901760
    %4339 = vmatpush.msra.mxu0 %v4338
    %v4340 = vand.u32 %v334, 4294901760
    %4341 = vmatpush.msra.mxu0 %v4340
    %v4342 = vand.u32 %v332, 4294901760
    %4343 = vmatpush.msra.mxu0 %v4342
    %v4344 = vand.u32 %v330, 4294901760
    %4345 = vmatpush.msra.mxu0 %v4344
    %v4346 = vand.u32 %v328, 4294901760
    %4347 = vmatpush.msra.mxu0 %v4346
    %v4348 = vand.u32 %v326, 4294901760
    %4349 = vmatpush.msra.mxu0 %v4348
    %v4350 = vand.u32 %v324, 4294901760
    %4351 = vmatpush.msra.mxu0 %v4350
    %v4352 = vand.u32 %v322, 4294901760
    %4353 = vmatpush.msra.mxu0 %v4352
    %v4354 = vand.u32 %v320, 4294901760
    %4355 = vmatpush.msra.mxu0 %v4354
    %v4356 = vand.u32 %v318, 4294901760
    %4357 = vmatpush.msra.mxu0 %v4356
    %v4358 = vand.u32 %v316, 4294901760
    %4359 = vmatpush.msra.mxu0 %v4358
    %v4360 = vand.u32 %v314, 4294901760
    %4361 = vmatpush.msra.mxu0 %v4360
    %v4362 = vand.u32 %v312, 4294901760
    %4363 = vmatpush.msra.mxu0 %v4362
    %v4364 = vand.u32 %v310, 4294901760
    %4365 = vmatpush.msra.mxu0 %v4364
    %v4366 = vand.u32 %v308, 4294901760
    %4367 = vmatpush.msra.mxu0 %v4366
    %v4368 = vand.u32 %v306, 4294901760
    %4369 = vmatpush.msra.mxu0 %v4368
    %v4370 = vand.u32 %v2681, 4294901760
    %4371 = vmatmul.f32.gmra.mxu0 %v4370
    %v4372 = vpop.f32.mrf.mxu0
    %v4373 = vadd.f32 %v4308, %v4372
    %v4374 = vand.u32 %v2682, 4294901760
    %4375 = vmatmul.f32.gmra.mxu0 %v4374
    %v4376 = vpop.f32.mrf.mxu0
    %v4377 = vadd.f32 %v4312, %v4376
    %v4378 = vand.u32 %v2683, 4294901760
    %4379 = vmatmul.f32.gmra.mxu0 %v4378
    %v4380 = vpop.f32.mrf.mxu0
    %v4381 = vadd.f32 %v4316, %v4380
    %v4382 = vand.u32 %v2684, 4294901760
    %4383 = vmatmul.f32.gmra.mxu0 %v4382
    %v4384 = vpop.f32.mrf.mxu0
    %v4385 = vadd.f32 %v4320, %v4384
    %v4386 = vand.u32 %v2685, 4294901760
    %4387 = vmatmul.f32.gmra.mxu0 %v4386
    %v4388 = vpop.f32.mrf.mxu0
    %v4389 = vadd.f32 %v4324, %v4388
    %v4390 = vand.u32 %v2686, 4294901760
    %4391 = vmatmul.f32.gmra.mxu0 %v4390
    %v4392 = vpop.f32.mrf.mxu0
    %v4393 = vadd.f32 %v4328, %v4392
    %v4394 = vand.u32 %v2687, 4294901760
    %4395 = vmatmul.f32.gmra.mxu0 %v4394
    %v4396 = vpop.f32.mrf.mxu0
    %v4397 = vadd.f32 %v4332, %v4396
    %v4398 = vand.u32 %v2688, 4294901760
    %4399 = vmatmul.f32.gmra.mxu0 %v4398
    %v4400 = vpop.f32.mrf.mxu0
    %v4401 = vadd.f32 %v4336, %v4400
    %4402 = vdwg.mxu0
    %v4403 = vand.u32 %v368, 4294901760
    %4404 = vmatpush.msra.mxu0 %v4403
    %v4405 = vand.u32 %v366, 4294901760
    %4406 = vmatpush.msra.mxu0 %v4405
    %v4407 = vand.u32 %v364, 4294901760
    %4408 = vmatpush.msra.mxu0 %v4407
    %v4409 = vand.u32 %v362, 4294901760
    %4410 = vmatpush.msra.mxu0 %v4409
    %v4411 = vand.u32 %v360, 4294901760
    %4412 = vmatpush.msra.mxu0 %v4411
    %v4413 = vand.u32 %v358, 4294901760
    %4414 = vmatpush.msra.mxu0 %v4413
    %v4415 = vand.u32 %v356, 4294901760
    %4416 = vmatpush.msra.mxu0 %v4415
    %v4417 = vand.u32 %v354, 4294901760
    %4418 = vmatpush.msra.mxu0 %v4417
    %v4419 = vand.u32 %v352, 4294901760
    %4420 = vmatpush.msra.mxu0 %v4419
    %v4421 = vand.u32 %v350, 4294901760
    %4422 = vmatpush.msra.mxu0 %v4421
    %v4423 = vand.u32 %v348, 4294901760
    %4424 = vmatpush.msra.mxu0 %v4423
    %v4425 = vand.u32 %v346, 4294901760
    %4426 = vmatpush.msra.mxu0 %v4425
    %v4427 = vand.u32 %v344, 4294901760
    %4428 = vmatpush.msra.mxu0 %v4427
    %v4429 = vand.u32 %v342, 4294901760
    %4430 = vmatpush.msra.mxu0 %v4429
    %v4431 = vand.u32 %v340, 4294901760
    %4432 = vmatpush.msra.mxu0 %v4431
    %v4433 = vand.u32 %v338, 4294901760
    %4434 = vmatpush.msra.mxu0 %v4433
    %v4435 = vand.u32 %v2713, 4294901760
    %v4436 = vsub.f32 %v2713, %v4435
    %v4437 = vand.u32 %v4436, 4294901760
    %v4438 = vsub.f32 %v4436, %v4437
    %v4439 = vand.u32 %v4438, 4294901760
    %4440 = vmatmul.f32.gmra.mxu0 %v4439
    %v4441 = vpop.f32.mrf.mxu0
    %v4442 = vadd.f32 %v4373, %v4441
    %v4443 = vand.u32 %v2714, 4294901760
    %v4444 = vsub.f32 %v2714, %v4443
    %v4445 = vand.u32 %v4444, 4294901760
    %v4446 = vsub.f32 %v4444, %v4445
    %v4447 = vand.u32 %v4446, 4294901760
    %4448 = vmatmul.f32.gmra.mxu0 %v4447
    %v4449 = vpop.f32.mrf.mxu0
    %v4450 = vadd.f32 %v4377, %v4449
    %v4451 = vand.u32 %v2715, 4294901760
    %v4452 = vsub.f32 %v2715, %v4451
    %v4453 = vand.u32 %v4452, 4294901760
    %v4454 = vsub.f32 %v4452, %v4453
    %v4455 = vand.u32 %v4454, 4294901760
    %4456 = vmatmul.f32.gmra.mxu0 %v4455
    %v4457 = vpop.f32.mrf.mxu0
    %v4458 = vadd.f32 %v4381, %v4457
    %v4459 = vand.u32 %v2716, 4294901760
    %v4460 = vsub.f32 %v2716, %v4459
    %v4461 = vand.u32 %v4460, 4294901760
    %v4462 = vsub.f32 %v4460, %v4461
    %v4463 = vand.u32 %v4462, 4294901760
    %4464 = vmatmul.f32.gmra.mxu0 %v4463
    %v4465 = vpop.f32.mrf.mxu0
    %v4466 = vadd.f32 %v4385, %v4465
    %v4467 = vand.u32 %v2717, 4294901760
    %v4468 = vsub.f32 %v2717, %v4467
    %v4469 = vand.u32 %v4468, 4294901760
    %v4470 = vsub.f32 %v4468, %v4469
    %v4471 = vand.u32 %v4470, 4294901760
    %4472 = vmatmul.f32.gmra.mxu0 %v4471
    %v4473 = vpop.f32.mrf.mxu0
    %v4474 = vadd.f32 %v4389, %v4473
    %v4475 = vand.u32 %v2718, 4294901760
    %v4476 = vsub.f32 %v2718, %v4475
    %v4477 = vand.u32 %v4476, 4294901760
    %v4478 = vsub.f32 %v4476, %v4477
    %v4479 = vand.u32 %v4478, 4294901760
    %4480 = vmatmul.f32.gmra.mxu0 %v4479
    %v4481 = vpop.f32.mrf.mxu0
    %v4482 = vadd.f32 %v4393, %v4481
    %v4483 = vand.u32 %v2719, 4294901760
    %v4484 = vsub.f32 %v2719, %v4483
    %v4485 = vand.u32 %v4484, 4294901760
    %v4486 = vsub.f32 %v4484, %v4485
    %v4487 = vand.u32 %v4486, 4294901760
    %4488 = vmatmul.f32.gmra.mxu0 %v4487
    %v4489 = vpop.f32.mrf.mxu0
    %v4490 = vadd.f32 %v4397, %v4489
    %v4491 = vand.u32 %v2720, 4294901760
    %v4492 = vsub.f32 %v2720, %v4491
    %v4493 = vand.u32 %v4492, 4294901760
    %v4494 = vsub.f32 %v4492, %v4493
    %v4495 = vand.u32 %v4494, 4294901760
    %4496 = vmatmul.f32.gmra.mxu0 %v4495
    %v4497 = vpop.f32.mrf.mxu0
    %v4498 = vadd.f32 %v4401, %v4497
    %4499 = vdwg.mxu0
    %v4500 = vand.u32 %v368, 4294901760
    %v4501 = vsub.f32 %v368, %v4500
    %v4502 = vand.u32 %v4501, 4294901760
    %v4503 = vsub.f32 %v4501, %v4502
    %v4504 = vand.u32 %v4503, 4294901760
    %4505 = vmatpush.msra.mxu0 %v4504
    %v4506 = vand.u32 %v366, 4294901760
    %v4507 = vsub.f32 %v366, %v4506
    %v4508 = vand.u32 %v4507, 4294901760
    %v4509 = vsub.f32 %v4507, %v4508
    %v4510 = vand.u32 %v4509, 4294901760
    %4511 = vmatpush.msra.mxu0 %v4510
    %v4512 = vand.u32 %v364, 4294901760
    %v4513 = vsub.f32 %v364, %v4512
    %v4514 = vand.u32 %v4513, 4294901760
    %v4515 = vsub.f32 %v4513, %v4514
    %v4516 = vand.u32 %v4515, 4294901760
    %4517 = vmatpush.msra.mxu0 %v4516
    %v4518 = vand.u32 %v362, 4294901760
    %v4519 = vsub.f32 %v362, %v4518
    %v4520 = vand.u32 %v4519, 4294901760
    %v4521 = vsub.f32 %v4519, %v4520
    %v4522 = vand.u32 %v4521, 4294901760
    %4523 = vmatpush.msra.mxu0 %v4522
    %v4524 = vand.u32 %v360, 4294901760
    %v4525 = vsub.f32 %v360, %v4524
    %v4526 = vand.u32 %v4525, 4294901760
    %v4527 = vsub.f32 %v4525, %v4526
    %v4528 = vand.u32 %v4527, 4294901760
    %4529 = vmatpush.msra.mxu0 %v4528
    %v4530 = vand.u32 %v358, 4294901760
    %v4531 = vsub.f32 %v358, %v4530
    %v4532 = vand.u32 %v4531, 4294901760
    %v4533 = vsub.f32 %v4531, %v4532
    %v4534 = vand.u32 %v4533, 4294901760
    %4535 = vmatpush.msra.mxu0 %v4534
    %v4536 = vand.u32 %v356, 4294901760
    %v4537 = vsub.f32 %v356, %v4536
    %v4538 = vand.u32 %v4537, 4294901760
    %v4539 = vsub.f32 %v4537, %v4538
    %v4540 = vand.u32 %v4539, 4294901760
    %4541 = vmatpush.msra.mxu0 %v4540
    %v4542 = vand.u32 %v354, 4294901760
    %v4543 = vsub.f32 %v354, %v4542
    %v4544 = vand.u32 %v4543, 4294901760
    %v4545 = vsub.f32 %v4543, %v4544
    %v4546 = vand.u32 %v4545, 4294901760
    %4547 = vmatpush.msra.mxu0 %v4546
    %v4548 = vand.u32 %v352, 4294901760
    %v4549 = vsub.f32 %v352, %v4548
    %v4550 = vand.u32 %v4549, 4294901760
    %v4551 = vsub.f32 %v4549, %v4550
    %v4552 = vand.u32 %v4551, 4294901760
    %4553 = vmatpush.msra.mxu0 %v4552
    %v4554 = vand.u32 %v350, 4294901760
    %v4555 = vsub.f32 %v350, %v4554
    %v4556 = vand.u32 %v4555, 4294901760
    %v4557 = vsub.f32 %v4555, %v4556
    %v4558 = vand.u32 %v4557, 4294901760
    %4559 = vmatpush.msra.mxu0 %v4558
    %v4560 = vand.u32 %v348, 4294901760
    %v4561 = vsub.f32 %v348, %v4560
    %v4562 = vand.u32 %v4561, 4294901760
    %v4563 = vsub.f32 %v4561, %v4562
    %v4564 = vand.u32 %v4563, 4294901760
    %4565 = vmatpush.msra.mxu0 %v4564
    %v4566 = vand.u32 %v346, 4294901760
    %v4567 = vsub.f32 %v346, %v4566
    %v4568 = vand.u32 %v4567, 4294901760
    %v4569 = vsub.f32 %v4567, %v4568
    %v4570 = vand.u32 %v4569, 4294901760
    %4571 = vmatpush.msra.mxu0 %v4570
    %v4572 = vand.u32 %v344, 4294901760
    %v4573 = vsub.f32 %v344, %v4572
    %v4574 = vand.u32 %v4573, 4294901760
    %v4575 = vsub.f32 %v4573, %v4574
    %v4576 = vand.u32 %v4575, 4294901760
    %4577 = vmatpush.msra.mxu0 %v4576
    %v4578 = vand.u32 %v342, 4294901760
    %v4579 = vsub.f32 %v342, %v4578
    %v4580 = vand.u32 %v4579, 4294901760
    %v4581 = vsub.f32 %v4579, %v4580
    %v4582 = vand.u32 %v4581, 4294901760
    %4583 = vmatpush.msra.mxu0 %v4582
    %v4584 = vand.u32 %v340, 4294901760
    %v4585 = vsub.f32 %v340, %v4584
    %v4586 = vand.u32 %v4585, 4294901760
    %v4587 = vsub.f32 %v4585, %v4586
    %v4588 = vand.u32 %v4587, 4294901760
    %4589 = vmatpush.msra.mxu0 %v4588
    %v4590 = vand.u32 %v338, 4294901760
    %v4591 = vsub.f32 %v338, %v4590
    %v4592 = vand.u32 %v4591, 4294901760
    %v4593 = vsub.f32 %v4591, %v4592
    %v4594 = vand.u32 %v4593, 4294901760
    %4595 = vmatpush.msra.mxu0 %v4594
    %v4596 = vand.u32 %v2713, 4294901760
    %4597 = vmatmul.f32.gmra.mxu0 %v4596
    %v4598 = vpop.f32.mrf.mxu0
    %v4599 = vadd.f32 %v4442, %v4598
    %v4600 = vand.u32 %v2714, 4294901760
    %4601 = vmatmul.f32.gmra.mxu0 %v4600
    %v4602 = vpop.f32.mrf.mxu0
    %v4603 = vadd.f32 %v4450, %v4602
    %v4604 = vand.u32 %v2715, 4294901760
    %4605 = vmatmul.f32.gmra.mxu0 %v4604
    %v4606 = vpop.f32.mrf.mxu0
    %v4607 = vadd.f32 %v4458, %v4606
    %v4608 = vand.u32 %v2716, 4294901760
    %4609 = vmatmul.f32.gmra.mxu0 %v4608
    %v4610 = vpop.f32.mrf.mxu0
    %v4611 = vadd.f32 %v4466, %v4610
    %v4612 = vand.u32 %v2717, 4294901760
    %4613 = vmatmul.f32.gmra.mxu0 %v4612
    %v4614 = vpop.f32.mrf.mxu0
    %v4615 = vadd.f32 %v4474, %v4614
    %v4616 = vand.u32 %v2718, 4294901760
    %4617 = vmatmul.f32.gmra.mxu0 %v4616
    %v4618 = vpop.f32.mrf.mxu0
    %v4619 = vadd.f32 %v4482, %v4618
    %v4620 = vand.u32 %v2719, 4294901760
    %4621 = vmatmul.f32.gmra.mxu0 %v4620
    %v4622 = vpop.f32.mrf.mxu0
    %v4623 = vadd.f32 %v4490, %v4622
    %v4624 = vand.u32 %v2720, 4294901760
    %4625 = vmatmul.f32.gmra.mxu0 %v4624
    %v4626 = vpop.f32.mrf.mxu0
    %v4627 = vadd.f32 %v4498, %v4626
    %4628 = vdwg.mxu0
    %v4629 = vand.u32 %v368, 4294901760
    %v4630 = vsub.f32 %v368, %v4629
    %4631 = vmatpush.msra.mxu0 %v4630
    %v4632 = vand.u32 %v366, 4294901760
    %v4633 = vsub.f32 %v366, %v4632
    %4634 = vmatpush.msra.mxu0 %v4633
    %v4635 = vand.u32 %v364, 4294901760
    %v4636 = vsub.f32 %v364, %v4635
    %4637 = vmatpush.msra.mxu0 %v4636
    %v4638 = vand.u32 %v362, 4294901760
    %v4639 = vsub.f32 %v362, %v4638
    %4640 = vmatpush.msra.mxu0 %v4639
    %v4641 = vand.u32 %v360, 4294901760
    %v4642 = vsub.f32 %v360, %v4641
    %4643 = vmatpush.msra.mxu0 %v4642
    %v4644 = vand.u32 %v358, 4294901760
    %v4645 = vsub.f32 %v358, %v4644
    %4646 = vmatpush.msra.mxu0 %v4645
    %v4647 = vand.u32 %v356, 4294901760
    %v4648 = vsub.f32 %v356, %v4647
    %4649 = vmatpush.msra.mxu0 %v4648
    %v4650 = vand.u32 %v354, 4294901760
    %v4651 = vsub.f32 %v354, %v4650
    %4652 = vmatpush.msra.mxu0 %v4651
    %v4653 = vand.u32 %v352, 4294901760
    %v4654 = vsub.f32 %v352, %v4653
    %4655 = vmatpush.msra.mxu0 %v4654
    %v4656 = vand.u32 %v350, 4294901760
    %v4657 = vsub.f32 %v350, %v4656
    %4658 = vmatpush.msra.mxu0 %v4657
    %v4659 = vand.u32 %v348, 4294901760
    %v4660 = vsub.f32 %v348, %v4659
    %4661 = vmatpush.msra.mxu0 %v4660
    %v4662 = vand.u32 %v346, 4294901760
    %v4663 = vsub.f32 %v346, %v4662
    %4664 = vmatpush.msra.mxu0 %v4663
    %v4665 = vand.u32 %v344, 4294901760
    %v4666 = vsub.f32 %v344, %v4665
    %4667 = vmatpush.msra.mxu0 %v4666
    %v4668 = vand.u32 %v342, 4294901760
    %v4669 = vsub.f32 %v342, %v4668
    %4670 = vmatpush.msra.mxu0 %v4669
    %v4671 = vand.u32 %v340, 4294901760
    %v4672 = vsub.f32 %v340, %v4671
    %4673 = vmatpush.msra.mxu0 %v4672
    %v4674 = vand.u32 %v338, 4294901760
    %v4675 = vsub.f32 %v338, %v4674
    %4676 = vmatpush.msra.mxu0 %v4675
    %v4677 = vand.u32 %v2713, 4294901760
    %v4678 = vsub.f32 %v2713, %v4677
    %4679 = vmatmul.f32.gmra.mxu0 %v4678
    %v4680 = vpop.f32.mrf.mxu0
    %v4681 = vadd.f32 %v4599, %v4680
    %v4682 = vand.u32 %v2714, 4294901760
    %v4683 = vsub.f32 %v2714, %v4682
    %4684 = vmatmul.f32.gmra.mxu0 %v4683
    %v4685 = vpop.f32.mrf.mxu0
    %v4686 = vadd.f32 %v4603, %v4685
    %v4687 = vand.u32 %v2715, 4294901760
    %v4688 = vsub.f32 %v2715, %v4687
    %4689 = vmatmul.f32.gmra.mxu0 %v4688
    %v4690 = vpop.f32.mrf.mxu0
    %v4691 = vadd.f32 %v4607, %v4690
    %v4692 = vand.u32 %v2716, 4294901760
    %v4693 = vsub.f32 %v2716, %v4692
    %4694 = vmatmul.f32.gmra.mxu0 %v4693
    %v4695 = vpop.f32.mrf.mxu0
    %v4696 = vadd.f32 %v4611, %v4695
    %v4697 = vand.u32 %v2717, 4294901760
    %v4698 = vsub.f32 %v2717, %v4697
    %4699 = vmatmul.f32.gmra.mxu0 %v4698
    %v4700 = vpop.f32.mrf.mxu0
    %v4701 = vadd.f32 %v4615, %v4700
    %v4702 = vand.u32 %v2718, 4294901760
    %v4703 = vsub.f32 %v2718, %v4702
    %4704 = vmatmul.f32.gmra.mxu0 %v4703
    %v4705 = vpop.f32.mrf.mxu0
    %v4706 = vadd.f32 %v4619, %v4705
    %v4707 = vand.u32 %v2719, 4294901760
    %v4708 = vsub.f32 %v2719, %v4707
    %4709 = vmatmul.f32.gmra.mxu0 %v4708
    %v4710 = vpop.f32.mrf.mxu0
    %v4711 = vadd.f32 %v4623, %v4710
    %v4712 = vand.u32 %v2720, 4294901760
    %v4713 = vsub.f32 %v2720, %v4712
    %4714 = vmatmul.f32.gmra.mxu0 %v4713
    %v4715 = vpop.f32.mrf.mxu0
    %v4716 = vadd.f32 %v4627, %v4715
    %4717 = vdwg.mxu0
    %v4718 = vand.u32 %v368, 4294901760
    %4719 = vmatpush.msra.mxu0 %v4718
    %v4720 = vand.u32 %v366, 4294901760
    %4721 = vmatpush.msra.mxu0 %v4720
    %v4722 = vand.u32 %v364, 4294901760
    %4723 = vmatpush.msra.mxu0 %v4722
    %v4724 = vand.u32 %v362, 4294901760
    %4725 = vmatpush.msra.mxu0 %v4724
    %v4726 = vand.u32 %v360, 4294901760
    %4727 = vmatpush.msra.mxu0 %v4726
    %v4728 = vand.u32 %v358, 4294901760
    %4729 = vmatpush.msra.mxu0 %v4728
    %v4730 = vand.u32 %v356, 4294901760
    %4731 = vmatpush.msra.mxu0 %v4730
    %v4732 = vand.u32 %v354, 4294901760
    %4733 = vmatpush.msra.mxu0 %v4732
    %v4734 = vand.u32 %v352, 4294901760
    %4735 = vmatpush.msra.mxu0 %v4734
    %v4736 = vand.u32 %v350, 4294901760
    %4737 = vmatpush.msra.mxu0 %v4736
    %v4738 = vand.u32 %v348, 4294901760
    %4739 = vmatpush.msra.mxu0 %v4738
    %v4740 = vand.u32 %v346, 4294901760
    %4741 = vmatpush.msra.mxu0 %v4740
    %v4742 = vand.u32 %v344, 4294901760
    %4743 = vmatpush.msra.mxu0 %v4742
    %v4744 = vand.u32 %v342, 4294901760
    %4745 = vmatpush.msra.mxu0 %v4744
    %v4746 = vand.u32 %v340, 4294901760
    %4747 = vmatpush.msra.mxu0 %v4746
    %v4748 = vand.u32 %v338, 4294901760
    %4749 = vmatpush.msra.mxu0 %v4748
    %v4750 = vand.u32 %v2713, 4294901760
    %v4751 = vsub.f32 %v2713, %v4750
    %v4752 = vand.u32 %v4751, 4294901760
    %4753 = vmatmul.f32.gmra.mxu0 %v4752
    %v4754 = vpop.f32.mrf.mxu0
    %v4755 = vadd.f32 %v4681, %v4754
    %v4756 = vand.u32 %v2714, 4294901760
    %v4757 = vsub.f32 %v2714, %v4756
    %v4758 = vand.u32 %v4757, 4294901760
    %4759 = vmatmul.f32.gmra.mxu0 %v4758
    %v4760 = vpop.f32.mrf.mxu0
    %v4761 = vadd.f32 %v4686, %v4760
    %v4762 = vand.u32 %v2715, 4294901760
    %v4763 = vsub.f32 %v2715, %v4762
    %v4764 = vand.u32 %v4763, 4294901760
    %4765 = vmatmul.f32.gmra.mxu0 %v4764
    %v4766 = vpop.f32.mrf.mxu0
    %v4767 = vadd.f32 %v4691, %v4766
    %v4768 = vand.u32 %v2716, 4294901760
    %v4769 = vsub.f32 %v2716, %v4768
    %v4770 = vand.u32 %v4769, 4294901760
    %4771 = vmatmul.f32.gmra.mxu0 %v4770
    %v4772 = vpop.f32.mrf.mxu0
    %v4773 = vadd.f32 %v4696, %v4772
    %v4774 = vand.u32 %v2717, 4294901760
    %v4775 = vsub.f32 %v2717, %v4774
    %v4776 = vand.u32 %v4775, 4294901760
    %4777 = vmatmul.f32.gmra.mxu0 %v4776
    %v4778 = vpop.f32.mrf.mxu0
    %v4779 = vadd.f32 %v4701, %v4778
    %v4780 = vand.u32 %v2718, 4294901760
    %v4781 = vsub.f32 %v2718, %v4780
    %v4782 = vand.u32 %v4781, 4294901760
    %4783 = vmatmul.f32.gmra.mxu0 %v4782
    %v4784 = vpop.f32.mrf.mxu0
    %v4785 = vadd.f32 %v4706, %v4784
    %v4786 = vand.u32 %v2719, 4294901760
    %v4787 = vsub.f32 %v2719, %v4786
    %v4788 = vand.u32 %v4787, 4294901760
    %4789 = vmatmul.f32.gmra.mxu0 %v4788
    %v4790 = vpop.f32.mrf.mxu0
    %v4791 = vadd.f32 %v4711, %v4790
    %v4792 = vand.u32 %v2720, 4294901760
    %v4793 = vsub.f32 %v2720, %v4792
    %v4794 = vand.u32 %v4793, 4294901760
    %4795 = vmatmul.f32.gmra.mxu0 %v4794
    %v4796 = vpop.f32.mrf.mxu0
    %v4797 = vadd.f32 %v4716, %v4796
    %4798 = vdwg.mxu0
    %v4799 = vand.u32 %v368, 4294901760
    %v4800 = vsub.f32 %v368, %v4799
    %v4801 = vand.u32 %v4800, 4294901760
    %4802 = vmatpush.msra.mxu0 %v4801
    %v4803 = vand.u32 %v366, 4294901760
    %v4804 = vsub.f32 %v366, %v4803
    %v4805 = vand.u32 %v4804, 4294901760
    %4806 = vmatpush.msra.mxu0 %v4805
    %v4807 = vand.u32 %v364, 4294901760
    %v4808 = vsub.f32 %v364, %v4807
    %v4809 = vand.u32 %v4808, 4294901760
    %4810 = vmatpush.msra.mxu0 %v4809
    %v4811 = vand.u32 %v362, 4294901760
    %v4812 = vsub.f32 %v362, %v4811
    %v4813 = vand.u32 %v4812, 4294901760
    %4814 = vmatpush.msra.mxu0 %v4813
    %v4815 = vand.u32 %v360, 4294901760
    %v4816 = vsub.f32 %v360, %v4815
    %v4817 = vand.u32 %v4816, 4294901760
    %4818 = vmatpush.msra.mxu0 %v4817
    %v4819 = vand.u32 %v358, 4294901760
    %v4820 = vsub.f32 %v358, %v4819
    %v4821 = vand.u32 %v4820, 4294901760
    %4822 = vmatpush.msra.mxu0 %v4821
    %v4823 = vand.u32 %v356, 4294901760
    %v4824 = vsub.f32 %v356, %v4823
    %v4825 = vand.u32 %v4824, 4294901760
    %4826 = vmatpush.msra.mxu0 %v4825
    %v4827 = vand.u32 %v354, 4294901760
    %v4828 = vsub.f32 %v354, %v4827
    %v4829 = vand.u32 %v4828, 4294901760
    %4830 = vmatpush.msra.mxu0 %v4829
    %v4831 = vand.u32 %v352, 4294901760
    %v4832 = vsub.f32 %v352, %v4831
    %v4833 = vand.u32 %v4832, 4294901760
    %4834 = vmatpush.msra.mxu0 %v4833
    %v4835 = vand.u32 %v350, 4294901760
    %v4836 = vsub.f32 %v350, %v4835
    %v4837 = vand.u32 %v4836, 4294901760
    %4838 = vmatpush.msra.mxu0 %v4837
    %v4839 = vand.u32 %v348, 4294901760
    %v4840 = vsub.f32 %v348, %v4839
    %v4841 = vand.u32 %v4840, 4294901760
    %4842 = vmatpush.msra.mxu0 %v4841
    %v4843 = vand.u32 %v346, 4294901760
    %v4844 = vsub.f32 %v346, %v4843
    %v4845 = vand.u32 %v4844, 4294901760
    %4846 = vmatpush.msra.mxu0 %v4845
    %v4847 = vand.u32 %v344, 4294901760
    %v4848 = vsub.f32 %v344, %v4847
    %v4849 = vand.u32 %v4848, 4294901760
    %4850 = vmatpush.msra.mxu0 %v4849
    %v4851 = vand.u32 %v342, 4294901760
    %v4852 = vsub.f32 %v342, %v4851
    %v4853 = vand.u32 %v4852, 4294901760
    %4854 = vmatpush.msra.mxu0 %v4853
    %v4855 = vand.u32 %v340, 4294901760
    %v4856 = vsub.f32 %v340, %v4855
    %v4857 = vand.u32 %v4856, 4294901760
    %4858 = vmatpush.msra.mxu0 %v4857
    %v4859 = vand.u32 %v338, 4294901760
    %v4860 = vsub.f32 %v338, %v4859
    %v4861 = vand.u32 %v4860, 4294901760
    %4862 = vmatpush.msra.mxu0 %v4861
    %v4863 = vand.u32 %v2713, 4294901760
    %4864 = vmatmul.f32.gmra.mxu0 %v4863
    %v4865 = vpop.f32.mrf.mxu0
    %v4866 = vadd.f32 %v4755, %v4865
    %v4867 = vand.u32 %v2714, 4294901760
    %4868 = vmatmul.f32.gmra.mxu0 %v4867
    %v4869 = vpop.f32.mrf.mxu0
    %v4870 = vadd.f32 %v4761, %v4869
    %v4871 = vand.u32 %v2715, 4294901760
    %4872 = vmatmul.f32.gmra.mxu0 %v4871
    %v4873 = vpop.f32.mrf.mxu0
    %v4874 = vadd.f32 %v4767, %v4873
    %v4875 = vand.u32 %v2716, 4294901760
    %4876 = vmatmul.f32.gmra.mxu0 %v4875
    %v4877 = vpop.f32.mrf.mxu0
    %v4878 = vadd.f32 %v4773, %v4877
    %v4879 = vand.u32 %v2717, 4294901760
    %4880 = vmatmul.f32.gmra.mxu0 %v4879
    %v4881 = vpop.f32.mrf.mxu0
    %v4882 = vadd.f32 %v4779, %v4881
    %v4883 = vand.u32 %v2718, 4294901760
    %4884 = vmatmul.f32.gmra.mxu0 %v4883
    %v4885 = vpop.f32.mrf.mxu0
    %v4886 = vadd.f32 %v4785, %v4885
    %v4887 = vand.u32 %v2719, 4294901760
    %4888 = vmatmul.f32.gmra.mxu0 %v4887
    %v4889 = vpop.f32.mrf.mxu0
    %v4890 = vadd.f32 %v4791, %v4889
    %v4891 = vand.u32 %v2720, 4294901760
    %4892 = vmatmul.f32.gmra.mxu0 %v4891
    %v4893 = vpop.f32.mrf.mxu0
    %v4894 = vadd.f32 %v4797, %v4893
    %4895 = vdwg.mxu0
    %v4896 = vand.u32 %v368, 4294901760
    %4897 = vmatpush.msra.mxu0 %v4896
    %v4898 = vand.u32 %v366, 4294901760
    %4899 = vmatpush.msra.mxu0 %v4898
    %v4900 = vand.u32 %v364, 4294901760
    %4901 = vmatpush.msra.mxu0 %v4900
    %v4902 = vand.u32 %v362, 4294901760
    %4903 = vmatpush.msra.mxu0 %v4902
    %v4904 = vand.u32 %v360, 4294901760
    %4905 = vmatpush.msra.mxu0 %v4904
    %v4906 = vand.u32 %v358, 4294901760
    %4907 = vmatpush.msra.mxu0 %v4906
    %v4908 = vand.u32 %v356, 4294901760
    %4909 = vmatpush.msra.mxu0 %v4908
    %v4910 = vand.u32 %v354, 4294901760
    %4911 = vmatpush.msra.mxu0 %v4910
    %v4912 = vand.u32 %v352, 4294901760
    %4913 = vmatpush.msra.mxu0 %v4912
    %v4914 = vand.u32 %v350, 4294901760
    %4915 = vmatpush.msra.mxu0 %v4914
    %v4916 = vand.u32 %v348, 4294901760
    %4917 = vmatpush.msra.mxu0 %v4916
    %v4918 = vand.u32 %v346, 4294901760
    %4919 = vmatpush.msra.mxu0 %v4918
    %v4920 = vand.u32 %v344, 4294901760
    %4921 = vmatpush.msra.mxu0 %v4920
    %v4922 = vand.u32 %v342, 4294901760
    %4923 = vmatpush.msra.mxu0 %v4922
    %v4924 = vand.u32 %v340, 4294901760
    %4925 = vmatpush.msra.mxu0 %v4924
    %v4926 = vand.u32 %v338, 4294901760
    %4927 = vmatpush.msra.mxu0 %v4926
    %v4928 = vand.u32 %v2713, 4294901760
    %4929 = vmatmul.f32.gmra.mxu0 %v4928
    %v4930 = vpop.f32.mrf.mxu0
    %v4931 = vadd.f32 %v4866, %v4930
    %v4932 = vand.u32 %v2714, 4294901760
    %4933 = vmatmul.f32.gmra.mxu0 %v4932
    %v4934 = vpop.f32.mrf.mxu0
    %v4935 = vadd.f32 %v4870, %v4934
    %v4936 = vand.u32 %v2715, 4294901760
    %4937 = vmatmul.f32.gmra.mxu0 %v4936
    %v4938 = vpop.f32.mrf.mxu0
    %v4939 = vadd.f32 %v4874, %v4938
    %v4940 = vand.u32 %v2716, 4294901760
    %4941 = vmatmul.f32.gmra.mxu0 %v4940
    %v4942 = vpop.f32.mrf.mxu0
    %v4943 = vadd.f32 %v4878, %v4942
    %v4944 = vand.u32 %v2717, 4294901760
    %4945 = vmatmul.f32.gmra.mxu0 %v4944
    %v4946 = vpop.f32.mrf.mxu0
    %v4947 = vadd.f32 %v4882, %v4946
    %v4948 = vand.u32 %v2718, 4294901760
    %4949 = vmatmul.f32.gmra.mxu0 %v4948
    %v4950 = vpop.f32.mrf.mxu0
    %v4951 = vadd.f32 %v4886, %v4950
    %v4952 = vand.u32 %v2719, 4294901760
    %4953 = vmatmul.f32.gmra.mxu0 %v4952
    %v4954 = vpop.f32.mrf.mxu0
    %v4955 = vadd.f32 %v4890, %v4954
    %v4956 = vand.u32 %v2720, 4294901760
    %4957 = vmatmul.f32.gmra.mxu0 %v4956
    %v4958 = vpop.f32.mrf.mxu0
    %v4959 = vadd.f32 %v4894, %v4958
    %4960 = vdwg.mxu0
    %4961 = vst [vmem:[#allocation2] sm:$0xff] %v1519
    %vm4962 = vcmask 523264
    %4963 = vst.msk [vmem:[#allocation2 + $0x8] sm:$0xff] %vm4962, %v2635
    %4964 = vst [vmem:[#allocation2 + $0x10] sm:$0xff] %v1523
    %4965 = vst.msk [vmem:[#allocation2 + $0x18] sm:$0xff] %vm4962, %v2639
    %4966 = vst [vmem:[#allocation2 + $0x20] sm:$0xff] %v1527
    %4967 = vst.msk [vmem:[#allocation2 + $0x28] sm:$0xff] %vm4962, %v2643
    %4968 = vst [vmem:[#allocation2 + $0x30] sm:$0xff] %v1531
    %4969 = vst.msk [vmem:[#allocation2 + $0x38] sm:$0xff] %vm4962, %v2647
    %4970 = vst [vmem:[#allocation2 + $0x40] sm:$0xff] %v1535
    %4971 = vst.msk [vmem:[#allocation2 + $0x48] sm:$0xff] %vm4962, %v2651
    %4972 = vst [vmem:[#allocation2 + $0x50] sm:$0xff] %v1539
    %4973 = vst.msk [vmem:[#allocation2 + $0x58] sm:$0xff] %vm4962, %v2655
    %4974 = vst [vmem:[#allocation2 + $0x60] sm:$0xff] %v1543
    %4975 = vst.msk [vmem:[#allocation2 + $0x68] sm:$0xff] %vm4962, %v2659
    %4976 = vst [vmem:[#allocation2 + $0x70] sm:$0xff] %v1547
    %4977 = vst.msk [vmem:[#allocation2 + $0x78] sm:$0xff] %vm4962, %v2663
    %4978 = vst [vmem:[#allocation2 + $0x80] sm:$0xff] %v3815
    %4979 = vst.msk [vmem:[#allocation2 + $0x88] sm:$0xff] %vm4962, %v4931
    %4980 = vst [vmem:[#allocation2 + $0x90] sm:$0xff] %v3819
    %4981 = vst.msk [vmem:[#allocation2 + $0x98] sm:$0xff] %vm4962, %v4935
    %4982 = vst [vmem:[#allocation2 + $0xa0] sm:$0xff] %v3823
    %4983 = vst.msk [vmem:[#allocation2 + $0xa8] sm:$0xff] %vm4962, %v4939
    %4984 = vst [vmem:[#allocation2 + $0xb0] sm:$0xff] %v3827
    %4985 = vst.msk [vmem:[#allocation2 + $0xb8] sm:$0xff] %vm4962, %v4943
    %4986 = vst [vmem:[#allocation2 + $0xc0] sm:$0xff] %v3831
    %4987 = vst.msk [vmem:[#allocation2 + $0xc8] sm:$0xff] %vm4962, %v4947
    %4988 = vst [vmem:[#allocation2 + $0xd0] sm:$0xff] %v3835
    %4989 = vst.msk [vmem:[#allocation2 + $0xd8] sm:$0xff] %vm4962, %v4951
    %4990 = vst [vmem:[#allocation2 + $0xe0] sm:$0xff] %v3839
    %4991 = vst.msk [vmem:[#allocation2 + $0xe8] sm:$0xff] %vm4962, %v4955
    %4992 = vst [vmem:[#allocation2 + $0xf0] sm:$0xff] %v3843
    %4993 = vst.msk [vmem:[#allocation2 + $0xf8] sm:$0xff] %vm4962, %v4959
    // Predicated region
    $region10: #{tpu_custom_call.1} parent=1 // pred_check
      _
    $region11: #{tpu_custom_call.1} parent=1 // pred_check_branch
      %4995 = sbr.rel (0) target = $region13
    $region12: #{tpu_custom_call.1} parent=1 // pred_region
      %4997 = vsyncadd [#allocation3], 0
      %s4998 = sshll.u32 [#allocation2], 4
      %s4999 = int_to_ptr.vmem [resolvable:$true] %s4998
      %s5000 = sshll.u32 %s2, 4
      %s5001 = int_to_ptr.hbm [resolvable:$true] %s5000
      %5006 = dma.vmem_to_hbm [thread:$0]  %s4999, 4096, %s5001, [#allocation3], 256, 256, 16
    $region13: #{tpu_custom_call.1} parent=1 // pred_fallthru
      _
    // Predicated region
    $region14: #{tpu_custom_call.1} parent=1 // pred_check
      _
    $region15: #{tpu_custom_call.1} parent=1 // pred_check_branch
      %5008 = sbr.rel (0) target = $region17
    $region16: #{tpu_custom_call.1} parent=1 // pred_region
      %5010 = dma.done [#allocation3], 4096
    $region17: #{tpu_custom_call.1} parent=1 // pred_fallthru
      _
    %5011 = vsyncpa [#allocation3], 1

</llo_original>
